<compile_context>
chip_gen: v5e
topology: v5e:2x2
jax: 0.10.0
libtpu: 0.0.40
codegen_flags: <defaults>
</compile_context>

<pallas_src>
import functools

import jax
import jax.numpy as jnp
from jax.experimental import pallas as pl
from jax.experimental.pallas import tpu as pltpu


def _round_up(n, m):
    return ((n + m - 1) // m) * m


def _cdiv(a, b):
    return -(-a // b)


def actor_kernel(x_ref,            # (Bt, F)   flattened state tile, f32
                 we_ref, be_ref,   # encoder linear: (F, Lp) bf16, (1, Lp) f32
                 w1_ref, b1_ref,   # (Lp, H1) bf16, (1, H1) f32
                 w2_ref, b2_ref,   # (H1, H2) bf16, (1, H2) f32
                 w3_ref, b3_ref,   # (H2, Ap) bf16, (1, Ap) f32
                 out_ref):         # (Bt, Ap) f32   (lane-dense: Ap % 128 == 0)
    # bf16 x bf16 -> f32 accumulation on the MXU; biases / activations in f32.
    x = x_ref[...].astype(jnp.bfloat16)

    # Synthetic encoder: flatten + linear projection to the (padded) latent.
    z = jnp.dot(x, we_ref[...], preferred_element_type=jnp.float32) + be_ref[...]

    # act_net: Linear -> ReLU -> Linear -> ReLU -> Linear -> Tanh.
    h1 = jnp.dot(z.astype(jnp.bfloat16), w1_ref[...],
                 preferred_element_type=jnp.float32) + b1_ref[...]
    h1 = jnp.maximum(h1, 0.0)

    h2 = jnp.dot(h1.astype(jnp.bfloat16), w2_ref[...],
                 preferred_element_type=jnp.float32) + b2_ref[...]
    h2 = jnp.maximum(h2, 0.0)

    o = jnp.dot(h2.astype(jnp.bfloat16), w3_ref[...],
                preferred_element_type=jnp.float32) + b3_ref[...]
    out_ref[...] = jnp.tanh(o).astype(out_ref.dtype)


def _target_rows(batch_rows):
    """Per-generation target batch tile (trace-time query, pure Python)."""
    try:
        kind = jax.devices()[0].device_kind.lower()
    except Exception:  # pragma: no cover - defensive; never expected on TPU
        kind = ""
    if "v5" in kind:
        return 128                       # 128x128 MXU, 1 vst slot, lower BW
    if "v6" in kind and batch_rows >= 1024:
        return 512                       # fewer grid steps, more MXU/step
    return 256


def _choose_bt(B, F):
    """Batch tile rows: VMEM-aware, megacore-aware, no activation padding."""
    if B <= 8:
        return B                         # block dim == full array dim (legal)
    Bp = _round_up(B, 8)
    target = _target_rows(Bp)
    # Keep the double-buffered x tile (2 * Bt * F * 4 bytes) under ~8 MiB.
    cap = max(8, ((8 << 20) // (2 * F * 4)) // 8 * 8)
    bt = min(target, cap, Bp)
    # Guarantee >= 2 grid steps once there is enough work so the "parallel"
    # axis can actually split across the two v7x TensorCores.
    if Bp >= 256 and _cdiv(Bp, bt) < 2:
        bt = _round_up(_cdiv(Bp, 2), 8)
    # Balance the last (ragged) tile.
    steps = _cdiv(Bp, bt)
    return _round_up(_cdiv(Bp, steps), 8)


@functools.partial(jax.jit, static_argnums=(2,))
def actor_forward(state_nchw, params, num_actions):
    """state_nchw: (B, C, H, W) float32.  Returns (B, num_actions) in [-1, 1]."""
    B = state_nchw.shape[0]
    x = state_nchw.reshape(B, -1).astype(jnp.float32)   # flatten NCHW -> (B, F)
    F = x.shape[1]

    we, be, w1, b1, w2, b2, w3, b3 = params
    Lp, H1 = w1.shape
    H2, Ap = w3.shape

    Bt = _choose_bt(B, F)
    grid = (_cdiv(B, Bt),)               # ragged tail handled by Pallas masking

    # Activations tiled over the batch; weights/biases are whole-array blocks
    # with a constant index map, single-buffered (resident across batch tiles).
    x_spec = pl.BlockSpec((Bt, F), lambda i: (i, 0))
    out_spec = pl.BlockSpec((Bt, Ap), lambda i: (i, 0))

    def const(arr):
        return pl.BlockSpec(arr.shape, lambda i: (0, 0),
                            pipeline_mode=pl.Buffered(1))

    # --- VMEM budget (bytes), derived from the actual shapes ----------------
    weight_bytes = 2 * (F * Lp + Lp * H1 + H1 * H2 + H2 * Ap) \
        + 4 * (Lp + H1 + H2 + Ap)                       # bf16 W (x1) + f32 b
    act_bytes = 2 * Bt * F * 4 + 2 * Bt * Ap * 4        # in/out double buffers
    scratch_bytes = Bt * (Lp + H1 + H2 + Ap) * 8        # f32 + bf16 intermediates
    vmem_limit = weight_bytes + act_bytes + scratch_bytes + (6 << 20)
    vmem_limit = int(min(48 << 20, max(24 << 20, vmem_limit)))

    # --- Advisory cost estimate for the XLA scheduler ------------------------
    flops = 2 * B * (F * Lp + Lp * H1 + H1 * H2 + H2 * Ap)
    bytes_accessed = weight_bytes + B * F * 4 + B * Ap * 4
    cost = pl.CostEstimate(flops=int(flops),
                           transcendentals=int(B * Ap),
                           bytes_accessed=int(bytes_accessed))

    out = pl.pallas_call(
        actor_kernel,
        out_shape=jax.ShapeDtypeStruct((B, Ap), jnp.float32),
        grid=grid,
        in_specs=[
            x_spec,
            const(we), const(be),
            const(w1), const(b1),
            const(w2), const(b2),
            const(w3), const(b3),
        ],
        out_specs=out_spec,
        compiler_params=pltpu.CompilerParams(
            dimension_semantics=("parallel",),
            vmem_limit_bytes=vmem_limit,
        ),
        cost_estimate=cost,
    )(x, we, be, w1, b1, w2, b2, w3, b3)
    return out[:, :num_actions]


def init_params(key, in_features, latent_size, num_actions,
                hidden=(1024, 1024)):
    """Deterministic synthetic init (stand-in for weight_init).

    Weights are stored bf16 (kernel is HBM weight-read bound); biases f32.
    Latent and action dims are zero-padded to multiples of 128 for lane-dense
    MXU feeds and unmasked stores (padding is mathematically inert).
    """
    Lp = _round_up(max(latent_size, 1), 128)
    Ap = _round_up(max(num_actions, 1), 128)
    ks = jax.random.split(key, 4)

    def linear(k, fan_in, fan_out, pad_in=0, pad_out=0):
        scale = 1.0 / jnp.sqrt(jnp.float32(fan_in))
        w = jax.random.uniform(k, (fan_in, fan_out), jnp.float32, -scale, scale)
        b = jnp.zeros((1, fan_out), jnp.float32)
        if pad_in or pad_out:
            w = jnp.pad(w, ((0, pad_in), (0, pad_out)))
            b = jnp.pad(b, ((0, 0), (0, pad_out)))
        return w.astype(jnp.bfloat16), b

    we, be = linear(ks[0], in_features, latent_size,
                    pad_out=Lp - latent_size)
    w1, b1 = linear(ks[1], latent_size, hidden[0],
                    pad_in=Lp - latent_size)
    w2, b2 = linear(ks[2], hidden[0], hidden[1])
    w3, b3 = linear(ks[3], hidden[1], num_actions,
                    pad_out=Ap - num_actions)
    return (we, be, w1, b1, w2, b2, w3, b3)


def reference_forward(state_nchw, params, num_actions):
    """Pure-JAX reference with the same bf16-weight / f32-accumulate scheme."""
    we, be, w1, b1, w2, b2, w3, b3 = params
    x = state_nchw.reshape(state_nchw.shape[0], -1)

    def mm(a, w):
        return jnp.dot(a.astype(jnp.bfloat16), w,
                       preferred_element_type=jnp.float32)

    z = mm(x, we) + be
    h1 = jnp.maximum(mm(z, w1) + b1, 0.0)
    h2 = jnp.maximum(mm(h1, w2) + b2, 0.0)
    return jnp.tanh(mm(h2, w3) + b3)[:, :num_actions]


if __name__ == "__main__":
    # Small shapes consistent with the module: image state, latent=32, 8 actions.
    B, C, H, W = 2, 4, 16, 16
    latent_size = 32
    num_actions = 8

    key = jax.random.PRNGKey(0)
    k_state, k_params = jax.random.split(key)

    state = jax.random.normal(k_state, (B, C, H, W), jnp.float32)
    params = init_params(k_params, C * H * W, latent_size, num_actions)

    out = actor_forward(state, params, num_actions)
    out = jax.block_until_ready(out)

    ref = reference_forward(state, params, num_actions)
    assert out.shape == (B, num_actions)
    assert bool(jnp.all(jnp.abs(out) <= 1.0 + 1e-6))
    assert jnp.allclose(out, ref, atol=1e-2, rtol=1e-2)

    print("KERNEL_OK")
</pallas_src>

<mosaic_0001>
module attributes {stable_mosaic.version = 11 : i64} {
  func.func @actor_kernel(%arg0: i32, %arg1: memref<2x1024xf32, #tpu.memory_space<vmem>>, %arg2: memref<1024x128xbf16, #tpu.memory_space<vmem>>, %arg3: memref<1x128xf32, #tpu.memory_space<vmem>>, %arg4: memref<128x1024xbf16, #tpu.memory_space<vmem>>, %arg5: memref<1x1024xf32, #tpu.memory_space<vmem>>, %arg6: memref<1024x1024xbf16, #tpu.memory_space<vmem>>, %arg7: memref<1x1024xf32, #tpu.memory_space<vmem>>, %arg8: memref<1024x128xbf16, #tpu.memory_space<vmem>>, %arg9: memref<1x128xf32, #tpu.memory_space<vmem>>, %arg10: memref<2x128xf32, #tpu.memory_space<vmem>>) attributes {dimension_semantics = [#tpu.dimension_semantics<parallel>], iteration_bounds = array<i64: 1>, scalar_prefetch = 0 : i64, scratch_operands = 0 : i64, tpu.core_type = #tpu.core_type<tc>, window_params = [{transform_indices = @transform_0, window_bounds = array<i64: 2, 1024>}, {pipeline_mode = #tpu.pipeline_mode<synchronous>, transform_indices = @transform_1, window_bounds = array<i64: 1024, 128>}, {pipeline_mode = #tpu.pipeline_mode<synchronous>, transform_indices = @transform_2, window_bounds = array<i64: 1, 128>}, {pipeline_mode = #tpu.pipeline_mode<synchronous>, transform_indices = @transform_3, window_bounds = array<i64: 128, 1024>}, {pipeline_mode = #tpu.pipeline_mode<synchronous>, transform_indices = @transform_4, window_bounds = array<i64: 1, 1024>}, {pipeline_mode = #tpu.pipeline_mode<synchronous>, transform_indices = @transform_5, window_bounds = array<i64: 1024, 1024>}, {pipeline_mode = #tpu.pipeline_mode<synchronous>, transform_indices = @transform_6, window_bounds = array<i64: 1, 1024>}, {pipeline_mode = #tpu.pipeline_mode<synchronous>, transform_indices = @transform_7, window_bounds = array<i64: 1024, 128>}, {pipeline_mode = #tpu.pipeline_mode<synchronous>, transform_indices = @transform_8, window_bounds = array<i64: 1, 128>}, {transform_indices = @transform_9, window_bounds = array<i64: 2, 128>}]} {
    %c0 = arith.constant 0 : index
    %c0_0 = arith.constant 0 : index
    %0 = vector.load %arg1[%c0, %c0_0] : memref<2x1024xf32, #tpu.memory_space<vmem>>, vector<2x1024xf32>
    %1 = arith.truncf %0 : vector<2x1024xf32> to vector<2x1024xbf16>
    %c0_1 = arith.constant 0 : index
    %c0_2 = arith.constant 0 : index
    %2 = vector.load %arg2[%c0_1, %c0_2] : memref<1024x128xbf16, #tpu.memory_space<vmem>>, vector<1024x128xbf16>
    %cst = arith.constant dense<0.000000e+00> : vector<2x128xf32>
    %3 = tpu.matmul %1, %2, %cst {dimension_numbers = #tpu.dot_dimension_numbers<[1], [0], [0], [1], [0, 0, 1, 1], [], []>} : vector<2x1024xbf16>, vector<1024x128xbf16>, vector<2x128xf32> -> vector<2x128xf32>
    %c0_3 = arith.constant 0 : index
    %c0_4 = arith.constant 0 : index
    %4 = vector.load %arg3[%c0_3, %c0_4] : memref<1x128xf32, #tpu.memory_space<vmem>>, vector<1x128xf32>
    %5 = vector.broadcast %4 : vector<1x128xf32> to vector<2x128xf32>
    %6 = arith.addf %3, %5 : vector<2x128xf32>
    %7 = arith.truncf %6 : vector<2x128xf32> to vector<2x128xbf16>
    %c0_5 = arith.constant 0 : index
    %c0_6 = arith.constant 0 : index
    %8 = vector.load %arg4[%c0_5, %c0_6] : memref<128x1024xbf16, #tpu.memory_space<vmem>>, vector<128x1024xbf16>
    %cst_7 = arith.constant dense<0.000000e+00> : vector<2x1024xf32>
    %9 = tpu.matmul %7, %8, %cst_7 {dimension_numbers = #tpu.dot_dimension_numbers<[1], [0], [0], [1], [0, 0, 1, 1], [], []>} : vector<2x128xbf16>, vector<128x1024xbf16>, vector<2x1024xf32> -> vector<2x1024xf32>
    %c0_8 = arith.constant 0 : index
    %c0_9 = arith.constant 0 : index
    %10 = vector.load %arg5[%c0_8, %c0_9] : memref<1x1024xf32, #tpu.memory_space<vmem>>, vector<1x1024xf32>
    %11 = vector.broadcast %10 : vector<1x1024xf32> to vector<2x1024xf32>
    %12 = arith.addf %9, %11 : vector<2x1024xf32>
    %cst_10 = arith.constant 0.000000e+00 : f32
    %13 = vector.broadcast %cst_10 : f32 to vector<2x1024xf32>
    %14 = arith.maximumf %12, %13 : vector<2x1024xf32>
    %15 = arith.truncf %14 : vector<2x1024xf32> to vector<2x1024xbf16>
    %c0_11 = arith.constant 0 : index
    %c0_12 = arith.constant 0 : index
    %16 = vector.load %arg6[%c0_11, %c0_12] : memref<1024x1024xbf16, #tpu.memory_space<vmem>>, vector<1024x1024xbf16>
    %cst_13 = arith.constant dense<0.000000e+00> : vector<2x1024xf32>
    %17 = tpu.matmul %15, %16, %cst_13 {dimension_numbers = #tpu.dot_dimension_numbers<[1], [0], [0], [1], [0, 0, 1, 1], [], []>} : vector<2x1024xbf16>, vector<1024x1024xbf16>, vector<2x1024xf32> -> vector<2x1024xf32>
    %c0_14 = arith.constant 0 : index
    %c0_15 = arith.constant 0 : index
    %18 = vector.load %arg7[%c0_14, %c0_15] : memref<1x1024xf32, #tpu.memory_space<vmem>>, vector<1x1024xf32>
    %19 = vector.broadcast %18 : vector<1x1024xf32> to vector<2x1024xf32>
    %20 = arith.addf %17, %19 : vector<2x1024xf32>
    %cst_16 = arith.constant 0.000000e+00 : f32
    %21 = vector.broadcast %cst_16 : f32 to vector<2x1024xf32>
    %22 = arith.maximumf %20, %21 : vector<2x1024xf32>
    %23 = arith.truncf %22 : vector<2x1024xf32> to vector<2x1024xbf16>
    %c0_17 = arith.constant 0 : index
    %c0_18 = arith.constant 0 : index
    %24 = vector.load %arg8[%c0_17, %c0_18] : memref<1024x128xbf16, #tpu.memory_space<vmem>>, vector<1024x128xbf16>
    %cst_19 = arith.constant dense<0.000000e+00> : vector<2x128xf32>
    %25 = tpu.matmul %23, %24, %cst_19 {dimension_numbers = #tpu.dot_dimension_numbers<[1], [0], [0], [1], [0, 0, 1, 1], [], []>} : vector<2x1024xbf16>, vector<1024x128xbf16>, vector<2x128xf32> -> vector<2x128xf32>
    %c0_20 = arith.constant 0 : index
    %c0_21 = arith.constant 0 : index
    %26 = vector.load %arg9[%c0_20, %c0_21] : memref<1x128xf32, #tpu.memory_space<vmem>>, vector<1x128xf32>
    %27 = vector.broadcast %26 : vector<1x128xf32> to vector<2x128xf32>
    %28 = arith.addf %25, %27 : vector<2x128xf32>
    %29 = math.tanh %28 : vector<2x128xf32>
    %c0_22 = arith.constant 0 : index
    %c0_23 = arith.constant 0 : index
    %30 = vector.load %arg10[%c0_22, %c0_23] : memref<2x128xf32, #tpu.memory_space<vmem>>, vector<2x128xf32>
    tpu.vector_store %arg10[%c0_22, %c0_23], %29 {strides = array<i32>} : memref<2x128xf32, #tpu.memory_space<vmem>>, vector<2x128xf32>,
    return
  }
  func.func @transform_0(%arg0: i32) -> (i32, i32) {
    %c0_i32 = arith.constant 0 : i32
    %c0_i32_0 = arith.constant 0 : i32
    return %arg0, %c0_i32 : i32, i32
  }
  func.func @transform_1(%arg0: i32) -> (i32, i32) {
    %c0_i32 = arith.constant 0 : i32
    %c0_i32_0 = arith.constant 0 : i32
    %c0_i32_1 = arith.constant 0 : i32
    return %c0_i32, %c0_i32_0 : i32, i32
  }
  func.func @transform_2(%arg0: i32) -> (i32, i32) {
    %c0_i32 = arith.constant 0 : i32
    %c0_i32_0 = arith.constant 0 : i32
    %c0_i32_1 = arith.constant 0 : i32
    return %c0_i32, %c0_i32_0 : i32, i32
  }
  func.func @transform_3(%arg0: i32) -> (i32, i32) {
    %c0_i32 = arith.constant 0 : i32
    %c0_i32_0 = arith.constant 0 : i32
    %c0_i32_1 = arith.constant 0 : i32
    return %c0_i32, %c0_i32_0 : i32, i32
  }
  func.func @transform_4(%arg0: i32) -> (i32, i32) {
    %c0_i32 = arith.constant 0 : i32
    %c0_i32_0 = arith.constant 0 : i32
    %c0_i32_1 = arith.constant 0 : i32
    return %c0_i32, %c0_i32_0 : i32, i32
  }
  func.func @transform_5(%arg0: i32) -> (i32, i32) {
    %c0_i32 = arith.constant 0 : i32
    %c0_i32_0 = arith.constant 0 : i32
    %c0_i32_1 = arith.constant 0 : i32
    return %c0_i32, %c0_i32_0 : i32, i32
  }
  func.func @transform_6(%arg0: i32) -> (i32, i32) {
    %c0_i32 = arith.constant 0 : i32
    %c0_i32_0 = arith.constant 0 : i32
    %c0_i32_1 = arith.constant 0 : i32
    return %c0_i32, %c0_i32_0 : i32, i32
  }
  func.func @transform_7(%arg0: i32) -> (i32, i32) {
    %c0_i32 = arith.constant 0 : i32
    %c0_i32_0 = arith.constant 0 : i32
    %c0_i32_1 = arith.constant 0 : i32
    return %c0_i32, %c0_i32_0 : i32, i32
  }
  func.func @transform_8(%arg0: i32) -> (i32, i32) {
    %c0_i32 = arith.constant 0 : i32
    %c0_i32_0 = arith.constant 0 : i32
    %c0_i32_1 = arith.constant 0 : i32
    return %c0_i32, %c0_i32_0 : i32, i32
  }
  func.func @transform_9(%arg0: i32) -> (i32, i32) {
    %c0_i32 = arith.constant 0 : i32
    %c0_i32_0 = arith.constant 0 : i32
    return %arg0, %c0_i32 : i32, i32
  }
}

</mosaic_0001>

<llo_original>
// kernel: actor_forward.1
$region0: #{actor_forward.1}
  #allocation0 [shape = 'u32[]', space=smem, size = 0x4, offset = 0x4, fixed_abs, tag = 'smem constant byte address 0x4 - core index']
  #allocation1 [shape = 'u32[72,128]{1,0:T(1,128)}', space=vmem, size = 0x9000, scoped, tag = 'internal scratch']
  %s0 = inlined_call_operand.vmem [shape: f32[2,1024], index: 0, kind: input, shape index: {}]
  %s1 = inlined_call_operand.hbm [shape: bf16[1024,128], index: 1, kind: input, shape index: {}]
  %s2 = inlined_call_operand.hbm [shape: f32[1,128], index: 2, kind: input, shape index: {}]
  %s3 = inlined_call_operand.hbm [shape: bf16[128,1024], index: 3, kind: input, shape index: {}]
  %s4 = inlined_call_operand.hbm [shape: f32[1,1024], index: 4, kind: input, shape index: {}]
  %s5 = inlined_call_operand.hbm [shape: bf16[1024,1024], index: 5, kind: input, shape index: {}]
  %s6 = inlined_call_operand.hbm [shape: f32[1,1024], index: 6, kind: input, shape index: {}]
  %s7 = inlined_call_operand.hbm [shape: bf16[1024,128], index: 7, kind: input, shape index: {}]
  %s8 = inlined_call_operand.hbm [shape: f32[1,128], index: 8, kind: input, shape index: {}]
  %s9 = inlined_call_operand.hbm [shape: f32[2,128], index: 9, kind: output, shape index: {}]
  %s10 = sld [smem:[#allocation0]]
  $region78: #{actor_forward.1} parent=0
    _
  %s12 = ssub.s32 1, %s10
  %s13 = scalar_select 0, %s12, %s10
  $region1: #{actor_forward.1} parent=0
    #allocation2 [shape = 'u8[262144]{0}', space=vmem, size = 0x40000, scoped, tag = 'input window, operand 1, single buffered']
    #allocation3 [shape = 's32[1]{0}', space=sflag, size = 0x4, scoped, tag = 'scoped memory for actor_forward.1']
    #allocation4 [shape = 's32[1]{0}', space=sflag, size = 0x4, scoped, tag = 'scoped memory for actor_forward.1']
    #allocation5 [shape = 'u8[512]{0}', space=vmem, size = 0x400, scoped, tag = 'input window, operand 2, single buffered']
    #allocation6 [shape = 's32[1]{0}', space=sflag, size = 0x4, scoped, tag = 'scoped memory for actor_forward.1']
    #allocation7 [shape = 'u8[262144]{0}', space=vmem, size = 0x40000, scoped, tag = 'input window, operand 3, single buffered']
    #allocation8 [shape = 'u8[4096]{0}', space=vmem, size = 0x1000, scoped, tag = 'input window, operand 4, single buffered']
    #allocation9 [shape = 's32[1]{0}', space=sflag, size = 0x4, scoped, tag = 'scoped memory for actor_forward.1']
    #allocation10 [shape = 'u8[2097152]{0}', space=vmem, size = 0x200000, scoped, tag = 'input window, operand 5, single buffered']
    #allocation11 [shape = 'u8[4096]{0}', space=vmem, size = 0x1000, scoped, tag = 'input window, operand 6, single buffered']
    #allocation12 [shape = 's32[1]{0}', space=sflag, size = 0x4, scoped, tag = 'scoped memory for actor_forward.1']
    #allocation13 [shape = 'u8[262144]{0}', space=vmem, size = 0x40000, scoped, tag = 'input window, operand 7, single buffered']
    #allocation14 [shape = 'u8[512]{0}', space=vmem, size = 0x400, scoped, tag = 'input window, operand 8, single buffered']
    #allocation15 [shape = 's32[1]{0}', space=sflag, size = 0x4, scoped, tag = 'scoped memory for actor_forward.1']
    #allocation16 [shape = 'u8[1024]{0}', space=vmem, size = 0x400, scoped, tag = 'output window, operand 0, single buffered']
    %14 = vsyncpa [#allocation3], 0
    %15 = vsyncpa [#allocation6], 0
    %16 = vsyncpa [#allocation9], 0
    %17 = vsyncpa [#allocation12], 0
    %18 = vsyncpa [#allocation15], 0
    %19 = vsyncpa [#allocation4], 0
    // Predicated region
    $region2: #{actor_forward.1} parent=1 // pred_check
      _
    $region3: #{actor_forward.1} parent=1 // pred_check_branch
      %21 = sbr.rel (0) target = $region5
    $region4: #{actor_forward.1} parent=1 // pred_region
      _
    $region5: #{actor_forward.1} parent=1 // pred_fallthru
      _
    // Predicated region
    $region6: #{actor_forward.1} parent=1 // pred_check
      _
    $region7: #{actor_forward.1} parent=1 // pred_check_branch
      %23 = sbr.rel (0) target = $region9
    $region8: #{actor_forward.1} parent=1 // pred_region
      %25 = vsyncadd [#allocation3], 0
      %s26 = sshll.u32 %s1, 4
      %s27 = int_to_ptr.hbm [resolvable:$true] %s26
      %s28 = sshll.u32 [#allocation2], 4
      %s29 = int_to_ptr.vmem [resolvable:$true] %s28
      %34 = dma.hbm_to_vmem [thread:$0]  %s27, 8192, %s29, [#allocation3], 64, 64, 4
    $region9: #{actor_forward.1} parent=1 // pred_fallthru
      _
    // Predicated region
    $region10: #{actor_forward.1} parent=1 // pred_check
      _
    $region11: #{actor_forward.1} parent=1 // pred_check_branch
      %36 = sbr.rel (0) target = $region13
    $region12: #{actor_forward.1} parent=1 // pred_region
      %38 = vsyncadd [#allocation6], 0
      %s40 = sshll.u32 %s2, 4
      %s41 = int_to_ptr.hbm [resolvable:$true] %s40
      %s42 = sshll.u32 [#allocation5], 4
      %s43 = int_to_ptr.vmem [resolvable:$true] %s42
      %45 = dma.hbm_to_vmem [thread:$0]  %s41, 16, %s43, [#allocation6]
    $region13: #{actor_forward.1} parent=1 // pred_fallthru
      _
    // Predicated region
    $region14: #{actor_forward.1} parent=1 // pred_check
      _
    $region15: #{actor_forward.1} parent=1 // pred_check_branch
      %47 = sbr.rel (0) target = $region17
    $region16: #{actor_forward.1} parent=1 // pred_region
      %49 = vsyncadd [#allocation6], 0
      %s50 = sshll.u32 %s3, 4
      %s51 = int_to_ptr.hbm [resolvable:$true] %s50
      %s52 = sshll.u32 [#allocation7], 4
      %s53 = int_to_ptr.vmem [resolvable:$true] %s52
      %58 = dma.hbm_to_vmem [thread:$0]  %s51, 8192, %s53, [#allocation6], 512, 512, 32
    $region17: #{actor_forward.1} parent=1 // pred_fallthru
      _
    // Predicated region
    $region18: #{actor_forward.1} parent=1 // pred_check
      _
    $region19: #{actor_forward.1} parent=1 // pred_check_branch
      %60 = sbr.rel (0) target = $region21
    $region20: #{actor_forward.1} parent=1 // pred_region
      %62 = vsyncadd [#allocation9], 0
      %s64 = sshll.u32 %s4, 4
      %s65 = int_to_ptr.hbm [resolvable:$true] %s64
      %s66 = sshll.u32 [#allocation8], 4
      %s67 = int_to_ptr.vmem [resolvable:$true] %s66
      %69 = dma.hbm_to_vmem [thread:$0]  %s65, 128, %s67, [#allocation9]
    $region21: #{actor_forward.1} parent=1 // pred_fallthru
      _
    // Predicated region
    $region22: #{actor_forward.1} parent=1 // pred_check
      _
    $region23: #{actor_forward.1} parent=1 // pred_check_branch
      %71 = sbr.rel (0) target = $region25
    $region24: #{actor_forward.1} parent=1 // pred_region
      %73 = vsyncadd [#allocation9], 0
      %s74 = sshll.u32 %s5, 4
      %s75 = int_to_ptr.hbm [resolvable:$true] %s74
      %s76 = sshll.u32 [#allocation10], 4
      %s77 = int_to_ptr.vmem [resolvable:$true] %s76
      %82 = dma.hbm_to_vmem [thread:$0]  %s75, 65536, %s77, [#allocation9], 512, 512, 32
    $region25: #{actor_forward.1} parent=1 // pred_fallthru
      _
    // Predicated region
    $region26: #{actor_forward.1} parent=1 // pred_check
      _
    $region27: #{actor_forward.1} parent=1 // pred_check_branch
      %84 = sbr.rel (0) target = $region29
    $region28: #{actor_forward.1} parent=1 // pred_region
      %86 = vsyncadd [#allocation12], 0
      %s88 = sshll.u32 %s6, 4
      %s89 = int_to_ptr.hbm [resolvable:$true] %s88
      %s90 = sshll.u32 [#allocation11], 4
      %s91 = int_to_ptr.vmem [resolvable:$true] %s90
      %93 = dma.hbm_to_vmem [thread:$0]  %s89, 128, %s91, [#allocation12]
    $region29: #{actor_forward.1} parent=1 // pred_fallthru
      _
    // Predicated region
    $region30: #{actor_forward.1} parent=1 // pred_check
      _
    $region31: #{actor_forward.1} parent=1 // pred_check_branch
      %95 = sbr.rel (0) target = $region33
    $region32: #{actor_forward.1} parent=1 // pred_region
      %97 = vsyncadd [#allocation12], 0
      %s98 = sshll.u32 %s7, 4
      %s99 = int_to_ptr.hbm [resolvable:$true] %s98
      %s100 = sshll.u32 [#allocation13], 4
      %s101 = int_to_ptr.vmem [resolvable:$true] %s100
      %106 = dma.hbm_to_vmem [thread:$0]  %s99, 8192, %s101, [#allocation12], 64, 64, 4
    $region33: #{actor_forward.1} parent=1 // pred_fallthru
      _
    // Predicated region
    $region34: #{actor_forward.1} parent=1 // pred_check
      _
    $region35: #{actor_forward.1} parent=1 // pred_check_branch
      %108 = sbr.rel (0) target = $region37
    $region36: #{actor_forward.1} parent=1 // pred_region
      %110 = vsyncadd [#allocation15], 0
      %s112 = sshll.u32 %s8, 4
      %s113 = int_to_ptr.hbm [resolvable:$true] %s112
      %s114 = sshll.u32 [#allocation14], 4
      %s115 = int_to_ptr.vmem [resolvable:$true] %s114
      %117 = dma.hbm_to_vmem [thread:$0]  %s113, 16, %s115, [#allocation15]
    $region37: #{actor_forward.1} parent=1 // pred_fallthru
      _
    // Predicated region
    $region38: #{actor_forward.1} parent=1 // pred_check
      _
    $region39: #{actor_forward.1} parent=1 // pred_check_branch
      %119 = sbr.rel (0) target = $region41
    $region40: #{actor_forward.1} parent=1 // pred_region
      %121 = dma.done [#allocation3], 8192
    $region41: #{actor_forward.1} parent=1 // pred_fallthru
      _
    // Predicated region
    $region42: #{actor_forward.1} parent=1 // pred_check
      _
    $region43: #{actor_forward.1} parent=1 // pred_check_branch
      %123 = sbr.rel (0) target = $region45
    $region44: #{actor_forward.1} parent=1 // pred_region
      %125 = dma.done [#allocation6], 16
    $region45: #{actor_forward.1} parent=1 // pred_fallthru
      _
    // Predicated region
    $region46: #{actor_forward.1} parent=1 // pred_check
      _
    $region47: #{actor_forward.1} parent=1 // pred_check_branch
      %127 = sbr.rel (0) target = $region49
    $region48: #{actor_forward.1} parent=1 // pred_region
      %129 = dma.done [#allocation6], 8192
    $region49: #{actor_forward.1} parent=1 // pred_fallthru
      _
    // Predicated region
    $region50: #{actor_forward.1} parent=1 // pred_check
      _
    $region51: #{actor_forward.1} parent=1 // pred_check_branch
      %131 = sbr.rel (0) target = $region53
    $region52: #{actor_forward.1} parent=1 // pred_region
      %133 = dma.done [#allocation9], 128
    $region53: #{actor_forward.1} parent=1 // pred_fallthru
      _
    // Predicated region
    $region54: #{actor_forward.1} parent=1 // pred_check
      _
    $region55: #{actor_forward.1} parent=1 // pred_check_branch
      %135 = sbr.rel (0) target = $region57
    $region56: #{actor_forward.1} parent=1 // pred_region
      %137 = dma.done [#allocation9], 65536
    $region57: #{actor_forward.1} parent=1 // pred_fallthru
      _
    // Predicated region
    $region58: #{actor_forward.1} parent=1 // pred_check
      _
    $region59: #{actor_forward.1} parent=1 // pred_check_branch
      %139 = sbr.rel (0) target = $region61
    $region60: #{actor_forward.1} parent=1 // pred_region
      %141 = dma.done [#allocation12], 128
    $region61: #{actor_forward.1} parent=1 // pred_fallthru
      _
    // Predicated region
    $region62: #{actor_forward.1} parent=1 // pred_check
      _
    $region63: #{actor_forward.1} parent=1 // pred_check_branch
      %143 = sbr.rel (0) target = $region65
    $region64: #{actor_forward.1} parent=1 // pred_region
      %145 = dma.done [#allocation12], 8192
    $region65: #{actor_forward.1} parent=1 // pred_fallthru
      _
    // Predicated region
    $region66: #{actor_forward.1} parent=1 // pred_check
      _
    $region67: #{actor_forward.1} parent=1 // pred_check_branch
      %147 = sbr.rel (0) target = $region69
    $region68: #{actor_forward.1} parent=1 // pred_region
      %149 = dma.done [#allocation15], 16
    $region69: #{actor_forward.1} parent=1 // pred_fallthru
      _
    %v150 = vld [vmem:[%s0] sm:$0xff]
    %v151 = vld [vmem:[%s0 + $0x8] sm:$0xff]
    %154 = vst [vmem:[#allocation1] ss:$4 sm:$0xff] %v150
    %s155 = scalar_lea.vmem [#allocation1], 32
    %156 = vst [vmem:[%s155] ss:$4 sm:$0xff] %v151
    %v157 = vld.sshfl [vmem:[#allocation1] sm:$0xff pattern:$0x73625140]
    %v158 = vld.sshfl [vmem:[#allocation1 + $0x8] sm:$0xff pattern:$0x73625140]
    %v159 = vld.sshfl [vmem:[#allocation1 + $0x10] sm:$0xff pattern:$0x73625140]
    %v160 = vld.sshfl [vmem:[#allocation1 + $0x18] sm:$0xff pattern:$0x73625140]
    %v161 = vld.sshfl [vmem:[#allocation1 + $0x20] sm:$0xff pattern:$0x73625140]
    %v162 = vld.sshfl [vmem:[#allocation1 + $0x28] sm:$0xff pattern:$0x73625140]
    %v163 = vld.sshfl [vmem:[#allocation1 + $0x30] sm:$0xff pattern:$0x73625140]
    %v164 = vld.sshfl [vmem:[#allocation1 + $0x38] sm:$0xff pattern:$0x73625140]
    %v173 = vpack.c.bf16 %v157, %v157
    %v174 = vpack.c.bf16 %v158, %v158
    %v175 = vpack.c.bf16 %v159, %v159
    %v176 = vpack.c.bf16 %v160, %v160
    %v177 = vpack.c.bf16 %v161, %v161
    %v178 = vpack.c.bf16 %v162, %v162
    %v179 = vpack.c.bf16 %v163, %v163
    %v180 = vpack.c.bf16 %v164, %v164
    %v181 = vld [vmem:[#allocation2] sm:$0xf]
    %v182 = vld [vmem:[#allocation2 + $0x4] sm:$0xf]
    %v183 = vld [vmem:[#allocation2 + $0x8] sm:$0xf]
    %v184 = vld [vmem:[#allocation2 + $0xc] sm:$0xf]
    %v185 = vld [vmem:[#allocation2 + $0x10] sm:$0xf]
    %v186 = vld [vmem:[#allocation2 + $0x14] sm:$0xf]
    %v187 = vld [vmem:[#allocation2 + $0x18] sm:$0xf]
    %v188 = vld [vmem:[#allocation2 + $0x1c] sm:$0xf]
    %v189 = vld [vmem:[#allocation2 + $0x20] sm:$0xf]
    %v190 = vld [vmem:[#allocation2 + $0x24] sm:$0xf]
    %v191 = vld [vmem:[#allocation2 + $0x28] sm:$0xf]
    %v192 = vld [vmem:[#allocation2 + $0x2c] sm:$0xf]
    %v193 = vld [vmem:[#allocation2 + $0x30] sm:$0xf]
    %v194 = vld [vmem:[#allocation2 + $0x34] sm:$0xf]
    %v195 = vld [vmem:[#allocation2 + $0x38] sm:$0xf]
    %v196 = vld [vmem:[#allocation2 + $0x3c] sm:$0xf]
    %v197 = vld [vmem:[#allocation2 + $0x40] sm:$0xf]
    %v198 = vld [vmem:[#allocation2 + $0x44] sm:$0xf]
    %v199 = vld [vmem:[#allocation2 + $0x48] sm:$0xf]
    %v200 = vld [vmem:[#allocation2 + $0x4c] sm:$0xf]
    %v201 = vld [vmem:[#allocation2 + $0x50] sm:$0xf]
    %v202 = vld [vmem:[#allocation2 + $0x54] sm:$0xf]
    %v203 = vld [vmem:[#allocation2 + $0x58] sm:$0xf]
    %v204 = vld [vmem:[#allocation2 + $0x5c] sm:$0xf]
    %v205 = vld [vmem:[#allocation2 + $0x60] sm:$0xf]
    %v206 = vld [vmem:[#allocation2 + $0x64] sm:$0xf]
    %v207 = vld [vmem:[#allocation2 + $0x68] sm:$0xf]
    %v208 = vld [vmem:[#allocation2 + $0x6c] sm:$0xf]
    %v209 = vld [vmem:[#allocation2 + $0x70] sm:$0xf]
    %v210 = vld [vmem:[#allocation2 + $0x74] sm:$0xf]
    %v211 = vld [vmem:[#allocation2 + $0x78] sm:$0xf]
    %v212 = vld [vmem:[#allocation2 + $0x7c] sm:$0xf]
    %v213 = vld [vmem:[#allocation2 + $0x80] sm:$0xf]
    %v214 = vld [vmem:[#allocation2 + $0x84] sm:$0xf]
    %v215 = vld [vmem:[#allocation2 + $0x88] sm:$0xf]
    %v216 = vld [vmem:[#allocation2 + $0x8c] sm:$0xf]
    %v217 = vld [vmem:[#allocation2 + $0x90] sm:$0xf]
    %v218 = vld [vmem:[#allocation2 + $0x94] sm:$0xf]
    %v219 = vld [vmem:[#allocation2 + $0x98] sm:$0xf]
    %v220 = vld [vmem:[#allocation2 + $0x9c] sm:$0xf]
    %v221 = vld [vmem:[#allocation2 + $0xa0] sm:$0xf]
    %v222 = vld [vmem:[#allocation2 + $0xa4] sm:$0xf]
    %v223 = vld [vmem:[#allocation2 + $0xa8] sm:$0xf]
    %v224 = vld [vmem:[#allocation2 + $0xac] sm:$0xf]
    %v225 = vld [vmem:[#allocation2 + $0xb0] sm:$0xf]
    %v226 = vld [vmem:[#allocation2 + $0xb4] sm:$0xf]
    %v227 = vld [vmem:[#allocation2 + $0xb8] sm:$0xf]
    %v228 = vld [vmem:[#allocation2 + $0xbc] sm:$0xf]
    %v229 = vld [vmem:[#allocation2 + $0xc0] sm:$0xf]
    %v230 = vld [vmem:[#allocation2 + $0xc4] sm:$0xf]
    %v231 = vld [vmem:[#allocation2 + $0xc8] sm:$0xf]
    %v232 = vld [vmem:[#allocation2 + $0xcc] sm:$0xf]
    %v233 = vld [vmem:[#allocation2 + $0xd0] sm:$0xf]
    %v234 = vld [vmem:[#allocation2 + $0xd4] sm:$0xf]
    %v235 = vld [vmem:[#allocation2 + $0xd8] sm:$0xf]
    %v236 = vld [vmem:[#allocation2 + $0xdc] sm:$0xf]
    %v237 = vld [vmem:[#allocation2 + $0xe0] sm:$0xf]
    %v238 = vld [vmem:[#allocation2 + $0xe4] sm:$0xf]
    %v239 = vld [vmem:[#allocation2 + $0xe8] sm:$0xf]
    %v240 = vld [vmem:[#allocation2 + $0xec] sm:$0xf]
    %v241 = vld [vmem:[#allocation2 + $0xf0] sm:$0xf]
    %v242 = vld [vmem:[#allocation2 + $0xf4] sm:$0xf]
    %v243 = vld [vmem:[#allocation2 + $0xf8] sm:$0xf]
    %v244 = vld [vmem:[#allocation2 + $0xfc] sm:$0xf]
    %v245 = vld [vmem:[#allocation2 + $0x100] sm:$0xf]
    %v246 = vld [vmem:[#allocation2 + $0x104] sm:$0xf]
    %v247 = vld [vmem:[#allocation2 + $0x108] sm:$0xf]
    %v248 = vld [vmem:[#allocation2 + $0x10c] sm:$0xf]
    %v249 = vld [vmem:[#allocation2 + $0x110] sm:$0xf]
    %v250 = vld [vmem:[#allocation2 + $0x114] sm:$0xf]
    %v251 = vld [vmem:[#allocation2 + $0x118] sm:$0xf]
    %v252 = vld [vmem:[#allocation2 + $0x11c] sm:$0xf]
    %v253 = vld [vmem:[#allocation2 + $0x120] sm:$0xf]
    %v254 = vld [vmem:[#allocation2 + $0x124] sm:$0xf]
    %v255 = vld [vmem:[#allocation2 + $0x128] sm:$0xf]
    %v256 = vld [vmem:[#allocation2 + $0x12c] sm:$0xf]
    %v257 = vld [vmem:[#allocation2 + $0x130] sm:$0xf]
    %v258 = vld [vmem:[#allocation2 + $0x134] sm:$0xf]
    %v259 = vld [vmem:[#allocation2 + $0x138] sm:$0xf]
    %v260 = vld [vmem:[#allocation2 + $0x13c] sm:$0xf]
    %v261 = vld [vmem:[#allocation2 + $0x140] sm:$0xf]
    %v262 = vld [vmem:[#allocation2 + $0x144] sm:$0xf]
    %v263 = vld [vmem:[#allocation2 + $0x148] sm:$0xf]
    %v264 = vld [vmem:[#allocation2 + $0x14c] sm:$0xf]
    %v265 = vld [vmem:[#allocation2 + $0x150] sm:$0xf]
    %v266 = vld [vmem:[#allocation2 + $0x154] sm:$0xf]
    %v267 = vld [vmem:[#allocation2 + $0x158] sm:$0xf]
    %v268 = vld [vmem:[#allocation2 + $0x15c] sm:$0xf]
    %v269 = vld [vmem:[#allocation2 + $0x160] sm:$0xf]
    %v270 = vld [vmem:[#allocation2 + $0x164] sm:$0xf]
    %v271 = vld [vmem:[#allocation2 + $0x168] sm:$0xf]
    %v272 = vld [vmem:[#allocation2 + $0x16c] sm:$0xf]
    %v273 = vld [vmem:[#allocation2 + $0x170] sm:$0xf]
    %v274 = vld [vmem:[#allocation2 + $0x174] sm:$0xf]
    %v275 = vld [vmem:[#allocation2 + $0x178] sm:$0xf]
    %v276 = vld [vmem:[#allocation2 + $0x17c] sm:$0xf]
    %v277 = vld [vmem:[#allocation2 + $0x180] sm:$0xf]
    %v278 = vld [vmem:[#allocation2 + $0x184] sm:$0xf]
    %v279 = vld [vmem:[#allocation2 + $0x188] sm:$0xf]
    %v280 = vld [vmem:[#allocation2 + $0x18c] sm:$0xf]
    %v281 = vld [vmem:[#allocation2 + $0x190] sm:$0xf]
    %v282 = vld [vmem:[#allocation2 + $0x194] sm:$0xf]
    %v283 = vld [vmem:[#allocation2 + $0x198] sm:$0xf]
    %v284 = vld [vmem:[#allocation2 + $0x19c] sm:$0xf]
    %v285 = vld [vmem:[#allocation2 + $0x1a0] sm:$0xf]
    %v286 = vld [vmem:[#allocation2 + $0x1a4] sm:$0xf]
    %v287 = vld [vmem:[#allocation2 + $0x1a8] sm:$0xf]
    %v288 = vld [vmem:[#allocation2 + $0x1ac] sm:$0xf]
    %v289 = vld [vmem:[#allocation2 + $0x1b0] sm:$0xf]
    %v290 = vld [vmem:[#allocation2 + $0x1b4] sm:$0xf]
    %v291 = vld [vmem:[#allocation2 + $0x1b8] sm:$0xf]
    %v292 = vld [vmem:[#allocation2 + $0x1bc] sm:$0xf]
    %v293 = vld [vmem:[#allocation2 + $0x1c0] sm:$0xf]
    %v294 = vld [vmem:[#allocation2 + $0x1c4] sm:$0xf]
    %v295 = vld [vmem:[#allocation2 + $0x1c8] sm:$0xf]
    %v296 = vld [vmem:[#allocation2 + $0x1cc] sm:$0xf]
    %v297 = vld [vmem:[#allocation2 + $0x1d0] sm:$0xf]
    %v298 = vld [vmem:[#allocation2 + $0x1d4] sm:$0xf]
    %v299 = vld [vmem:[#allocation2 + $0x1d8] sm:$0xf]
    %v300 = vld [vmem:[#allocation2 + $0x1dc] sm:$0xf]
    %v301 = vld [vmem:[#allocation2 + $0x1e0] sm:$0xf]
    %v302 = vld [vmem:[#allocation2 + $0x1e4] sm:$0xf]
    %v303 = vld [vmem:[#allocation2 + $0x1e8] sm:$0xf]
    %v304 = vld [vmem:[#allocation2 + $0x1ec] sm:$0xf]
    %v305 = vld [vmem:[#allocation2 + $0x1f0] sm:$0xf]
    %v306 = vld [vmem:[#allocation2 + $0x1f4] sm:$0xf]
    %v307 = vld [vmem:[#allocation2 + $0x1f8] sm:$0xf]
    %v308 = vld [vmem:[#allocation2 + $0x1fc] sm:$0xf]
    %v309 = vld [vmem:[#allocation5] sm:$0x1]
    %v311 = vperm.slane %v309, 0
    %v441 = vunpack.c.l.b16 %v181
    %v442 = vunpack.c.l.b16 %v182
    %v443 = vunpack.c.l.b16 %v183
    %v444 = vunpack.c.l.b16 %v184
    %v445 = vunpack.c.l.b16 %v185
    %v446 = vunpack.c.l.b16 %v186
    %v447 = vunpack.c.l.b16 %v187
    %v448 = vunpack.c.l.b16 %v188
    %v449 = vunpack.c.l.b16 %v189
    %v450 = vunpack.c.l.b16 %v190
    %v451 = vunpack.c.l.b16 %v191
    %v452 = vunpack.c.l.b16 %v192
    %v453 = vunpack.c.l.b16 %v193
    %v454 = vunpack.c.l.b16 %v194
    %v455 = vunpack.c.l.b16 %v195
    %v456 = vunpack.c.l.b16 %v196
    %v457 = vunpack.c.l.b16 %v197
    %v458 = vunpack.c.l.b16 %v198
    %v459 = vunpack.c.l.b16 %v199
    %v460 = vunpack.c.l.b16 %v200
    %v461 = vunpack.c.l.b16 %v201
    %v462 = vunpack.c.l.b16 %v202
    %v463 = vunpack.c.l.b16 %v203
    %v464 = vunpack.c.l.b16 %v204
    %v465 = vunpack.c.l.b16 %v205
    %v466 = vunpack.c.l.b16 %v206
    %v467 = vunpack.c.l.b16 %v207
    %v468 = vunpack.c.l.b16 %v208
    %v469 = vunpack.c.l.b16 %v209
    %v470 = vunpack.c.l.b16 %v210
    %v471 = vunpack.c.l.b16 %v211
    %v472 = vunpack.c.l.b16 %v212
    %v473 = vunpack.c.l.b16 %v213
    %v474 = vunpack.c.l.b16 %v214
    %v475 = vunpack.c.l.b16 %v215
    %v476 = vunpack.c.l.b16 %v216
    %v477 = vunpack.c.l.b16 %v217
    %v478 = vunpack.c.l.b16 %v218
    %v479 = vunpack.c.l.b16 %v219
    %v480 = vunpack.c.l.b16 %v220
    %v481 = vunpack.c.l.b16 %v221
    %v482 = vunpack.c.l.b16 %v222
    %v483 = vunpack.c.l.b16 %v223
    %v484 = vunpack.c.l.b16 %v224
    %v485 = vunpack.c.l.b16 %v225
    %v486 = vunpack.c.l.b16 %v226
    %v487 = vunpack.c.l.b16 %v227
    %v488 = vunpack.c.l.b16 %v228
    %v489 = vunpack.c.l.b16 %v229
    %v490 = vunpack.c.l.b16 %v230
    %v491 = vunpack.c.l.b16 %v231
    %v492 = vunpack.c.l.b16 %v232
    %v493 = vunpack.c.l.b16 %v233
    %v494 = vunpack.c.l.b16 %v234
    %v495 = vunpack.c.l.b16 %v235
    %v496 = vunpack.c.l.b16 %v236
    %v497 = vunpack.c.l.b16 %v237
    %v498 = vunpack.c.l.b16 %v238
    %v499 = vunpack.c.l.b16 %v239
    %v500 = vunpack.c.l.b16 %v240
    %v501 = vunpack.c.l.b16 %v241
    %v502 = vunpack.c.l.b16 %v242
    %v503 = vunpack.c.l.b16 %v243
    %v504 = vunpack.c.l.b16 %v244
    %v505 = vunpack.c.l.b16 %v245
    %v506 = vunpack.c.l.b16 %v246
    %v507 = vunpack.c.l.b16 %v247
    %v508 = vunpack.c.l.b16 %v248
    %v509 = vunpack.c.l.b16 %v249
    %v510 = vunpack.c.l.b16 %v250
    %v511 = vunpack.c.l.b16 %v251
    %v512 = vunpack.c.l.b16 %v252
    %v513 = vunpack.c.l.b16 %v253
    %v514 = vunpack.c.l.b16 %v254
    %v515 = vunpack.c.l.b16 %v255
    %v516 = vunpack.c.l.b16 %v256
    %v517 = vunpack.c.l.b16 %v257
    %v518 = vunpack.c.l.b16 %v258
    %v519 = vunpack.c.l.b16 %v259
    %v520 = vunpack.c.l.b16 %v260
    %v521 = vunpack.c.l.b16 %v261
    %v522 = vunpack.c.l.b16 %v262
    %v523 = vunpack.c.l.b16 %v263
    %v524 = vunpack.c.l.b16 %v264
    %v525 = vunpack.c.l.b16 %v265
    %v526 = vunpack.c.l.b16 %v266
    %v527 = vunpack.c.l.b16 %v267
    %v528 = vunpack.c.l.b16 %v268
    %v529 = vunpack.c.l.b16 %v269
    %v530 = vunpack.c.l.b16 %v270
    %v531 = vunpack.c.l.b16 %v271
    %v532 = vunpack.c.l.b16 %v272
    %v533 = vunpack.c.l.b16 %v273
    %v534 = vunpack.c.l.b16 %v274
    %v535 = vunpack.c.l.b16 %v275
    %v536 = vunpack.c.l.b16 %v276
    %v537 = vunpack.c.l.b16 %v277
    %v538 = vunpack.c.l.b16 %v278
    %v539 = vunpack.c.l.b16 %v279
    %v540 = vunpack.c.l.b16 %v280
    %v541 = vunpack.c.l.b16 %v281
    %v542 = vunpack.c.l.b16 %v282
    %v543 = vunpack.c.l.b16 %v283
    %v544 = vunpack.c.l.b16 %v284
    %v545 = vunpack.c.l.b16 %v285
    %v546 = vunpack.c.l.b16 %v286
    %v547 = vunpack.c.l.b16 %v287
    %v548 = vunpack.c.l.b16 %v288
    %v549 = vunpack.c.l.b16 %v289
    %v550 = vunpack.c.l.b16 %v290
    %v551 = vunpack.c.l.b16 %v291
    %v552 = vunpack.c.l.b16 %v292
    %v553 = vunpack.c.l.b16 %v293
    %v554 = vunpack.c.l.b16 %v294
    %v555 = vunpack.c.l.b16 %v295
    %v556 = vunpack.c.l.b16 %v296
    %v557 = vunpack.c.l.b16 %v297
    %v558 = vunpack.c.l.b16 %v298
    %v559 = vunpack.c.l.b16 %v299
    %v560 = vunpack.c.l.b16 %v300
    %v561 = vunpack.c.l.b16 %v301
    %v562 = vunpack.c.l.b16 %v302
    %v563 = vunpack.c.l.b16 %v303
    %v564 = vunpack.c.l.b16 %v304
    %v565 = vunpack.c.l.b16 %v305
    %v566 = vunpack.c.l.b16 %v306
    %v567 = vunpack.c.l.b16 %v307
    %v568 = vunpack.c.l.b16 %v308
    %v569 = vpack.c.b16 %v442, %v441
    %v570 = vpack.c.b16 %v444, %v443
    %v571 = vpack.c.b16 %v446, %v445
    %v572 = vpack.c.b16 %v448, %v447
    %v573 = vpack.c.b16 %v450, %v449
    %v574 = vpack.c.b16 %v452, %v451
    %v575 = vpack.c.b16 %v454, %v453
    %v576 = vpack.c.b16 %v456, %v455
    %v577 = vpack.c.b16 %v458, %v457
    %v578 = vpack.c.b16 %v460, %v459
    %v579 = vpack.c.b16 %v462, %v461
    %v580 = vpack.c.b16 %v464, %v463
    %v581 = vpack.c.b16 %v466, %v465
    %v582 = vpack.c.b16 %v468, %v467
    %v583 = vpack.c.b16 %v470, %v469
    %v584 = vpack.c.b16 %v472, %v471
    %v585 = vpack.c.b16 %v474, %v473
    %v586 = vpack.c.b16 %v476, %v475
    %v587 = vpack.c.b16 %v478, %v477
    %v588 = vpack.c.b16 %v480, %v479
    %v589 = vpack.c.b16 %v482, %v481
    %v590 = vpack.c.b16 %v484, %v483
    %v591 = vpack.c.b16 %v486, %v485
    %v592 = vpack.c.b16 %v488, %v487
    %v593 = vpack.c.b16 %v490, %v489
    %v594 = vpack.c.b16 %v492, %v491
    %v595 = vpack.c.b16 %v494, %v493
    %v596 = vpack.c.b16 %v496, %v495
    %v597 = vpack.c.b16 %v498, %v497
    %v598 = vpack.c.b16 %v500, %v499
    %v599 = vpack.c.b16 %v502, %v501
    %v600 = vpack.c.b16 %v504, %v503
    %v601 = vpack.c.b16 %v506, %v505
    %v602 = vpack.c.b16 %v508, %v507
    %v603 = vpack.c.b16 %v510, %v509
    %v604 = vpack.c.b16 %v512, %v511
    %v605 = vpack.c.b16 %v514, %v513
    %v606 = vpack.c.b16 %v516, %v515
    %v607 = vpack.c.b16 %v518, %v517
    %v608 = vpack.c.b16 %v520, %v519
    %v609 = vpack.c.b16 %v522, %v521
    %v610 = vpack.c.b16 %v524, %v523
    %v611 = vpack.c.b16 %v526, %v525
    %v612 = vpack.c.b16 %v528, %v527
    %v613 = vpack.c.b16 %v530, %v529
    %v614 = vpack.c.b16 %v532, %v531
    %v615 = vpack.c.b16 %v534, %v533
    %v616 = vpack.c.b16 %v536, %v535
    %v617 = vpack.c.b16 %v538, %v537
    %v618 = vpack.c.b16 %v540, %v539
    %v619 = vpack.c.b16 %v542, %v541
    %v620 = vpack.c.b16 %v544, %v543
    %v621 = vpack.c.b16 %v546, %v545
    %v622 = vpack.c.b16 %v548, %v547
    %v623 = vpack.c.b16 %v550, %v549
    %v624 = vpack.c.b16 %v552, %v551
    %v625 = vpack.c.b16 %v554, %v553
    %v626 = vpack.c.b16 %v556, %v555
    %v627 = vpack.c.b16 %v558, %v557
    %v628 = vpack.c.b16 %v560, %v559
    %v629 = vpack.c.b16 %v562, %v561
    %v630 = vpack.c.b16 %v564, %v563
    %v631 = vpack.c.b16 %v566, %v565
    %v632 = vpack.c.b16 %v568, %v567
    %697 = vmatpush.bf16.msra.mxu0 %v576
    %698 = vmatpush.bf16.msra.mxu0 %v575
    %699 = vmatpush.bf16.msra.mxu0 %v574
    %700 = vmatpush.bf16.msra.mxu0 %v573
    %701 = vmatpush.bf16.msra.mxu0 %v572
    %702 = vmatpush.bf16.msra.mxu0 %v571
    %703 = vmatpush.bf16.msra.mxu0 %v570
    %704 = vmatpush.bf16.msra.mxu0 %v569
    %705 = vmatmul.bf16.gmra.mxu0 %v173
    %v706 = vpop.f32.mrf.mxu0
    %v707 = vadd.f32 %v311, %v706
    %v708 = vpop.f32.mrf.mxu0
    %709 = vdwg.mxu0
    %710 = vmatpush.bf16.msra.mxu0 %v584
    %711 = vmatpush.bf16.msra.mxu0 %v583
    %712 = vmatpush.bf16.msra.mxu0 %v582
    %713 = vmatpush.bf16.msra.mxu0 %v581
    %714 = vmatpush.bf16.msra.mxu0 %v580
    %715 = vmatpush.bf16.msra.mxu0 %v579
    %716 = vmatpush.bf16.msra.mxu0 %v578
    %717 = vmatpush.bf16.msra.mxu0 %v577
    %718 = vmatmul.bf16.gmra.mxu0 %v174
    %v719 = vpop.f32.mrf.mxu0
    %v720 = vadd.f32 %v707, %v719
    %v721 = vpop.f32.mrf.mxu0
    %722 = vdwg.mxu0
    %723 = vmatpush.bf16.msra.mxu0 %v592
    %724 = vmatpush.bf16.msra.mxu0 %v591
    %725 = vmatpush.bf16.msra.mxu0 %v590
    %726 = vmatpush.bf16.msra.mxu0 %v589
    %727 = vmatpush.bf16.msra.mxu0 %v588
    %728 = vmatpush.bf16.msra.mxu0 %v587
    %729 = vmatpush.bf16.msra.mxu0 %v586
    %730 = vmatpush.bf16.msra.mxu0 %v585
    %731 = vmatmul.bf16.gmra.mxu0 %v175
    %v732 = vpop.f32.mrf.mxu0
    %v733 = vadd.f32 %v720, %v732
    %v734 = vpop.f32.mrf.mxu0
    %735 = vdwg.mxu0
    %736 = vmatpush.bf16.msra.mxu0 %v600
    %737 = vmatpush.bf16.msra.mxu0 %v599
    %738 = vmatpush.bf16.msra.mxu0 %v598
    %739 = vmatpush.bf16.msra.mxu0 %v597
    %740 = vmatpush.bf16.msra.mxu0 %v596
    %741 = vmatpush.bf16.msra.mxu0 %v595
    %742 = vmatpush.bf16.msra.mxu0 %v594
    %743 = vmatpush.bf16.msra.mxu0 %v593
    %744 = vmatmul.bf16.gmra.mxu0 %v176
    %v745 = vpop.f32.mrf.mxu0
    %v746 = vadd.f32 %v733, %v745
    %v747 = vpop.f32.mrf.mxu0
    %748 = vdwg.mxu0
    %749 = vmatpush.bf16.msra.mxu0 %v608
    %750 = vmatpush.bf16.msra.mxu0 %v607
    %751 = vmatpush.bf16.msra.mxu0 %v606
    %752 = vmatpush.bf16.msra.mxu0 %v605
    %753 = vmatpush.bf16.msra.mxu0 %v604
    %754 = vmatpush.bf16.msra.mxu0 %v603
    %755 = vmatpush.bf16.msra.mxu0 %v602
    %756 = vmatpush.bf16.msra.mxu0 %v601
    %757 = vmatmul.bf16.gmra.mxu0 %v177
    %v758 = vpop.f32.mrf.mxu0
    %v759 = vadd.f32 %v746, %v758
    %v760 = vpop.f32.mrf.mxu0
    %761 = vdwg.mxu0
    %762 = vmatpush.bf16.msra.mxu0 %v616
    %763 = vmatpush.bf16.msra.mxu0 %v615
    %764 = vmatpush.bf16.msra.mxu0 %v614
    %765 = vmatpush.bf16.msra.mxu0 %v613
    %766 = vmatpush.bf16.msra.mxu0 %v612
    %767 = vmatpush.bf16.msra.mxu0 %v611
    %768 = vmatpush.bf16.msra.mxu0 %v610
    %769 = vmatpush.bf16.msra.mxu0 %v609
    %770 = vmatmul.bf16.gmra.mxu0 %v178
    %v771 = vpop.f32.mrf.mxu0
    %v772 = vadd.f32 %v759, %v771
    %v773 = vpop.f32.mrf.mxu0
    %774 = vdwg.mxu0
    %775 = vmatpush.bf16.msra.mxu0 %v624
    %776 = vmatpush.bf16.msra.mxu0 %v623
    %777 = vmatpush.bf16.msra.mxu0 %v622
    %778 = vmatpush.bf16.msra.mxu0 %v621
    %779 = vmatpush.bf16.msra.mxu0 %v620
    %780 = vmatpush.bf16.msra.mxu0 %v619
    %781 = vmatpush.bf16.msra.mxu0 %v618
    %782 = vmatpush.bf16.msra.mxu0 %v617
    %783 = vmatmul.bf16.gmra.mxu0 %v179
    %v784 = vpop.f32.mrf.mxu0
    %v785 = vadd.f32 %v772, %v784
    %v786 = vpop.f32.mrf.mxu0
    %787 = vdwg.mxu0
    %788 = vmatpush.bf16.msra.mxu0 %v632
    %789 = vmatpush.bf16.msra.mxu0 %v631
    %790 = vmatpush.bf16.msra.mxu0 %v630
    %791 = vmatpush.bf16.msra.mxu0 %v629
    %792 = vmatpush.bf16.msra.mxu0 %v628
    %793 = vmatpush.bf16.msra.mxu0 %v627
    %794 = vmatpush.bf16.msra.mxu0 %v626
    %795 = vmatpush.bf16.msra.mxu0 %v625
    %796 = vmatmul.bf16.gmra.mxu0 %v180
    %v797 = vpop.f32.mrf.mxu0
    %v798 = vadd.f32 %v785, %v797
    %v799 = vpop.f32.mrf.mxu0
    %800 = vdwg.mxu0
    %v801 = vpack.c.bf16 %v798, %v798
    %v802 = vld [vmem:[#allocation7] sm:$0xff]
    %v803 = vld [vmem:[#allocation7 + $0x8] sm:$0xff]
    %v804 = vld [vmem:[#allocation7 + $0x10] sm:$0xff]
    %v805 = vld [vmem:[#allocation7 + $0x18] sm:$0xff]
    %v806 = vld [vmem:[#allocation7 + $0x20] sm:$0xff]
    %v807 = vld [vmem:[#allocation7 + $0x28] sm:$0xff]
    %v808 = vld [vmem:[#allocation7 + $0x30] sm:$0xff]
    %v809 = vld [vmem:[#allocation7 + $0x38] sm:$0xff]
    %v810 = vld [vmem:[#allocation7 + $0x40] sm:$0xff]
    %v811 = vld [vmem:[#allocation7 + $0x48] sm:$0xff]
    %v812 = vld [vmem:[#allocation7 + $0x50] sm:$0xff]
    %v813 = vld [vmem:[#allocation7 + $0x58] sm:$0xff]
    %v814 = vld [vmem:[#allocation7 + $0x60] sm:$0xff]
    %v815 = vld [vmem:[#allocation7 + $0x68] sm:$0xff]
    %v816 = vld [vmem:[#allocation7 + $0x70] sm:$0xff]
    %v817 = vld [vmem:[#allocation7 + $0x78] sm:$0xff]
    %v818 = vld [vmem:[#allocation7 + $0x80] sm:$0xff]
    %v819 = vld [vmem:[#allocation7 + $0x88] sm:$0xff]
    %v820 = vld [vmem:[#allocation7 + $0x90] sm:$0xff]
    %v821 = vld [vmem:[#allocation7 + $0x98] sm:$0xff]
    %v822 = vld [vmem:[#allocation7 + $0xa0] sm:$0xff]
    %v823 = vld [vmem:[#allocation7 + $0xa8] sm:$0xff]
    %v824 = vld [vmem:[#allocation7 + $0xb0] sm:$0xff]
    %v825 = vld [vmem:[#allocation7 + $0xb8] sm:$0xff]
    %v826 = vld [vmem:[#allocation7 + $0xc0] sm:$0xff]
    %v827 = vld [vmem:[#allocation7 + $0xc8] sm:$0xff]
    %v828 = vld [vmem:[#allocation7 + $0xd0] sm:$0xff]
    %v829 = vld [vmem:[#allocation7 + $0xd8] sm:$0xff]
    %v830 = vld [vmem:[#allocation7 + $0xe0] sm:$0xff]
    %v831 = vld [vmem:[#allocation7 + $0xe8] sm:$0xff]
    %v832 = vld [vmem:[#allocation7 + $0xf0] sm:$0xff]
    %v833 = vld [vmem:[#allocation7 + $0xf8] sm:$0xff]
    %v834 = vld [vmem:[#allocation7 + $0x100] sm:$0xff]
    %v835 = vld [vmem:[#allocation7 + $0x108] sm:$0xff]
    %v836 = vld [vmem:[#allocation7 + $0x110] sm:$0xff]
    %v837 = vld [vmem:[#allocation7 + $0x118] sm:$0xff]
    %v838 = vld [vmem:[#allocation7 + $0x120] sm:$0xff]
    %v839 = vld [vmem:[#allocation7 + $0x128] sm:$0xff]
    %v840 = vld [vmem:[#allocation7 + $0x130] sm:$0xff]
    %v841 = vld [vmem:[#allocation7 + $0x138] sm:$0xff]
    %v842 = vld [vmem:[#allocation7 + $0x140] sm:$0xff]
    %v843 = vld [vmem:[#allocation7 + $0x148] sm:$0xff]
    %v844 = vld [vmem:[#allocation7 + $0x150] sm:$0xff]
    %v845 = vld [vmem:[#allocation7 + $0x158] sm:$0xff]
    %v846 = vld [vmem:[#allocation7 + $0x160] sm:$0xff]
    %v847 = vld [vmem:[#allocation7 + $0x168] sm:$0xff]
    %v848 = vld [vmem:[#allocation7 + $0x170] sm:$0xff]
    %v849 = vld [vmem:[#allocation7 + $0x178] sm:$0xff]
    %v850 = vld [vmem:[#allocation7 + $0x180] sm:$0xff]
    %v851 = vld [vmem:[#allocation7 + $0x188] sm:$0xff]
    %v852 = vld [vmem:[#allocation7 + $0x190] sm:$0xff]
    %v853 = vld [vmem:[#allocation7 + $0x198] sm:$0xff]
    %v854 = vld [vmem:[#allocation7 + $0x1a0] sm:$0xff]
    %v855 = vld [vmem:[#allocation7 + $0x1a8] sm:$0xff]
    %v856 = vld [vmem:[#allocation7 + $0x1b0] sm:$0xff]
    %v857 = vld [vmem:[#allocation7 + $0x1b8] sm:$0xff]
    %v858 = vld [vmem:[#allocation7 + $0x1c0] sm:$0xff]
    %v859 = vld [vmem:[#allocation7 + $0x1c8] sm:$0xff]
    %v860 = vld [vmem:[#allocation7 + $0x1d0] sm:$0xff]
    %v861 = vld [vmem:[#allocation7 + $0x1d8] sm:$0xff]
    %v862 = vld [vmem:[#allocation7 + $0x1e0] sm:$0xff]
    %v863 = vld [vmem:[#allocation7 + $0x1e8] sm:$0xff]
    %v864 = vld [vmem:[#allocation7 + $0x1f0] sm:$0xff]
    %v865 = vld [vmem:[#allocation7 + $0x1f8] sm:$0xff]
    %v866 = vld [vmem:[#allocation8] sm:$0xff]
    %v868 = vperm.slane %v866, 0
    %v869 = vperm.slane %v866, 1
    %v870 = vperm.slane %v866, 2
    %v871 = vperm.slane %v866, 3
    %v872 = vperm.slane %v866, 4
    %v873 = vperm.slane %v866, 5
    %v874 = vperm.slane %v866, 6
    %v875 = vperm.slane %v866, 7
    %v948 = vunpack.c.l.b16 %v802
    %v949 = vunpack.c.h.b16 %v802
    %v950 = vunpack.c.l.b16 %v803
    %v951 = vunpack.c.h.b16 %v803
    %v952 = vunpack.c.l.b16 %v804
    %v953 = vunpack.c.h.b16 %v804
    %v954 = vunpack.c.l.b16 %v805
    %v955 = vunpack.c.h.b16 %v805
    %v956 = vunpack.c.l.b16 %v806
    %v957 = vunpack.c.h.b16 %v806
    %v958 = vunpack.c.l.b16 %v807
    %v959 = vunpack.c.h.b16 %v807
    %v960 = vunpack.c.l.b16 %v808
    %v961 = vunpack.c.h.b16 %v808
    %v962 = vunpack.c.l.b16 %v809
    %v963 = vunpack.c.h.b16 %v809
    %v964 = vunpack.c.l.b16 %v810
    %v965 = vunpack.c.h.b16 %v810
    %v966 = vunpack.c.l.b16 %v811
    %v967 = vunpack.c.h.b16 %v811
    %v968 = vunpack.c.l.b16 %v812
    %v969 = vunpack.c.h.b16 %v812
    %v970 = vunpack.c.l.b16 %v813
    %v971 = vunpack.c.h.b16 %v813
    %v972 = vunpack.c.l.b16 %v814
    %v973 = vunpack.c.h.b16 %v814
    %v974 = vunpack.c.l.b16 %v815
    %v975 = vunpack.c.h.b16 %v815
    %v976 = vunpack.c.l.b16 %v816
    %v977 = vunpack.c.h.b16 %v816
    %v978 = vunpack.c.l.b16 %v817
    %v979 = vunpack.c.h.b16 %v817
    %v980 = vunpack.c.l.b16 %v818
    %v981 = vunpack.c.h.b16 %v818
    %v982 = vunpack.c.l.b16 %v819
    %v983 = vunpack.c.h.b16 %v819
    %v984 = vunpack.c.l.b16 %v820
    %v985 = vunpack.c.h.b16 %v820
    %v986 = vunpack.c.l.b16 %v821
    %v987 = vunpack.c.h.b16 %v821
    %v988 = vunpack.c.l.b16 %v822
    %v989 = vunpack.c.h.b16 %v822
    %v990 = vunpack.c.l.b16 %v823
    %v991 = vunpack.c.h.b16 %v823
    %v992 = vunpack.c.l.b16 %v824
    %v993 = vunpack.c.h.b16 %v824
    %v994 = vunpack.c.l.b16 %v825
    %v995 = vunpack.c.h.b16 %v825
    %v996 = vunpack.c.l.b16 %v826
    %v997 = vunpack.c.h.b16 %v826
    %v998 = vunpack.c.l.b16 %v827
    %v999 = vunpack.c.h.b16 %v827
    %v1000 = vunpack.c.l.b16 %v828
    %v1001 = vunpack.c.h.b16 %v828
    %v1002 = vunpack.c.l.b16 %v829
    %v1003 = vunpack.c.h.b16 %v829
    %v1004 = vunpack.c.l.b16 %v830
    %v1005 = vunpack.c.h.b16 %v830
    %v1006 = vunpack.c.l.b16 %v831
    %v1007 = vunpack.c.h.b16 %v831
    %v1008 = vunpack.c.l.b16 %v832
    %v1009 = vunpack.c.h.b16 %v832
    %v1010 = vunpack.c.l.b16 %v833
    %v1011 = vunpack.c.h.b16 %v833
    %v1012 = vunpack.c.l.b16 %v834
    %v1013 = vunpack.c.h.b16 %v834
    %v1014 = vunpack.c.l.b16 %v835
    %v1015 = vunpack.c.h.b16 %v835
    %v1016 = vunpack.c.l.b16 %v836
    %v1017 = vunpack.c.h.b16 %v836
    %v1018 = vunpack.c.l.b16 %v837
    %v1019 = vunpack.c.h.b16 %v837
    %v1020 = vunpack.c.l.b16 %v838
    %v1021 = vunpack.c.h.b16 %v838
    %v1022 = vunpack.c.l.b16 %v839
    %v1023 = vunpack.c.h.b16 %v839
    %v1024 = vunpack.c.l.b16 %v840
    %v1025 = vunpack.c.h.b16 %v840
    %v1026 = vunpack.c.l.b16 %v841
    %v1027 = vunpack.c.h.b16 %v841
    %v1028 = vunpack.c.l.b16 %v842
    %v1029 = vunpack.c.h.b16 %v842
    %v1030 = vunpack.c.l.b16 %v843
    %v1031 = vunpack.c.h.b16 %v843
    %v1032 = vunpack.c.l.b16 %v844
    %v1033 = vunpack.c.h.b16 %v844
    %v1034 = vunpack.c.l.b16 %v845
    %v1035 = vunpack.c.h.b16 %v845
    %v1036 = vunpack.c.l.b16 %v846
    %v1037 = vunpack.c.h.b16 %v846
    %v1038 = vunpack.c.l.b16 %v847
    %v1039 = vunpack.c.h.b16 %v847
    %v1040 = vunpack.c.l.b16 %v848
    %v1041 = vunpack.c.h.b16 %v848
    %v1042 = vunpack.c.l.b16 %v849
    %v1043 = vunpack.c.h.b16 %v849
    %v1044 = vunpack.c.l.b16 %v850
    %v1045 = vunpack.c.h.b16 %v850
    %v1046 = vunpack.c.l.b16 %v851
    %v1047 = vunpack.c.h.b16 %v851
    %v1048 = vunpack.c.l.b16 %v852
    %v1049 = vunpack.c.h.b16 %v852
    %v1050 = vunpack.c.l.b16 %v853
    %v1051 = vunpack.c.h.b16 %v853
    %v1052 = vunpack.c.l.b16 %v854
    %v1053 = vunpack.c.h.b16 %v854
    %v1054 = vunpack.c.l.b16 %v855
    %v1055 = vunpack.c.h.b16 %v855
    %v1056 = vunpack.c.l.b16 %v856
    %v1057 = vunpack.c.h.b16 %v856
    %v1058 = vunpack.c.l.b16 %v857
    %v1059 = vunpack.c.h.b16 %v857
    %v1060 = vunpack.c.l.b16 %v858
    %v1061 = vunpack.c.h.b16 %v858
    %v1062 = vunpack.c.l.b16 %v859
    %v1063 = vunpack.c.h.b16 %v859
    %v1064 = vunpack.c.l.b16 %v860
    %v1065 = vunpack.c.h.b16 %v860
    %v1066 = vunpack.c.l.b16 %v861
    %v1067 = vunpack.c.h.b16 %v861
    %v1068 = vunpack.c.l.b16 %v862
    %v1069 = vunpack.c.h.b16 %v862
    %v1070 = vunpack.c.l.b16 %v863
    %v1071 = vunpack.c.h.b16 %v863
    %v1072 = vunpack.c.l.b16 %v864
    %v1073 = vunpack.c.h.b16 %v864
    %v1074 = vunpack.c.l.b16 %v865
    %v1075 = vunpack.c.h.b16 %v865
    %v1076 = vpack.c.b16 %v956, %v948
    %v1077 = vpack.c.b16 %v957, %v949
    %v1078 = vpack.c.b16 %v958, %v950
    %v1079 = vpack.c.b16 %v959, %v951
    %v1080 = vpack.c.b16 %v960, %v952
    %v1081 = vpack.c.b16 %v961, %v953
    %v1082 = vpack.c.b16 %v962, %v954
    %v1083 = vpack.c.b16 %v963, %v955
    %v1084 = vpack.c.b16 %v972, %v964
    %v1085 = vpack.c.b16 %v973, %v965
    %v1086 = vpack.c.b16 %v974, %v966
    %v1087 = vpack.c.b16 %v975, %v967
    %v1088 = vpack.c.b16 %v976, %v968
    %v1089 = vpack.c.b16 %v977, %v969
    %v1090 = vpack.c.b16 %v978, %v970
    %v1091 = vpack.c.b16 %v979, %v971
    %v1092 = vpack.c.b16 %v988, %v980
    %v1093 = vpack.c.b16 %v989, %v981
    %v1094 = vpack.c.b16 %v990, %v982
    %v1095 = vpack.c.b16 %v991, %v983
    %v1096 = vpack.c.b16 %v992, %v984
    %v1097 = vpack.c.b16 %v993, %v985
    %v1098 = vpack.c.b16 %v994, %v986
    %v1099 = vpack.c.b16 %v995, %v987
    %v1100 = vpack.c.b16 %v1004, %v996
    %v1101 = vpack.c.b16 %v1005, %v997
    %v1102 = vpack.c.b16 %v1006, %v998
    %v1103 = vpack.c.b16 %v1007, %v999
    %v1104 = vpack.c.b16 %v1008, %v1000
    %v1105 = vpack.c.b16 %v1009, %v1001
    %v1106 = vpack.c.b16 %v1010, %v1002
    %v1107 = vpack.c.b16 %v1011, %v1003
    %v1108 = vpack.c.b16 %v1020, %v1012
    %v1109 = vpack.c.b16 %v1021, %v1013
    %v1110 = vpack.c.b16 %v1022, %v1014
    %v1111 = vpack.c.b16 %v1023, %v1015
    %v1112 = vpack.c.b16 %v1024, %v1016
    %v1113 = vpack.c.b16 %v1025, %v1017
    %v1114 = vpack.c.b16 %v1026, %v1018
    %v1115 = vpack.c.b16 %v1027, %v1019
    %v1116 = vpack.c.b16 %v1036, %v1028
    %v1117 = vpack.c.b16 %v1037, %v1029
    %v1118 = vpack.c.b16 %v1038, %v1030
    %v1119 = vpack.c.b16 %v1039, %v1031
    %v1120 = vpack.c.b16 %v1040, %v1032
    %v1121 = vpack.c.b16 %v1041, %v1033
    %v1122 = vpack.c.b16 %v1042, %v1034
    %v1123 = vpack.c.b16 %v1043, %v1035
    %v1124 = vpack.c.b16 %v1052, %v1044
    %v1125 = vpack.c.b16 %v1053, %v1045
    %v1126 = vpack.c.b16 %v1054, %v1046
    %v1127 = vpack.c.b16 %v1055, %v1047
    %v1128 = vpack.c.b16 %v1056, %v1048
    %v1129 = vpack.c.b16 %v1057, %v1049
    %v1130 = vpack.c.b16 %v1058, %v1050
    %v1131 = vpack.c.b16 %v1059, %v1051
    %v1132 = vpack.c.b16 %v1068, %v1060
    %v1133 = vpack.c.b16 %v1069, %v1061
    %v1134 = vpack.c.b16 %v1070, %v1062
    %v1135 = vpack.c.b16 %v1071, %v1063
    %v1136 = vpack.c.b16 %v1072, %v1064
    %v1137 = vpack.c.b16 %v1073, %v1065
    %v1138 = vpack.c.b16 %v1074, %v1066
    %v1139 = vpack.c.b16 %v1075, %v1067
    %1204 = vmatpush.bf16.msra.mxu0 %v1132
    %1205 = vmatpush.bf16.msra.mxu0 %v1124
    %1206 = vmatpush.bf16.msra.mxu0 %v1116
    %1207 = vmatpush.bf16.msra.mxu0 %v1108
    %1208 = vmatpush.bf16.msra.mxu0 %v1100
    %1209 = vmatpush.bf16.msra.mxu0 %v1092
    %1210 = vmatpush.bf16.msra.mxu0 %v1084
    %1211 = vmatpush.bf16.msra.mxu0 %v1076
    %1212 = vmatmul.bf16.gmra.mxu0 %v801
    %v1213 = vpop.f32.mrf.mxu0
    %v1214 = vadd.f32 %v868, %v1213
    %v1215 = vpop.f32.mrf.mxu0
    %1216 = vdwg.mxu0
    %1217 = vmatpush.bf16.msra.mxu0 %v1133
    %1218 = vmatpush.bf16.msra.mxu0 %v1125
    %1219 = vmatpush.bf16.msra.mxu0 %v1117
    %1220 = vmatpush.bf16.msra.mxu0 %v1109
    %1221 = vmatpush.bf16.msra.mxu0 %v1101
    %1222 = vmatpush.bf16.msra.mxu0 %v1093
    %1223 = vmatpush.bf16.msra.mxu0 %v1085
    %1224 = vmatpush.bf16.msra.mxu0 %v1077
    %1225 = vmatmul.bf16.gmra.mxu0 %v801
    %v1226 = vpop.f32.mrf.mxu0
    %v1227 = vadd.f32 %v869, %v1226
    %v1228 = vpop.f32.mrf.mxu0
    %1229 = vdwg.mxu0
    %1230 = vmatpush.bf16.msra.mxu0 %v1134
    %1231 = vmatpush.bf16.msra.mxu0 %v1126
    %1232 = vmatpush.bf16.msra.mxu0 %v1118
    %1233 = vmatpush.bf16.msra.mxu0 %v1110
    %1234 = vmatpush.bf16.msra.mxu0 %v1102
    %1235 = vmatpush.bf16.msra.mxu0 %v1094
    %1236 = vmatpush.bf16.msra.mxu0 %v1086
    %1237 = vmatpush.bf16.msra.mxu0 %v1078
    %1238 = vmatmul.bf16.gmra.mxu0 %v801
    %v1239 = vpop.f32.mrf.mxu0
    %v1240 = vadd.f32 %v870, %v1239
    %v1241 = vpop.f32.mrf.mxu0
    %1242 = vdwg.mxu0
    %1243 = vmatpush.bf16.msra.mxu0 %v1135
    %1244 = vmatpush.bf16.msra.mxu0 %v1127
    %1245 = vmatpush.bf16.msra.mxu0 %v1119
    %1246 = vmatpush.bf16.msra.mxu0 %v1111
    %1247 = vmatpush.bf16.msra.mxu0 %v1103
    %1248 = vmatpush.bf16.msra.mxu0 %v1095
    %1249 = vmatpush.bf16.msra.mxu0 %v1087
    %1250 = vmatpush.bf16.msra.mxu0 %v1079
    %1251 = vmatmul.bf16.gmra.mxu0 %v801
    %v1252 = vpop.f32.mrf.mxu0
    %v1253 = vadd.f32 %v871, %v1252
    %v1254 = vpop.f32.mrf.mxu0
    %1255 = vdwg.mxu0
    %1256 = vmatpush.bf16.msra.mxu0 %v1136
    %1257 = vmatpush.bf16.msra.mxu0 %v1128
    %1258 = vmatpush.bf16.msra.mxu0 %v1120
    %1259 = vmatpush.bf16.msra.mxu0 %v1112
    %1260 = vmatpush.bf16.msra.mxu0 %v1104
    %1261 = vmatpush.bf16.msra.mxu0 %v1096
    %1262 = vmatpush.bf16.msra.mxu0 %v1088
    %1263 = vmatpush.bf16.msra.mxu0 %v1080
    %1264 = vmatmul.bf16.gmra.mxu0 %v801
    %v1265 = vpop.f32.mrf.mxu0
    %v1266 = vadd.f32 %v872, %v1265
    %v1267 = vpop.f32.mrf.mxu0
    %1268 = vdwg.mxu0
    %1269 = vmatpush.bf16.msra.mxu0 %v1137
    %1270 = vmatpush.bf16.msra.mxu0 %v1129
    %1271 = vmatpush.bf16.msra.mxu0 %v1121
    %1272 = vmatpush.bf16.msra.mxu0 %v1113
    %1273 = vmatpush.bf16.msra.mxu0 %v1105
    %1274 = vmatpush.bf16.msra.mxu0 %v1097
    %1275 = vmatpush.bf16.msra.mxu0 %v1089
    %1276 = vmatpush.bf16.msra.mxu0 %v1081
    %1277 = vmatmul.bf16.gmra.mxu0 %v801
    %v1278 = vpop.f32.mrf.mxu0
    %v1279 = vadd.f32 %v873, %v1278
    %v1280 = vpop.f32.mrf.mxu0
    %1281 = vdwg.mxu0
    %1282 = vmatpush.bf16.msra.mxu0 %v1138
    %1283 = vmatpush.bf16.msra.mxu0 %v1130
    %1284 = vmatpush.bf16.msra.mxu0 %v1122
    %1285 = vmatpush.bf16.msra.mxu0 %v1114
    %1286 = vmatpush.bf16.msra.mxu0 %v1106
    %1287 = vmatpush.bf16.msra.mxu0 %v1098
    %1288 = vmatpush.bf16.msra.mxu0 %v1090
    %1289 = vmatpush.bf16.msra.mxu0 %v1082
    %1290 = vmatmul.bf16.gmra.mxu0 %v801
    %v1291 = vpop.f32.mrf.mxu0
    %v1292 = vadd.f32 %v874, %v1291
    %v1293 = vpop.f32.mrf.mxu0
    %1294 = vdwg.mxu0
    %1295 = vmatpush.bf16.msra.mxu0 %v1139
    %1296 = vmatpush.bf16.msra.mxu0 %v1131
    %1297 = vmatpush.bf16.msra.mxu0 %v1123
    %1298 = vmatpush.bf16.msra.mxu0 %v1115
    %1299 = vmatpush.bf16.msra.mxu0 %v1107
    %1300 = vmatpush.bf16.msra.mxu0 %v1099
    %1301 = vmatpush.bf16.msra.mxu0 %v1091
    %1302 = vmatpush.bf16.msra.mxu0 %v1083
    %1303 = vmatmul.bf16.gmra.mxu0 %v801
    %v1304 = vpop.f32.mrf.mxu0
    %v1305 = vadd.f32 %v875, %v1304
    %v1306 = vpop.f32.mrf.mxu0
    %1307 = vdwg.mxu0
    %v1308 = vmax.f32 %v1214, 0.0
    %v1309 = vmax.f32 %v1227, 0.0
    %v1310 = vmax.f32 %v1240, 0.0
    %v1311 = vmax.f32 %v1253, 0.0
    %v1312 = vmax.f32 %v1266, 0.0
    %v1313 = vmax.f32 %v1279, 0.0
    %v1314 = vmax.f32 %v1292, 0.0
    %v1315 = vmax.f32 %v1305, 0.0
    %v1316 = vpack.c.bf16 %v1308, %v1308
    %v1317 = vpack.c.bf16 %v1309, %v1309
    %v1318 = vpack.c.bf16 %v1310, %v1310
    %v1319 = vpack.c.bf16 %v1311, %v1311
    %v1320 = vpack.c.bf16 %v1312, %v1312
    %v1321 = vpack.c.bf16 %v1313, %v1313
    %v1322 = vpack.c.bf16 %v1314, %v1314
    %v1323 = vpack.c.bf16 %v1315, %v1315
    %v1324 = vld [vmem:[#allocation10] sm:$0xff]
    %v1325 = vld [vmem:[#allocation10 + $0x8] sm:$0xff]
    %v1326 = vld [vmem:[#allocation10 + $0x10] sm:$0xff]
    %v1327 = vld [vmem:[#allocation10 + $0x18] sm:$0xff]
    %v1328 = vld [vmem:[#allocation10 + $0x20] sm:$0xff]
    %v1329 = vld [vmem:[#allocation10 + $0x28] sm:$0xff]
    %v1330 = vld [vmem:[#allocation10 + $0x30] sm:$0xff]
    %v1331 = vld [vmem:[#allocation10 + $0x38] sm:$0xff]
    %v1332 = vld [vmem:[#allocation10 + $0x40] sm:$0xff]
    %v1333 = vld [vmem:[#allocation10 + $0x48] sm:$0xff]
    %v1334 = vld [vmem:[#allocation10 + $0x50] sm:$0xff]
    %v1335 = vld [vmem:[#allocation10 + $0x58] sm:$0xff]
    %v1336 = vld [vmem:[#allocation10 + $0x60] sm:$0xff]
    %v1337 = vld [vmem:[#allocation10 + $0x68] sm:$0xff]
    %v1338 = vld [vmem:[#allocation10 + $0x70] sm:$0xff]
    %v1339 = vld [vmem:[#allocation10 + $0x78] sm:$0xff]
    %v1340 = vld [vmem:[#allocation10 + $0x80] sm:$0xff]
    %v1341 = vld [vmem:[#allocation10 + $0x88] sm:$0xff]
    %v1342 = vld [vmem:[#allocation10 + $0x90] sm:$0xff]
    %v1343 = vld [vmem:[#allocation10 + $0x98] sm:$0xff]
    %v1344 = vld [vmem:[#allocation10 + $0xa0] sm:$0xff]
    %v1345 = vld [vmem:[#allocation10 + $0xa8] sm:$0xff]
    %v1346 = vld [vmem:[#allocation10 + $0xb0] sm:$0xff]
    %v1347 = vld [vmem:[#allocation10 + $0xb8] sm:$0xff]
    %v1348 = vld [vmem:[#allocation10 + $0xc0] sm:$0xff]
    %v1349 = vld [vmem:[#allocation10 + $0xc8] sm:$0xff]
    %v1350 = vld [vmem:[#allocation10 + $0xd0] sm:$0xff]
    %v1351 = vld [vmem:[#allocation10 + $0xd8] sm:$0xff]
    %v1352 = vld [vmem:[#allocation10 + $0xe0] sm:$0xff]
    %v1353 = vld [vmem:[#allocation10 + $0xe8] sm:$0xff]
    %v1354 = vld [vmem:[#allocation10 + $0xf0] sm:$0xff]
    %v1355 = vld [vmem:[#allocation10 + $0xf8] sm:$0xff]
    %v1356 = vld [vmem:[#allocation10 + $0x100] sm:$0xff]
    %v1357 = vld [vmem:[#allocation10 + $0x108] sm:$0xff]
    %v1358 = vld [vmem:[#allocation10 + $0x110] sm:$0xff]
    %v1359 = vld [vmem:[#allocation10 + $0x118] sm:$0xff]
    %v1360 = vld [vmem:[#allocation10 + $0x120] sm:$0xff]
    %v1361 = vld [vmem:[#allocation10 + $0x128] sm:$0xff]
    %v1362 = vld [vmem:[#allocation10 + $0x130] sm:$0xff]
    %v1363 = vld [vmem:[#allocation10 + $0x138] sm:$0xff]
    %v1364 = vld [vmem:[#allocation10 + $0x140] sm:$0xff]
    %v1365 = vld [vmem:[#allocation10 + $0x148] sm:$0xff]
    %v1366 = vld [vmem:[#allocation10 + $0x150] sm:$0xff]
    %v1367 = vld [vmem:[#allocation10 + $0x158] sm:$0xff]
    %v1368 = vld [vmem:[#allocation10 + $0x160] sm:$0xff]
    %v1369 = vld [vmem:[#allocation10 + $0x168] sm:$0xff]
    %v1370 = vld [vmem:[#allocation10 + $0x170] sm:$0xff]
    %v1371 = vld [vmem:[#allocation10 + $0x178] sm:$0xff]
    %v1372 = vld [vmem:[#allocation10 + $0x180] sm:$0xff]
    %v1373 = vld [vmem:[#allocation10 + $0x188] sm:$0xff]
    %v1374 = vld [vmem:[#allocation10 + $0x190] sm:$0xff]
    %v1375 = vld [vmem:[#allocation10 + $0x198] sm:$0xff]
    %v1376 = vld [vmem:[#allocation10 + $0x1a0] sm:$0xff]
    %v1377 = vld [vmem:[#allocation10 + $0x1a8] sm:$0xff]
    %v1378 = vld [vmem:[#allocation10 + $0x1b0] sm:$0xff]
    %v1379 = vld [vmem:[#allocation10 + $0x1b8] sm:$0xff]
    %v1380 = vld [vmem:[#allocation10 + $0x1c0] sm:$0xff]
    %v1381 = vld [vmem:[#allocation10 + $0x1c8] sm:$0xff]
    %v1382 = vld [vmem:[#allocation10 + $0x1d0] sm:$0xff]
    %v1383 = vld [vmem:[#allocation10 + $0x1d8] sm:$0xff]
    %v1384 = vld [vmem:[#allocation10 + $0x1e0] sm:$0xff]
    %v1385 = vld [vmem:[#allocation10 + $0x1e8] sm:$0xff]
    %v1386 = vld [vmem:[#allocation10 + $0x1f0] sm:$0xff]
    %v1387 = vld [vmem:[#allocation10 + $0x1f8] sm:$0xff]
    %v1388 = vld [vmem:[#allocation10 + $0x200] sm:$0xff]
    %v1389 = vld [vmem:[#allocation10 + $0x208] sm:$0xff]
    %v1390 = vld [vmem:[#allocation10 + $0x210] sm:$0xff]
    %v1391 = vld [vmem:[#allocation10 + $0x218] sm:$0xff]
    %v1392 = vld [vmem:[#allocation10 + $0x220] sm:$0xff]
    %v1393 = vld [vmem:[#allocation10 + $0x228] sm:$0xff]
    %v1394 = vld [vmem:[#allocation10 + $0x230] sm:$0xff]
    %v1395 = vld [vmem:[#allocation10 + $0x238] sm:$0xff]
    %v1396 = vld [vmem:[#allocation10 + $0x240] sm:$0xff]
    %v1397 = vld [vmem:[#allocation10 + $0x248] sm:$0xff]
    %v1398 = vld [vmem:[#allocation10 + $0x250] sm:$0xff]
    %v1399 = vld [vmem:[#allocation10 + $0x258] sm:$0xff]
    %v1400 = vld [vmem:[#allocation10 + $0x260] sm:$0xff]
    %v1401 = vld [vmem:[#allocation10 + $0x268] sm:$0xff]
    %v1402 = vld [vmem:[#allocation10 + $0x270] sm:$0xff]
    %v1403 = vld [vmem:[#allocation10 + $0x278] sm:$0xff]
    %v1404 = vld [vmem:[#allocation10 + $0x280] sm:$0xff]
    %v1405 = vld [vmem:[#allocation10 + $0x288] sm:$0xff]
    %v1406 = vld [vmem:[#allocation10 + $0x290] sm:$0xff]
    %v1407 = vld [vmem:[#allocation10 + $0x298] sm:$0xff]
    %v1408 = vld [vmem:[#allocation10 + $0x2a0] sm:$0xff]
    %v1409 = vld [vmem:[#allocation10 + $0x2a8] sm:$0xff]
    %v1410 = vld [vmem:[#allocation10 + $0x2b0] sm:$0xff]
    %v1411 = vld [vmem:[#allocation10 + $0x2b8] sm:$0xff]
    %v1412 = vld [vmem:[#allocation10 + $0x2c0] sm:$0xff]
    %v1413 = vld [vmem:[#allocation10 + $0x2c8] sm:$0xff]
    %v1414 = vld [vmem:[#allocation10 + $0x2d0] sm:$0xff]
    %v1415 = vld [vmem:[#allocation10 + $0x2d8] sm:$0xff]
    %v1416 = vld [vmem:[#allocation10 + $0x2e0] sm:$0xff]
    %v1417 = vld [vmem:[#allocation10 + $0x2e8] sm:$0xff]
    %v1418 = vld [vmem:[#allocation10 + $0x2f0] sm:$0xff]
    %v1419 = vld [vmem:[#allocation10 + $0x2f8] sm:$0xff]
    %v1420 = vld [vmem:[#allocation10 + $0x300] sm:$0xff]
    %v1421 = vld [vmem:[#allocation10 + $0x308] sm:$0xff]
    %v1422 = vld [vmem:[#allocation10 + $0x310] sm:$0xff]
    %v1423 = vld [vmem:[#allocation10 + $0x318] sm:$0xff]
    %v1424 = vld [vmem:[#allocation10 + $0x320] sm:$0xff]
    %v1425 = vld [vmem:[#allocation10 + $0x328] sm:$0xff]
    %v1426 = vld [vmem:[#allocation10 + $0x330] sm:$0xff]
    %v1427 = vld [vmem:[#allocation10 + $0x338] sm:$0xff]
    %v1428 = vld [vmem:[#allocation10 + $0x340] sm:$0xff]
    %v1429 = vld [vmem:[#allocation10 + $0x348] sm:$0xff]
    %v1430 = vld [vmem:[#allocation10 + $0x350] sm:$0xff]
    %v1431 = vld [vmem:[#allocation10 + $0x358] sm:$0xff]
    %v1432 = vld [vmem:[#allocation10 + $0x360] sm:$0xff]
    %v1433 = vld [vmem:[#allocation10 + $0x368] sm:$0xff]
    %v1434 = vld [vmem:[#allocation10 + $0x370] sm:$0xff]
    %v1435 = vld [vmem:[#allocation10 + $0x378] sm:$0xff]
    %v1436 = vld [vmem:[#allocation10 + $0x380] sm:$0xff]
    %v1437 = vld [vmem:[#allocation10 + $0x388] sm:$0xff]
    %v1438 = vld [vmem:[#allocation10 + $0x390] sm:$0xff]
    %v1439 = vld [vmem:[#allocation10 + $0x398] sm:$0xff]
    %v1440 = vld [vmem:[#allocation10 + $0x3a0] sm:$0xff]
    %v1441 = vld [vmem:[#allocation10 + $0x3a8] sm:$0xff]
    %v1442 = vld [vmem:[#allocation10 + $0x3b0] sm:$0xff]
    %v1443 = vld [vmem:[#allocation10 + $0x3b8] sm:$0xff]
    %v1444 = vld [vmem:[#allocation10 + $0x3c0] sm:$0xff]
    %v1445 = vld [vmem:[#allocation10 + $0x3c8] sm:$0xff]
    %v1446 = vld [vmem:[#allocation10 + $0x3d0] sm:$0xff]
    %v1447 = vld [vmem:[#allocation10 + $0x3d8] sm:$0xff]
    %v1448 = vld [vmem:[#allocation10 + $0x3e0] sm:$0xff]
    %v1449 = vld [vmem:[#allocation10 + $0x3e8] sm:$0xff]
    %v1450 = vld [vmem:[#allocation10 + $0x3f0] sm:$0xff]
    %v1451 = vld [vmem:[#allocation10 + $0x3f8] sm:$0xff]
    %v1452 = vld [vmem:[#allocation10 + $0x400] sm:$0xff]
    %v1453 = vld [vmem:[#allocation10 + $0x408] sm:$0xff]
    %v1454 = vld [vmem:[#allocation10 + $0x410] sm:$0xff]
    %v1455 = vld [vmem:[#allocation10 + $0x418] sm:$0xff]
    %v1456 = vld [vmem:[#allocation10 + $0x420] sm:$0xff]
    %v1457 = vld [vmem:[#allocation10 + $0x428] sm:$0xff]
    %v1458 = vld [vmem:[#allocation10 + $0x430] sm:$0xff]
    %v1459 = vld [vmem:[#allocation10 + $0x438] sm:$0xff]
    %v1460 = vld [vmem:[#allocation10 + $0x440] sm:$0xff]
    %v1461 = vld [vmem:[#allocation10 + $0x448] sm:$0xff]
    %v1462 = vld [vmem:[#allocation10 + $0x450] sm:$0xff]
    %v1463 = vld [vmem:[#allocation10 + $0x458] sm:$0xff]
    %v1464 = vld [vmem:[#allocation10 + $0x460] sm:$0xff]
    %v1465 = vld [vmem:[#allocation10 + $0x468] sm:$0xff]
    %v1466 = vld [vmem:[#allocation10 + $0x470] sm:$0xff]
    %v1467 = vld [vmem:[#allocation10 + $0x478] sm:$0xff]
    %v1468 = vld [vmem:[#allocation10 + $0x480] sm:$0xff]
    %v1469 = vld [vmem:[#allocation10 + $0x488] sm:$0xff]
    %v1470 = vld [vmem:[#allocation10 + $0x490] sm:$0xff]
    %v1471 = vld [vmem:[#allocation10 + $0x498] sm:$0xff]
    %v1472 = vld [vmem:[#allocation10 + $0x4a0] sm:$0xff]
    %v1473 = vld [vmem:[#allocation10 + $0x4a8] sm:$0xff]
    %v1474 = vld [vmem:[#allocation10 + $0x4b0] sm:$0xff]
    %v1475 = vld [vmem:[#allocation10 + $0x4b8] sm:$0xff]
    %v1476 = vld [vmem:[#allocation10 + $0x4c0] sm:$0xff]
    %v1477 = vld [vmem:[#allocation10 + $0x4c8] sm:$0xff]
    %v1478 = vld [vmem:[#allocation10 + $0x4d0] sm:$0xff]
    %v1479 = vld [vmem:[#allocation10 + $0x4d8] sm:$0xff]
    %v1480 = vld [vmem:[#allocation10 + $0x4e0] sm:$0xff]
    %v1481 = vld [vmem:[#allocation10 + $0x4e8] sm:$0xff]
    %v1482 = vld [vmem:[#allocation10 + $0x4f0] sm:$0xff]
    %v1483 = vld [vmem:[#allocation10 + $0x4f8] sm:$0xff]
    %v1484 = vld [vmem:[#allocation10 + $0x500] sm:$0xff]
    %v1485 = vld [vmem:[#allocation10 + $0x508] sm:$0xff]
    %v1486 = vld [vmem:[#allocation10 + $0x510] sm:$0xff]
    %v1487 = vld [vmem:[#allocation10 + $0x518] sm:$0xff]
    %v1488 = vld [vmem:[#allocation10 + $0x520] sm:$0xff]
    %v1489 = vld [vmem:[#allocation10 + $0x528] sm:$0xff]
    %v1490 = vld [vmem:[#allocation10 + $0x530] sm:$0xff]
    %v1491 = vld [vmem:[#allocation10 + $0x538] sm:$0xff]
    %v1492 = vld [vmem:[#allocation10 + $0x540] sm:$0xff]
    %v1493 = vld [vmem:[#allocation10 + $0x548] sm:$0xff]
    %v1494 = vld [vmem:[#allocation10 + $0x550] sm:$0xff]
    %v1495 = vld [vmem:[#allocation10 + $0x558] sm:$0xff]
    %v1496 = vld [vmem:[#allocation10 + $0x560] sm:$0xff]
    %v1497 = vld [vmem:[#allocation10 + $0x568] sm:$0xff]
    %v1498 = vld [vmem:[#allocation10 + $0x570] sm:$0xff]
    %v1499 = vld [vmem:[#allocation10 + $0x578] sm:$0xff]
    %v1500 = vld [vmem:[#allocation10 + $0x580] sm:$0xff]
    %v1501 = vld [vmem:[#allocation10 + $0x588] sm:$0xff]
    %v1502 = vld [vmem:[#allocation10 + $0x590] sm:$0xff]
    %v1503 = vld [vmem:[#allocation10 + $0x598] sm:$0xff]
    %v1504 = vld [vmem:[#allocation10 + $0x5a0] sm:$0xff]
    %v1505 = vld [vmem:[#allocation10 + $0x5a8] sm:$0xff]
    %v1506 = vld [vmem:[#allocation10 + $0x5b0] sm:$0xff]
    %v1507 = vld [vmem:[#allocation10 + $0x5b8] sm:$0xff]
    %v1508 = vld [vmem:[#allocation10 + $0x5c0] sm:$0xff]
    %v1509 = vld [vmem:[#allocation10 + $0x5c8] sm:$0xff]
    %v1510 = vld [vmem:[#allocation10 + $0x5d0] sm:$0xff]
    %v1511 = vld [vmem:[#allocation10 + $0x5d8] sm:$0xff]
    %v1512 = vld [vmem:[#allocation10 + $0x5e0] sm:$0xff]
    %v1513 = vld [vmem:[#allocation10 + $0x5e8] sm:$0xff]
    %v1514 = vld [vmem:[#allocation10 + $0x5f0] sm:$0xff]
    %v1515 = vld [vmem:[#allocation10 + $0x5f8] sm:$0xff]
    %v1516 = vld [vmem:[#allocation10 + $0x600] sm:$0xff]
    %v1517 = vld [vmem:[#allocation10 + $0x608] sm:$0xff]
    %v1518 = vld [vmem:[#allocation10 + $0x610] sm:$0xff]
    %v1519 = vld [vmem:[#allocation10 + $0x618] sm:$0xff]
    %v1520 = vld [vmem:[#allocation10 + $0x620] sm:$0xff]
    %v1521 = vld [vmem:[#allocation10 + $0x628] sm:$0xff]
    %v1522 = vld [vmem:[#allocation10 + $0x630] sm:$0xff]
    %v1523 = vld [vmem:[#allocation10 + $0x638] sm:$0xff]
    %v1524 = vld [vmem:[#allocation10 + $0x640] sm:$0xff]
    %v1525 = vld [vmem:[#allocation10 + $0x648] sm:$0xff]
    %v1526 = vld [vmem:[#allocation10 + $0x650] sm:$0xff]
    %v1527 = vld [vmem:[#allocation10 + $0x658] sm:$0xff]
    %v1528 = vld [vmem:[#allocation10 + $0x660] sm:$0xff]
    %v1529 = vld [vmem:[#allocation10 + $0x668] sm:$0xff]
    %v1530 = vld [vmem:[#allocation10 + $0x670] sm:$0xff]
    %v1531 = vld [vmem:[#allocation10 + $0x678] sm:$0xff]
    %v1532 = vld [vmem:[#allocation10 + $0x680] sm:$0xff]
    %v1533 = vld [vmem:[#allocation10 + $0x688] sm:$0xff]
    %v1534 = vld [vmem:[#allocation10 + $0x690] sm:$0xff]
    %v1535 = vld [vmem:[#allocation10 + $0x698] sm:$0xff]
    %v1536 = vld [vmem:[#allocation10 + $0x6a0] sm:$0xff]
    %v1537 = vld [vmem:[#allocation10 + $0x6a8] sm:$0xff]
    %v1538 = vld [vmem:[#allocation10 + $0x6b0] sm:$0xff]
    %v1539 = vld [vmem:[#allocation10 + $0x6b8] sm:$0xff]
    %v1540 = vld [vmem:[#allocation10 + $0x6c0] sm:$0xff]
    %v1541 = vld [vmem:[#allocation10 + $0x6c8] sm:$0xff]
    %v1542 = vld [vmem:[#allocation10 + $0x6d0] sm:$0xff]
    %v1543 = vld [vmem:[#allocation10 + $0x6d8] sm:$0xff]
    %v1544 = vld [vmem:[#allocation10 + $0x6e0] sm:$0xff]
    %v1545 = vld [vmem:[#allocation10 + $0x6e8] sm:$0xff]
    %v1546 = vld [vmem:[#allocation10 + $0x6f0] sm:$0xff]
    %v1547 = vld [vmem:[#allocation10 + $0x6f8] sm:$0xff]
    %v1548 = vld [vmem:[#allocation10 + $0x700] sm:$0xff]
    %v1549 = vld [vmem:[#allocation10 + $0x708] sm:$0xff]
    %v1550 = vld [vmem:[#allocation10 + $0x710] sm:$0xff]
    %v1551 = vld [vmem:[#allocation10 + $0x718] sm:$0xff]
    %v1552 = vld [vmem:[#allocation10 + $0x720] sm:$0xff]
    %v1553 = vld [vmem:[#allocation10 + $0x728] sm:$0xff]
    %v1554 = vld [vmem:[#allocation10 + $0x730] sm:$0xff]
    %v1555 = vld [vmem:[#allocation10 + $0x738] sm:$0xff]
    %v1556 = vld [vmem:[#allocation10 + $0x740] sm:$0xff]
    %v1557 = vld [vmem:[#allocation10 + $0x748] sm:$0xff]
    %v1558 = vld [vmem:[#allocation10 + $0x750] sm:$0xff]
    %v1559 = vld [vmem:[#allocation10 + $0x758] sm:$0xff]
    %v1560 = vld [vmem:[#allocation10 + $0x760] sm:$0xff]
    %v1561 = vld [vmem:[#allocation10 + $0x768] sm:$0xff]
    %v1562 = vld [vmem:[#allocation10 + $0x770] sm:$0xff]
    %v1563 = vld [vmem:[#allocation10 + $0x778] sm:$0xff]
    %v1564 = vld [vmem:[#allocation10 + $0x780] sm:$0xff]
    %v1565 = vld [vmem:[#allocation10 + $0x788] sm:$0xff]
    %v1566 = vld [vmem:[#allocation10 + $0x790] sm:$0xff]
    %v1567 = vld [vmem:[#allocation10 + $0x798] sm:$0xff]
    %v1568 = vld [vmem:[#allocation10 + $0x7a0] sm:$0xff]
    %v1569 = vld [vmem:[#allocation10 + $0x7a8] sm:$0xff]
    %v1570 = vld [vmem:[#allocation10 + $0x7b0] sm:$0xff]
    %v1571 = vld [vmem:[#allocation10 + $0x7b8] sm:$0xff]
    %v1572 = vld [vmem:[#allocation10 + $0x7c0] sm:$0xff]
    %v1573 = vld [vmem:[#allocation10 + $0x7c8] sm:$0xff]
    %v1574 = vld [vmem:[#allocation10 + $0x7d0] sm:$0xff]
    %v1575 = vld [vmem:[#allocation10 + $0x7d8] sm:$0xff]
    %v1576 = vld [vmem:[#allocation10 + $0x7e0] sm:$0xff]
    %v1577 = vld [vmem:[#allocation10 + $0x7e8] sm:$0xff]
    %v1578 = vld [vmem:[#allocation10 + $0x7f0] sm:$0xff]
    %v1579 = vld [vmem:[#allocation10 + $0x7f8] sm:$0xff]
    %v1580 = vld [vmem:[#allocation10 + $0x800] sm:$0xff]
    %v1581 = vld [vmem:[#allocation10 + $0x808] sm:$0xff]
    %v1582 = vld [vmem:[#allocation10 + $0x810] sm:$0xff]
    %v1583 = vld [vmem:[#allocation10 + $0x818] sm:$0xff]
    %v1584 = vld [vmem:[#allocation10 + $0x820] sm:$0xff]
    %v1585 = vld [vmem:[#allocation10 + $0x828] sm:$0xff]
    %v1586 = vld [vmem:[#allocation10 + $0x830] sm:$0xff]
    %v1587 = vld [vmem:[#allocation10 + $0x838] sm:$0xff]
    %v1588 = vld [vmem:[#allocation10 + $0x840] sm:$0xff]
    %v1589 = vld [vmem:[#allocation10 + $0x848] sm:$0xff]
    %v1590 = vld [vmem:[#allocation10 + $0x850] sm:$0xff]
    %v1591 = vld [vmem:[#allocation10 + $0x858] sm:$0xff]
    %v1592 = vld [vmem:[#allocation10 + $0x860] sm:$0xff]
    %v1593 = vld [vmem:[#allocation10 + $0x868] sm:$0xff]
    %v1594 = vld [vmem:[#allocation10 + $0x870] sm:$0xff]
    %v1595 = vld [vmem:[#allocation10 + $0x878] sm:$0xff]
    %v1596 = vld [vmem:[#allocation10 + $0x880] sm:$0xff]
    %v1597 = vld [vmem:[#allocation10 + $0x888] sm:$0xff]
    %v1598 = vld [vmem:[#allocation10 + $0x890] sm:$0xff]
    %v1599 = vld [vmem:[#allocation10 + $0x898] sm:$0xff]
    %v1600 = vld [vmem:[#allocation10 + $0x8a0] sm:$0xff]
    %v1601 = vld [vmem:[#allocation10 + $0x8a8] sm:$0xff]
    %v1602 = vld [vmem:[#allocation10 + $0x8b0] sm:$0xff]
    %v1603 = vld [vmem:[#allocation10 + $0x8b8] sm:$0xff]
    %v1604 = vld [vmem:[#allocation10 + $0x8c0] sm:$0xff]
    %v1605 = vld [vmem:[#allocation10 + $0x8c8] sm:$0xff]
    %v1606 = vld [vmem:[#allocation10 + $0x8d0] sm:$0xff]
    %v1607 = vld [vmem:[#allocation10 + $0x8d8] sm:$0xff]
    %v1608 = vld [vmem:[#allocation10 + $0x8e0] sm:$0xff]
    %v1609 = vld [vmem:[#allocation10 + $0x8e8] sm:$0xff]
    %v1610 = vld [vmem:[#allocation10 + $0x8f0] sm:$0xff]
    %v1611 = vld [vmem:[#allocation10 + $0x8f8] sm:$0xff]
    %v1612 = vld [vmem:[#allocation10 + $0x900] sm:$0xff]
    %v1613 = vld [vmem:[#allocation10 + $0x908] sm:$0xff]
    %v1614 = vld [vmem:[#allocation10 + $0x910] sm:$0xff]
    %v1615 = vld [vmem:[#allocation10 + $0x918] sm:$0xff]
    %v1616 = vld [vmem:[#allocation10 + $0x920] sm:$0xff]
    %v1617 = vld [vmem:[#allocation10 + $0x928] sm:$0xff]
    %v1618 = vld [vmem:[#allocation10 + $0x930] sm:$0xff]
    %v1619 = vld [vmem:[#allocation10 + $0x938] sm:$0xff]
    %v1620 = vld [vmem:[#allocation10 + $0x940] sm:$0xff]
    %v1621 = vld [vmem:[#allocation10 + $0x948] sm:$0xff]
    %v1622 = vld [vmem:[#allocation10 + $0x950] sm:$0xff]
    %v1623 = vld [vmem:[#allocation10 + $0x958] sm:$0xff]
    %v1624 = vld [vmem:[#allocation10 + $0x960] sm:$0xff]
    %v1625 = vld [vmem:[#allocation10 + $0x968] sm:$0xff]
    %v1626 = vld [vmem:[#allocation10 + $0x970] sm:$0xff]
    %v1627 = vld [vmem:[#allocation10 + $0x978] sm:$0xff]
    %v1628 = vld [vmem:[#allocation10 + $0x980] sm:$0xff]
    %v1629 = vld [vmem:[#allocation10 + $0x988] sm:$0xff]
    %v1630 = vld [vmem:[#allocation10 + $0x990] sm:$0xff]
    %v1631 = vld [vmem:[#allocation10 + $0x998] sm:$0xff]
    %v1632 = vld [vmem:[#allocation10 + $0x9a0] sm:$0xff]
    %v1633 = vld [vmem:[#allocation10 + $0x9a8] sm:$0xff]
    %v1634 = vld [vmem:[#allocation10 + $0x9b0] sm:$0xff]
    %v1635 = vld [vmem:[#allocation10 + $0x9b8] sm:$0xff]
    %v1636 = vld [vmem:[#allocation10 + $0x9c0] sm:$0xff]
    %v1637 = vld [vmem:[#allocation10 + $0x9c8] sm:$0xff]
    %v1638 = vld [vmem:[#allocation10 + $0x9d0] sm:$0xff]
    %v1639 = vld [vmem:[#allocation10 + $0x9d8] sm:$0xff]
    %v1640 = vld [vmem:[#allocation10 + $0x9e0] sm:$0xff]
    %v1641 = vld [vmem:[#allocation10 + $0x9e8] sm:$0xff]
    %v1642 = vld [vmem:[#allocation10 + $0x9f0] sm:$0xff]
    %v1643 = vld [vmem:[#allocation10 + $0x9f8] sm:$0xff]
    %v1644 = vld [vmem:[#allocation10 + $0xa00] sm:$0xff]
    %v1645 = vld [vmem:[#allocation10 + $0xa08] sm:$0xff]
    %v1646 = vld [vmem:[#allocation10 + $0xa10] sm:$0xff]
    %v1647 = vld [vmem:[#allocation10 + $0xa18] sm:$0xff]
    %v1648 = vld [vmem:[#allocation10 + $0xa20] sm:$0xff]
    %v1649 = vld [vmem:[#allocation10 + $0xa28] sm:$0xff]
    %v1650 = vld [vmem:[#allocation10 + $0xa30] sm:$0xff]
    %v1651 = vld [vmem:[#allocation10 + $0xa38] sm:$0xff]
    %v1652 = vld [vmem:[#allocation10 + $0xa40] sm:$0xff]
    %v1653 = vld [vmem:[#allocation10 + $0xa48] sm:$0xff]
    %v1654 = vld [vmem:[#allocation10 + $0xa50] sm:$0xff]
    %v1655 = vld [vmem:[#allocation10 + $0xa58] sm:$0xff]
    %v1656 = vld [vmem:[#allocation10 + $0xa60] sm:$0xff]
    %v1657 = vld [vmem:[#allocation10 + $0xa68] sm:$0xff]
    %v1658 = vld [vmem:[#allocation10 + $0xa70] sm:$0xff]
    %v1659 = vld [vmem:[#allocation10 + $0xa78] sm:$0xff]
    %v1660 = vld [vmem:[#allocation10 + $0xa80] sm:$0xff]
    %v1661 = vld [vmem:[#allocation10 + $0xa88] sm:$0xff]
    %v1662 = vld [vmem:[#allocation10 + $0xa90] sm:$0xff]
    %v1663 = vld [vmem:[#allocation10 + $0xa98] sm:$0xff]
    %v1664 = vld [vmem:[#allocation10 + $0xaa0] sm:$0xff]
    %v1665 = vld [vmem:[#allocation10 + $0xaa8] sm:$0xff]
    %v1666 = vld [vmem:[#allocation10 + $0xab0] sm:$0xff]
    %v1667 = vld [vmem:[#allocation10 + $0xab8] sm:$0xff]
    %v1668 = vld [vmem:[#allocation10 + $0xac0] sm:$0xff]
    %v1669 = vld [vmem:[#allocation10 + $0xac8] sm:$0xff]
    %v1670 = vld [vmem:[#allocation10 + $0xad0] sm:$0xff]
    %v1671 = vld [vmem:[#allocation10 + $0xad8] sm:$0xff]
    %v1672 = vld [vmem:[#allocation10 + $0xae0] sm:$0xff]
    %v1673 = vld [vmem:[#allocation10 + $0xae8] sm:$0xff]
    %v1674 = vld [vmem:[#allocation10 + $0xaf0] sm:$0xff]
    %v1675 = vld [vmem:[#allocation10 + $0xaf8] sm:$0xff]
    %v1676 = vld [vmem:[#allocation10 + $0xb00] sm:$0xff]
    %v1677 = vld [vmem:[#allocation10 + $0xb08] sm:$0xff]
    %v1678 = vld [vmem:[#allocation10 + $0xb10] sm:$0xff]
    %v1679 = vld [vmem:[#allocation10 + $0xb18] sm:$0xff]
    %v1680 = vld [vmem:[#allocation10 + $0xb20] sm:$0xff]
    %v1681 = vld [vmem:[#allocation10 + $0xb28] sm:$0xff]
    %v1682 = vld [vmem:[#allocation10 + $0xb30] sm:$0xff]
    %v1683 = vld [vmem:[#allocation10 + $0xb38] sm:$0xff]
    %v1684 = vld [vmem:[#allocation10 + $0xb40] sm:$0xff]
    %v1685 = vld [vmem:[#allocation10 + $0xb48] sm:$0xff]
    %v1686 = vld [vmem:[#allocation10 + $0xb50] sm:$0xff]
    %v1687 = vld [vmem:[#allocation10 + $0xb58] sm:$0xff]
    %v1688 = vld [vmem:[#allocation10 + $0xb60] sm:$0xff]
    %v1689 = vld [vmem:[#allocation10 + $0xb68] sm:$0xff]
    %v1690 = vld [vmem:[#allocation10 + $0xb70] sm:$0xff]
    %v1691 = vld [vmem:[#allocation10 + $0xb78] sm:$0xff]
    %v1692 = vld [vmem:[#allocation10 + $0xb80] sm:$0xff]
    %v1693 = vld [vmem:[#allocation10 + $0xb88] sm:$0xff]
    %v1694 = vld [vmem:[#allocation10 + $0xb90] sm:$0xff]
    %v1695 = vld [vmem:[#allocation10 + $0xb98] sm:$0xff]
    %v1696 = vld [vmem:[#allocation10 + $0xba0] sm:$0xff]
    %v1697 = vld [vmem:[#allocation10 + $0xba8] sm:$0xff]
    %v1698 = vld [vmem:[#allocation10 + $0xbb0] sm:$0xff]
    %v1699 = vld [vmem:[#allocation10 + $0xbb8] sm:$0xff]
    %v1700 = vld [vmem:[#allocation10 + $0xbc0] sm:$0xff]
    %v1701 = vld [vmem:[#allocation10 + $0xbc8] sm:$0xff]
    %v1702 = vld [vmem:[#allocation10 + $0xbd0] sm:$0xff]
    %v1703 = vld [vmem:[#allocation10 + $0xbd8] sm:$0xff]
    %v1704 = vld [vmem:[#allocation10 + $0xbe0] sm:$0xff]
    %v1705 = vld [vmem:[#allocation10 + $0xbe8] sm:$0xff]
    %v1706 = vld [vmem:[#allocation10 + $0xbf0] sm:$0xff]
    %v1707 = vld [vmem:[#allocation10 + $0xbf8] sm:$0xff]
    %v1708 = vld [vmem:[#allocation10 + $0xc00] sm:$0xff]
    %v1709 = vld [vmem:[#allocation10 + $0xc08] sm:$0xff]
    %v1710 = vld [vmem:[#allocation10 + $0xc10] sm:$0xff]
    %v1711 = vld [vmem:[#allocation10 + $0xc18] sm:$0xff]
    %v1712 = vld [vmem:[#allocation10 + $0xc20] sm:$0xff]
    %v1713 = vld [vmem:[#allocation10 + $0xc28] sm:$0xff]
    %v1714 = vld [vmem:[#allocation10 + $0xc30] sm:$0xff]
    %v1715 = vld [vmem:[#allocation10 + $0xc38] sm:$0xff]
    %v1716 = vld [vmem:[#allocation10 + $0xc40] sm:$0xff]
    %v1717 = vld [vmem:[#allocation10 + $0xc48] sm:$0xff]
    %v1718 = vld [vmem:[#allocation10 + $0xc50] sm:$0xff]
    %v1719 = vld [vmem:[#allocation10 + $0xc58] sm:$0xff]
    %v1720 = vld [vmem:[#allocation10 + $0xc60] sm:$0xff]
    %v1721 = vld [vmem:[#allocation10 + $0xc68] sm:$0xff]
    %v1722 = vld [vmem:[#allocation10 + $0xc70] sm:$0xff]
    %v1723 = vld [vmem:[#allocation10 + $0xc78] sm:$0xff]
    %v1724 = vld [vmem:[#allocation10 + $0xc80] sm:$0xff]
    %v1725 = vld [vmem:[#allocation10 + $0xc88] sm:$0xff]
    %v1726 = vld [vmem:[#allocation10 + $0xc90] sm:$0xff]
    %v1727 = vld [vmem:[#allocation10 + $0xc98] sm:$0xff]
    %v1728 = vld [vmem:[#allocation10 + $0xca0] sm:$0xff]
    %v1729 = vld [vmem:[#allocation10 + $0xca8] sm:$0xff]
    %v1730 = vld [vmem:[#allocation10 + $0xcb0] sm:$0xff]
    %v1731 = vld [vmem:[#allocation10 + $0xcb8] sm:$0xff]
    %v1732 = vld [vmem:[#allocation10 + $0xcc0] sm:$0xff]
    %v1733 = vld [vmem:[#allocation10 + $0xcc8] sm:$0xff]
    %v1734 = vld [vmem:[#allocation10 + $0xcd0] sm:$0xff]
    %v1735 = vld [vmem:[#allocation10 + $0xcd8] sm:$0xff]
    %v1736 = vld [vmem:[#allocation10 + $0xce0] sm:$0xff]
    %v1737 = vld [vmem:[#allocation10 + $0xce8] sm:$0xff]
    %v1738 = vld [vmem:[#allocation10 + $0xcf0] sm:$0xff]
    %v1739 = vld [vmem:[#allocation10 + $0xcf8] sm:$0xff]
    %v1740 = vld [vmem:[#allocation10 + $0xd00] sm:$0xff]
    %v1741 = vld [vmem:[#allocation10 + $0xd08] sm:$0xff]
    %v1742 = vld [vmem:[#allocation10 + $0xd10] sm:$0xff]
    %v1743 = vld [vmem:[#allocation10 + $0xd18] sm:$0xff]
    %v1744 = vld [vmem:[#allocation10 + $0xd20] sm:$0xff]
    %v1745 = vld [vmem:[#allocation10 + $0xd28] sm:$0xff]
    %v1746 = vld [vmem:[#allocation10 + $0xd30] sm:$0xff]
    %v1747 = vld [vmem:[#allocation10 + $0xd38] sm:$0xff]
    %v1748 = vld [vmem:[#allocation10 + $0xd40] sm:$0xff]
    %v1749 = vld [vmem:[#allocation10 + $0xd48] sm:$0xff]
    %v1750 = vld [vmem:[#allocation10 + $0xd50] sm:$0xff]
    %v1751 = vld [vmem:[#allocation10 + $0xd58] sm:$0xff]
    %v1752 = vld [vmem:[#allocation10 + $0xd60] sm:$0xff]
    %v1753 = vld [vmem:[#allocation10 + $0xd68] sm:$0xff]
    %v1754 = vld [vmem:[#allocation10 + $0xd70] sm:$0xff]
    %v1755 = vld [vmem:[#allocation10 + $0xd78] sm:$0xff]
    %v1756 = vld [vmem:[#allocation10 + $0xd80] sm:$0xff]
    %v1757 = vld [vmem:[#allocation10 + $0xd88] sm:$0xff]
    %v1758 = vld [vmem:[#allocation10 + $0xd90] sm:$0xff]
    %v1759 = vld [vmem:[#allocation10 + $0xd98] sm:$0xff]
    %v1760 = vld [vmem:[#allocation10 + $0xda0] sm:$0xff]
    %v1761 = vld [vmem:[#allocation10 + $0xda8] sm:$0xff]
    %v1762 = vld [vmem:[#allocation10 + $0xdb0] sm:$0xff]
    %v1763 = vld [vmem:[#allocation10 + $0xdb8] sm:$0xff]
    %v1764 = vld [vmem:[#allocation10 + $0xdc0] sm:$0xff]
    %v1765 = vld [vmem:[#allocation10 + $0xdc8] sm:$0xff]
    %v1766 = vld [vmem:[#allocation10 + $0xdd0] sm:$0xff]
    %v1767 = vld [vmem:[#allocation10 + $0xdd8] sm:$0xff]
    %v1768 = vld [vmem:[#allocation10 + $0xde0] sm:$0xff]
    %v1769 = vld [vmem:[#allocation10 + $0xde8] sm:$0xff]
    %v1770 = vld [vmem:[#allocation10 + $0xdf0] sm:$0xff]
    %v1771 = vld [vmem:[#allocation10 + $0xdf8] sm:$0xff]
    %v1772 = vld [vmem:[#allocation10 + $0xe00] sm:$0xff]
    %v1773 = vld [vmem:[#allocation10 + $0xe08] sm:$0xff]
    %v1774 = vld [vmem:[#allocation10 + $0xe10] sm:$0xff]
    %v1775 = vld [vmem:[#allocation10 + $0xe18] sm:$0xff]
    %v1776 = vld [vmem:[#allocation10 + $0xe20] sm:$0xff]
    %v1777 = vld [vmem:[#allocation10 + $0xe28] sm:$0xff]
    %v1778 = vld [vmem:[#allocation10 + $0xe30] sm:$0xff]
    %v1779 = vld [vmem:[#allocation10 + $0xe38] sm:$0xff]
    %v1780 = vld [vmem:[#allocation10 + $0xe40] sm:$0xff]
    %v1781 = vld [vmem:[#allocation10 + $0xe48] sm:$0xff]
    %v1782 = vld [vmem:[#allocation10 + $0xe50] sm:$0xff]
    %v1783 = vld [vmem:[#allocation10 + $0xe58] sm:$0xff]
    %v1784 = vld [vmem:[#allocation10 + $0xe60] sm:$0xff]
    %v1785 = vld [vmem:[#allocation10 + $0xe68] sm:$0xff]
    %v1786 = vld [vmem:[#allocation10 + $0xe70] sm:$0xff]
    %v1787 = vld [vmem:[#allocation10 + $0xe78] sm:$0xff]
    %v1788 = vld [vmem:[#allocation10 + $0xe80] sm:$0xff]
    %v1789 = vld [vmem:[#allocation10 + $0xe88] sm:$0xff]
    %v1790 = vld [vmem:[#allocation10 + $0xe90] sm:$0xff]
    %v1791 = vld [vmem:[#allocation10 + $0xe98] sm:$0xff]
    %v1792 = vld [vmem:[#allocation10 + $0xea0] sm:$0xff]
    %v1793 = vld [vmem:[#allocation10 + $0xea8] sm:$0xff]
    %v1794 = vld [vmem:[#allocation10 + $0xeb0] sm:$0xff]
    %v1795 = vld [vmem:[#allocation10 + $0xeb8] sm:$0xff]
    %v1796 = vld [vmem:[#allocation10 + $0xec0] sm:$0xff]
    %v1797 = vld [vmem:[#allocation10 + $0xec8] sm:$0xff]
    %v1798 = vld [vmem:[#allocation10 + $0xed0] sm:$0xff]
    %v1799 = vld [vmem:[#allocation10 + $0xed8] sm:$0xff]
    %v1800 = vld [vmem:[#allocation10 + $0xee0] sm:$0xff]
    %v1801 = vld [vmem:[#allocation10 + $0xee8] sm:$0xff]
    %v1802 = vld [vmem:[#allocation10 + $0xef0] sm:$0xff]
    %v1803 = vld [vmem:[#allocation10 + $0xef8] sm:$0xff]
    %v1804 = vld [vmem:[#allocation10 + $0xf00] sm:$0xff]
    %v1805 = vld [vmem:[#allocation10 + $0xf08] sm:$0xff]
    %v1806 = vld [vmem:[#allocation10 + $0xf10] sm:$0xff]
    %v1807 = vld [vmem:[#allocation10 + $0xf18] sm:$0xff]
    %v1808 = vld [vmem:[#allocation10 + $0xf20] sm:$0xff]
    %v1809 = vld [vmem:[#allocation10 + $0xf28] sm:$0xff]
    %v1810 = vld [vmem:[#allocation10 + $0xf30] sm:$0xff]
    %v1811 = vld [vmem:[#allocation10 + $0xf38] sm:$0xff]
    %v1812 = vld [vmem:[#allocation10 + $0xf40] sm:$0xff]
    %v1813 = vld [vmem:[#allocation10 + $0xf48] sm:$0xff]
    %v1814 = vld [vmem:[#allocation10 + $0xf50] sm:$0xff]
    %v1815 = vld [vmem:[#allocation10 + $0xf58] sm:$0xff]
    %v1816 = vld [vmem:[#allocation10 + $0xf60] sm:$0xff]
    %v1817 = vld [vmem:[#allocation10 + $0xf68] sm:$0xff]
    %v1818 = vld [vmem:[#allocation10 + $0xf70] sm:$0xff]
    %v1819 = vld [vmem:[#allocation10 + $0xf78] sm:$0xff]
    %v1820 = vld [vmem:[#allocation10 + $0xf80] sm:$0xff]
    %v1821 = vld [vmem:[#allocation10 + $0xf88] sm:$0xff]
    %v1822 = vld [vmem:[#allocation10 + $0xf90] sm:$0xff]
    %v1823 = vld [vmem:[#allocation10 + $0xf98] sm:$0xff]
    %v1824 = vld [vmem:[#allocation10 + $0xfa0] sm:$0xff]
    %v1825 = vld [vmem:[#allocation10 + $0xfa8] sm:$0xff]
    %v1826 = vld [vmem:[#allocation10 + $0xfb0] sm:$0xff]
    %v1827 = vld [vmem:[#allocation10 + $0xfb8] sm:$0xff]
    %v1828 = vld [vmem:[#allocation10 + $0xfc0] sm:$0xff]
    %v1829 = vld [vmem:[#allocation10 + $0xfc8] sm:$0xff]
    %v1830 = vld [vmem:[#allocation10 + $0xfd0] sm:$0xff]
    %v1831 = vld [vmem:[#allocation10 + $0xfd8] sm:$0xff]
    %v1832 = vld [vmem:[#allocation10 + $0xfe0] sm:$0xff]
    %v1833 = vld [vmem:[#allocation10 + $0xfe8] sm:$0xff]
    %v1834 = vld [vmem:[#allocation10 + $0xff0] sm:$0xff]
    %v1835 = vld [vmem:[#allocation10 + $0xff8] sm:$0xff]
    %v1836 = vld [vmem:[#allocation11] sm:$0xff]
    %v1838 = vperm.slane %v1836, 0
    %v1839 = vperm.slane %v1836, 1
    %v1840 = vperm.slane %v1836, 2
    %v1841 = vperm.slane %v1836, 3
    %v1842 = vperm.slane %v1836, 4
    %v1843 = vperm.slane %v1836, 5
    %v1844 = vperm.slane %v1836, 6
    %v1845 = vperm.slane %v1836, 7
    %v2366 = vunpack.c.l.b16 %v1324
    %v2367 = vunpack.c.h.b16 %v1324
    %v2368 = vunpack.c.l.b16 %v1325
    %v2369 = vunpack.c.h.b16 %v1325
    %v2370 = vunpack.c.l.b16 %v1326
    %v2371 = vunpack.c.h.b16 %v1326
    %v2372 = vunpack.c.l.b16 %v1327
    %v2373 = vunpack.c.h.b16 %v1327
    %v2374 = vunpack.c.l.b16 %v1328
    %v2375 = vunpack.c.h.b16 %v1328
    %v2376 = vunpack.c.l.b16 %v1329
    %v2377 = vunpack.c.h.b16 %v1329
    %v2378 = vunpack.c.l.b16 %v1330
    %v2379 = vunpack.c.h.b16 %v1330
    %v2380 = vunpack.c.l.b16 %v1331
    %v2381 = vunpack.c.h.b16 %v1331
    %v2382 = vunpack.c.l.b16 %v1332
    %v2383 = vunpack.c.h.b16 %v1332
    %v2384 = vunpack.c.l.b16 %v1333
    %v2385 = vunpack.c.h.b16 %v1333
    %v2386 = vunpack.c.l.b16 %v1334
    %v2387 = vunpack.c.h.b16 %v1334
    %v2388 = vunpack.c.l.b16 %v1335
    %v2389 = vunpack.c.h.b16 %v1335
    %v2390 = vunpack.c.l.b16 %v1336
    %v2391 = vunpack.c.h.b16 %v1336
    %v2392 = vunpack.c.l.b16 %v1337
    %v2393 = vunpack.c.h.b16 %v1337
    %v2394 = vunpack.c.l.b16 %v1338
    %v2395 = vunpack.c.h.b16 %v1338
    %v2396 = vunpack.c.l.b16 %v1339
    %v2397 = vunpack.c.h.b16 %v1339
    %v2398 = vunpack.c.l.b16 %v1340
    %v2399 = vunpack.c.h.b16 %v1340
    %v2400 = vunpack.c.l.b16 %v1341
    %v2401 = vunpack.c.h.b16 %v1341
    %v2402 = vunpack.c.l.b16 %v1342
    %v2403 = vunpack.c.h.b16 %v1342
    %v2404 = vunpack.c.l.b16 %v1343
    %v2405 = vunpack.c.h.b16 %v1343
    %v2406 = vunpack.c.l.b16 %v1344
    %v2407 = vunpack.c.h.b16 %v1344
    %v2408 = vunpack.c.l.b16 %v1345
    %v2409 = vunpack.c.h.b16 %v1345
    %v2410 = vunpack.c.l.b16 %v1346
    %v2411 = vunpack.c.h.b16 %v1346
    %v2412 = vunpack.c.l.b16 %v1347
    %v2413 = vunpack.c.h.b16 %v1347
    %v2414 = vunpack.c.l.b16 %v1348
    %v2415 = vunpack.c.h.b16 %v1348
    %v2416 = vunpack.c.l.b16 %v1349
    %v2417 = vunpack.c.h.b16 %v1349
    %v2418 = vunpack.c.l.b16 %v1350
    %v2419 = vunpack.c.h.b16 %v1350
    %v2420 = vunpack.c.l.b16 %v1351
    %v2421 = vunpack.c.h.b16 %v1351
    %v2422 = vunpack.c.l.b16 %v1352
    %v2423 = vunpack.c.h.b16 %v1352
    %v2424 = vunpack.c.l.b16 %v1353
    %v2425 = vunpack.c.h.b16 %v1353
    %v2426 = vunpack.c.l.b16 %v1354
    %v2427 = vunpack.c.h.b16 %v1354
    %v2428 = vunpack.c.l.b16 %v1355
    %v2429 = vunpack.c.h.b16 %v1355
    %v2430 = vunpack.c.l.b16 %v1356
    %v2431 = vunpack.c.h.b16 %v1356
    %v2432 = vunpack.c.l.b16 %v1357
    %v2433 = vunpack.c.h.b16 %v1357
    %v2434 = vunpack.c.l.b16 %v1358
    %v2435 = vunpack.c.h.b16 %v1358
    %v2436 = vunpack.c.l.b16 %v1359
    %v2437 = vunpack.c.h.b16 %v1359
    %v2438 = vunpack.c.l.b16 %v1360
    %v2439 = vunpack.c.h.b16 %v1360
    %v2440 = vunpack.c.l.b16 %v1361
    %v2441 = vunpack.c.h.b16 %v1361
    %v2442 = vunpack.c.l.b16 %v1362
    %v2443 = vunpack.c.h.b16 %v1362
    %v2444 = vunpack.c.l.b16 %v1363
    %v2445 = vunpack.c.h.b16 %v1363
    %v2446 = vunpack.c.l.b16 %v1364
    %v2447 = vunpack.c.h.b16 %v1364
    %v2448 = vunpack.c.l.b16 %v1365
    %v2449 = vunpack.c.h.b16 %v1365
    %v2450 = vunpack.c.l.b16 %v1366
    %v2451 = vunpack.c.h.b16 %v1366
    %v2452 = vunpack.c.l.b16 %v1367
    %v2453 = vunpack.c.h.b16 %v1367
    %v2454 = vunpack.c.l.b16 %v1368
    %v2455 = vunpack.c.h.b16 %v1368
    %v2456 = vunpack.c.l.b16 %v1369
    %v2457 = vunpack.c.h.b16 %v1369
    %v2458 = vunpack.c.l.b16 %v1370
    %v2459 = vunpack.c.h.b16 %v1370
    %v2460 = vunpack.c.l.b16 %v1371
    %v2461 = vunpack.c.h.b16 %v1371
    %v2462 = vunpack.c.l.b16 %v1372
    %v2463 = vunpack.c.h.b16 %v1372
    %v2464 = vunpack.c.l.b16 %v1373
    %v2465 = vunpack.c.h.b16 %v1373
    %v2466 = vunpack.c.l.b16 %v1374
    %v2467 = vunpack.c.h.b16 %v1374
    %v2468 = vunpack.c.l.b16 %v1375
    %v2469 = vunpack.c.h.b16 %v1375
    %v2470 = vunpack.c.l.b16 %v1376
    %v2471 = vunpack.c.h.b16 %v1376
    %v2472 = vunpack.c.l.b16 %v1377
    %v2473 = vunpack.c.h.b16 %v1377
    %v2474 = vunpack.c.l.b16 %v1378
    %v2475 = vunpack.c.h.b16 %v1378
    %v2476 = vunpack.c.l.b16 %v1379
    %v2477 = vunpack.c.h.b16 %v1379
    %v2478 = vunpack.c.l.b16 %v1380
    %v2479 = vunpack.c.h.b16 %v1380
    %v2480 = vunpack.c.l.b16 %v1381
    %v2481 = vunpack.c.h.b16 %v1381
    %v2482 = vunpack.c.l.b16 %v1382
    %v2483 = vunpack.c.h.b16 %v1382
    %v2484 = vunpack.c.l.b16 %v1383
    %v2485 = vunpack.c.h.b16 %v1383
    %v2486 = vunpack.c.l.b16 %v1384
    %v2487 = vunpack.c.h.b16 %v1384
    %v2488 = vunpack.c.l.b16 %v1385
    %v2489 = vunpack.c.h.b16 %v1385
    %v2490 = vunpack.c.l.b16 %v1386
    %v2491 = vunpack.c.h.b16 %v1386
    %v2492 = vunpack.c.l.b16 %v1387
    %v2493 = vunpack.c.h.b16 %v1387
    %v2494 = vunpack.c.l.b16 %v1388
    %v2495 = vunpack.c.h.b16 %v1388
    %v2496 = vunpack.c.l.b16 %v1389
    %v2497 = vunpack.c.h.b16 %v1389
    %v2498 = vunpack.c.l.b16 %v1390
    %v2499 = vunpack.c.h.b16 %v1390
    %v2500 = vunpack.c.l.b16 %v1391
    %v2501 = vunpack.c.h.b16 %v1391
    %v2502 = vunpack.c.l.b16 %v1392
    %v2503 = vunpack.c.h.b16 %v1392
    %v2504 = vunpack.c.l.b16 %v1393
    %v2505 = vunpack.c.h.b16 %v1393
    %v2506 = vunpack.c.l.b16 %v1394
    %v2507 = vunpack.c.h.b16 %v1394
    %v2508 = vunpack.c.l.b16 %v1395
    %v2509 = vunpack.c.h.b16 %v1395
    %v2510 = vunpack.c.l.b16 %v1396
    %v2511 = vunpack.c.h.b16 %v1396
    %v2512 = vunpack.c.l.b16 %v1397
    %v2513 = vunpack.c.h.b16 %v1397
    %v2514 = vunpack.c.l.b16 %v1398
    %v2515 = vunpack.c.h.b16 %v1398
    %v2516 = vunpack.c.l.b16 %v1399
    %v2517 = vunpack.c.h.b16 %v1399
    %v2518 = vunpack.c.l.b16 %v1400
    %v2519 = vunpack.c.h.b16 %v1400
    %v2520 = vunpack.c.l.b16 %v1401
    %v2521 = vunpack.c.h.b16 %v1401
    %v2522 = vunpack.c.l.b16 %v1402
    %v2523 = vunpack.c.h.b16 %v1402
    %v2524 = vunpack.c.l.b16 %v1403
    %v2525 = vunpack.c.h.b16 %v1403
    %v2526 = vunpack.c.l.b16 %v1404
    %v2527 = vunpack.c.h.b16 %v1404
    %v2528 = vunpack.c.l.b16 %v1405
    %v2529 = vunpack.c.h.b16 %v1405
    %v2530 = vunpack.c.l.b16 %v1406
    %v2531 = vunpack.c.h.b16 %v1406
    %v2532 = vunpack.c.l.b16 %v1407
    %v2533 = vunpack.c.h.b16 %v1407
    %v2534 = vunpack.c.l.b16 %v1408
    %v2535 = vunpack.c.h.b16 %v1408
    %v2536 = vunpack.c.l.b16 %v1409
    %v2537 = vunpack.c.h.b16 %v1409
    %v2538 = vunpack.c.l.b16 %v1410
    %v2539 = vunpack.c.h.b16 %v1410
    %v2540 = vunpack.c.l.b16 %v1411
    %v2541 = vunpack.c.h.b16 %v1411
    %v2542 = vunpack.c.l.b16 %v1412
    %v2543 = vunpack.c.h.b16 %v1412
    %v2544 = vunpack.c.l.b16 %v1413
    %v2545 = vunpack.c.h.b16 %v1413
    %v2546 = vunpack.c.l.b16 %v1414
    %v2547 = vunpack.c.h.b16 %v1414
    %v2548 = vunpack.c.l.b16 %v1415
    %v2549 = vunpack.c.h.b16 %v1415
    %v2550 = vunpack.c.l.b16 %v1416
    %v2551 = vunpack.c.h.b16 %v1416
    %v2552 = vunpack.c.l.b16 %v1417
    %v2553 = vunpack.c.h.b16 %v1417
    %v2554 = vunpack.c.l.b16 %v1418
    %v2555 = vunpack.c.h.b16 %v1418
    %v2556 = vunpack.c.l.b16 %v1419
    %v2557 = vunpack.c.h.b16 %v1419
    %v2558 = vunpack.c.l.b16 %v1420
    %v2559 = vunpack.c.h.b16 %v1420
    %v2560 = vunpack.c.l.b16 %v1421
    %v2561 = vunpack.c.h.b16 %v1421
    %v2562 = vunpack.c.l.b16 %v1422
    %v2563 = vunpack.c.h.b16 %v1422
    %v2564 = vunpack.c.l.b16 %v1423
    %v2565 = vunpack.c.h.b16 %v1423
    %v2566 = vunpack.c.l.b16 %v1424
    %v2567 = vunpack.c.h.b16 %v1424
    %v2568 = vunpack.c.l.b16 %v1425
    %v2569 = vunpack.c.h.b16 %v1425
    %v2570 = vunpack.c.l.b16 %v1426
    %v2571 = vunpack.c.h.b16 %v1426
    %v2572 = vunpack.c.l.b16 %v1427
    %v2573 = vunpack.c.h.b16 %v1427
    %v2574 = vunpack.c.l.b16 %v1428
    %v2575 = vunpack.c.h.b16 %v1428
    %v2576 = vunpack.c.l.b16 %v1429
    %v2577 = vunpack.c.h.b16 %v1429
    %v2578 = vunpack.c.l.b16 %v1430
    %v2579 = vunpack.c.h.b16 %v1430
    %v2580 = vunpack.c.l.b16 %v1431
    %v2581 = vunpack.c.h.b16 %v1431
    %v2582 = vunpack.c.l.b16 %v1432
    %v2583 = vunpack.c.h.b16 %v1432
    %v2584 = vunpack.c.l.b16 %v1433
    %v2585 = vunpack.c.h.b16 %v1433
    %v2586 = vunpack.c.l.b16 %v1434
    %v2587 = vunpack.c.h.b16 %v1434
    %v2588 = vunpack.c.l.b16 %v1435
    %v2589 = vunpack.c.h.b16 %v1435
    %v2590 = vunpack.c.l.b16 %v1436
    %v2591 = vunpack.c.h.b16 %v1436
    %v2592 = vunpack.c.l.b16 %v1437
    %v2593 = vunpack.c.h.b16 %v1437
    %v2594 = vunpack.c.l.b16 %v1438
    %v2595 = vunpack.c.h.b16 %v1438
    %v2596 = vunpack.c.l.b16 %v1439
    %v2597 = vunpack.c.h.b16 %v1439
    %v2598 = vunpack.c.l.b16 %v1440
    %v2599 = vunpack.c.h.b16 %v1440
    %v2600 = vunpack.c.l.b16 %v1441
    %v2601 = vunpack.c.h.b16 %v1441
    %v2602 = vunpack.c.l.b16 %v1442
    %v2603 = vunpack.c.h.b16 %v1442
    %v2604 = vunpack.c.l.b16 %v1443
    %v2605 = vunpack.c.h.b16 %v1443
    %v2606 = vunpack.c.l.b16 %v1444
    %v2607 = vunpack.c.h.b16 %v1444
    %v2608 = vunpack.c.l.b16 %v1445
    %v2609 = vunpack.c.h.b16 %v1445
    %v2610 = vunpack.c.l.b16 %v1446
    %v2611 = vunpack.c.h.b16 %v1446
    %v2612 = vunpack.c.l.b16 %v1447
    %v2613 = vunpack.c.h.b16 %v1447
    %v2614 = vunpack.c.l.b16 %v1448
    %v2615 = vunpack.c.h.b16 %v1448
    %v2616 = vunpack.c.l.b16 %v1449
    %v2617 = vunpack.c.h.b16 %v1449
    %v2618 = vunpack.c.l.b16 %v1450
    %v2619 = vunpack.c.h.b16 %v1450
    %v2620 = vunpack.c.l.b16 %v1451
    %v2621 = vunpack.c.h.b16 %v1451
    %v2622 = vunpack.c.l.b16 %v1452
    %v2623 = vunpack.c.h.b16 %v1452
    %v2624 = vunpack.c.l.b16 %v1453
    %v2625 = vunpack.c.h.b16 %v1453
    %v2626 = vunpack.c.l.b16 %v1454
    %v2627 = vunpack.c.h.b16 %v1454
    %v2628 = vunpack.c.l.b16 %v1455
    %v2629 = vunpack.c.h.b16 %v1455
    %v2630 = vunpack.c.l.b16 %v1456
    %v2631 = vunpack.c.h.b16 %v1456
    %v2632 = vunpack.c.l.b16 %v1457
    %v2633 = vunpack.c.h.b16 %v1457
    %v2634 = vunpack.c.l.b16 %v1458
    %v2635 = vunpack.c.h.b16 %v1458
    %v2636 = vunpack.c.l.b16 %v1459
    %v2637 = vunpack.c.h.b16 %v1459
    %v2638 = vunpack.c.l.b16 %v1460
    %v2639 = vunpack.c.h.b16 %v1460
    %v2640 = vunpack.c.l.b16 %v1461
    %v2641 = vunpack.c.h.b16 %v1461
    %v2642 = vunpack.c.l.b16 %v1462
    %v2643 = vunpack.c.h.b16 %v1462
    %v2644 = vunpack.c.l.b16 %v1463
    %v2645 = vunpack.c.h.b16 %v1463
    %v2646 = vunpack.c.l.b16 %v1464
    %v2647 = vunpack.c.h.b16 %v1464
    %v2648 = vunpack.c.l.b16 %v1465
    %v2649 = vunpack.c.h.b16 %v1465
    %v2650 = vunpack.c.l.b16 %v1466
    %v2651 = vunpack.c.h.b16 %v1466
    %v2652 = vunpack.c.l.b16 %v1467
    %v2653 = vunpack.c.h.b16 %v1467
    %v2654 = vunpack.c.l.b16 %v1468
    %v2655 = vunpack.c.h.b16 %v1468
    %v2656 = vunpack.c.l.b16 %v1469
    %v2657 = vunpack.c.h.b16 %v1469
    %v2658 = vunpack.c.l.b16 %v1470
    %v2659 = vunpack.c.h.b16 %v1470
    %v2660 = vunpack.c.l.b16 %v1471
    %v2661 = vunpack.c.h.b16 %v1471
    %v2662 = vunpack.c.l.b16 %v1472
    %v2663 = vunpack.c.h.b16 %v1472
    %v2664 = vunpack.c.l.b16 %v1473
    %v2665 = vunpack.c.h.b16 %v1473
    %v2666 = vunpack.c.l.b16 %v1474
    %v2667 = vunpack.c.h.b16 %v1474
    %v2668 = vunpack.c.l.b16 %v1475
    %v2669 = vunpack.c.h.b16 %v1475
    %v2670 = vunpack.c.l.b16 %v1476
    %v2671 = vunpack.c.h.b16 %v1476
    %v2672 = vunpack.c.l.b16 %v1477
    %v2673 = vunpack.c.h.b16 %v1477
    %v2674 = vunpack.c.l.b16 %v1478
    %v2675 = vunpack.c.h.b16 %v1478
    %v2676 = vunpack.c.l.b16 %v1479
    %v2677 = vunpack.c.h.b16 %v1479
    %v2678 = vunpack.c.l.b16 %v1480
    %v2679 = vunpack.c.h.b16 %v1480
    %v2680 = vunpack.c.l.b16 %v1481
    %v2681 = vunpack.c.h.b16 %v1481
    %v2682 = vunpack.c.l.b16 %v1482
    %v2683 = vunpack.c.h.b16 %v1482
    %v2684 = vunpack.c.l.b16 %v1483
    %v2685 = vunpack.c.h.b16 %v1483
    %v2686 = vunpack.c.l.b16 %v1484
    %v2687 = vunpack.c.h.b16 %v1484
    %v2688 = vunpack.c.l.b16 %v1485
    %v2689 = vunpack.c.h.b16 %v1485
    %v2690 = vunpack.c.l.b16 %v1486
    %v2691 = vunpack.c.h.b16 %v1486
    %v2692 = vunpack.c.l.b16 %v1487
    %v2693 = vunpack.c.h.b16 %v1487
    %v2694 = vunpack.c.l.b16 %v1488
    %v2695 = vunpack.c.h.b16 %v1488
    %v2696 = vunpack.c.l.b16 %v1489
    %v2697 = vunpack.c.h.b16 %v1489
    %v2698 = vunpack.c.l.b16 %v1490
    %v2699 = vunpack.c.h.b16 %v1490
    %v2700 = vunpack.c.l.b16 %v1491
    %v2701 = vunpack.c.h.b16 %v1491
    %v2702 = vunpack.c.l.b16 %v1492
    %v2703 = vunpack.c.h.b16 %v1492
    %v2704 = vunpack.c.l.b16 %v1493
    %v2705 = vunpack.c.h.b16 %v1493
    %v2706 = vunpack.c.l.b16 %v1494
    %v2707 = vunpack.c.h.b16 %v1494
    %v2708 = vunpack.c.l.b16 %v1495
    %v2709 = vunpack.c.h.b16 %v1495
    %v2710 = vunpack.c.l.b16 %v1496
    %v2711 = vunpack.c.h.b16 %v1496
    %v2712 = vunpack.c.l.b16 %v1497
    %v2713 = vunpack.c.h.b16 %v1497
    %v2714 = vunpack.c.l.b16 %v1498
    %v2715 = vunpack.c.h.b16 %v1498
    %v2716 = vunpack.c.l.b16 %v1499
    %v2717 = vunpack.c.h.b16 %v1499
    %v2718 = vunpack.c.l.b16 %v1500
    %v2719 = vunpack.c.h.b16 %v1500
    %v2720 = vunpack.c.l.b16 %v1501
    %v2721 = vunpack.c.h.b16 %v1501
    %v2722 = vunpack.c.l.b16 %v1502
    %v2723 = vunpack.c.h.b16 %v1502
    %v2724 = vunpack.c.l.b16 %v1503
    %v2725 = vunpack.c.h.b16 %v1503
    %v2726 = vunpack.c.l.b16 %v1504
    %v2727 = vunpack.c.h.b16 %v1504
    %v2728 = vunpack.c.l.b16 %v1505
    %v2729 = vunpack.c.h.b16 %v1505
    %v2730 = vunpack.c.l.b16 %v1506
    %v2731 = vunpack.c.h.b16 %v1506
    %v2732 = vunpack.c.l.b16 %v1507
    %v2733 = vunpack.c.h.b16 %v1507
    %v2734 = vunpack.c.l.b16 %v1508
    %v2735 = vunpack.c.h.b16 %v1508
    %v2736 = vunpack.c.l.b16 %v1509
    %v2737 = vunpack.c.h.b16 %v1509
    %v2738 = vunpack.c.l.b16 %v1510
    %v2739 = vunpack.c.h.b16 %v1510
    %v2740 = vunpack.c.l.b16 %v1511
    %v2741 = vunpack.c.h.b16 %v1511
    %v2742 = vunpack.c.l.b16 %v1512
    %v2743 = vunpack.c.h.b16 %v1512
    %v2744 = vunpack.c.l.b16 %v1513
    %v2745 = vunpack.c.h.b16 %v1513
    %v2746 = vunpack.c.l.b16 %v1514
    %v2747 = vunpack.c.h.b16 %v1514
    %v2748 = vunpack.c.l.b16 %v1515
    %v2749 = vunpack.c.h.b16 %v1515
    %v2750 = vunpack.c.l.b16 %v1516
    %v2751 = vunpack.c.h.b16 %v1516
    %v2752 = vunpack.c.l.b16 %v1517
    %v2753 = vunpack.c.h.b16 %v1517
    %v2754 = vunpack.c.l.b16 %v1518
    %v2755 = vunpack.c.h.b16 %v1518
    %v2756 = vunpack.c.l.b16 %v1519
    %v2757 = vunpack.c.h.b16 %v1519
    %v2758 = vunpack.c.l.b16 %v1520
    %v2759 = vunpack.c.h.b16 %v1520
    %v2760 = vunpack.c.l.b16 %v1521
    %v2761 = vunpack.c.h.b16 %v1521
    %v2762 = vunpack.c.l.b16 %v1522
    %v2763 = vunpack.c.h.b16 %v1522
    %v2764 = vunpack.c.l.b16 %v1523
    %v2765 = vunpack.c.h.b16 %v1523
    %v2766 = vunpack.c.l.b16 %v1524
    %v2767 = vunpack.c.h.b16 %v1524
    %v2768 = vunpack.c.l.b16 %v1525
    %v2769 = vunpack.c.h.b16 %v1525
    %v2770 = vunpack.c.l.b16 %v1526
    %v2771 = vunpack.c.h.b16 %v1526
    %v2772 = vunpack.c.l.b16 %v1527
    %v2773 = vunpack.c.h.b16 %v1527
    %v2774 = vunpack.c.l.b16 %v1528
    %v2775 = vunpack.c.h.b16 %v1528
    %v2776 = vunpack.c.l.b16 %v1529
    %v2777 = vunpack.c.h.b16 %v1529
    %v2778 = vunpack.c.l.b16 %v1530
    %v2779 = vunpack.c.h.b16 %v1530
    %v2780 = vunpack.c.l.b16 %v1531
    %v2781 = vunpack.c.h.b16 %v1531
    %v2782 = vunpack.c.l.b16 %v1532
    %v2783 = vunpack.c.h.b16 %v1532
    %v2784 = vunpack.c.l.b16 %v1533
    %v2785 = vunpack.c.h.b16 %v1533
    %v2786 = vunpack.c.l.b16 %v1534
    %v2787 = vunpack.c.h.b16 %v1534
    %v2788 = vunpack.c.l.b16 %v1535
    %v2789 = vunpack.c.h.b16 %v1535
    %v2790 = vunpack.c.l.b16 %v1536
    %v2791 = vunpack.c.h.b16 %v1536
    %v2792 = vunpack.c.l.b16 %v1537
    %v2793 = vunpack.c.h.b16 %v1537
    %v2794 = vunpack.c.l.b16 %v1538
    %v2795 = vunpack.c.h.b16 %v1538
    %v2796 = vunpack.c.l.b16 %v1539
    %v2797 = vunpack.c.h.b16 %v1539
    %v2798 = vunpack.c.l.b16 %v1540
    %v2799 = vunpack.c.h.b16 %v1540
    %v2800 = vunpack.c.l.b16 %v1541
    %v2801 = vunpack.c.h.b16 %v1541
    %v2802 = vunpack.c.l.b16 %v1542
    %v2803 = vunpack.c.h.b16 %v1542
    %v2804 = vunpack.c.l.b16 %v1543
    %v2805 = vunpack.c.h.b16 %v1543
    %v2806 = vunpack.c.l.b16 %v1544
    %v2807 = vunpack.c.h.b16 %v1544
    %v2808 = vunpack.c.l.b16 %v1545
    %v2809 = vunpack.c.h.b16 %v1545
    %v2810 = vunpack.c.l.b16 %v1546
    %v2811 = vunpack.c.h.b16 %v1546
    %v2812 = vunpack.c.l.b16 %v1547
    %v2813 = vunpack.c.h.b16 %v1547
    %v2814 = vunpack.c.l.b16 %v1548
    %v2815 = vunpack.c.h.b16 %v1548
    %v2816 = vunpack.c.l.b16 %v1549
    %v2817 = vunpack.c.h.b16 %v1549
    %v2818 = vunpack.c.l.b16 %v1550
    %v2819 = vunpack.c.h.b16 %v1550
    %v2820 = vunpack.c.l.b16 %v1551
    %v2821 = vunpack.c.h.b16 %v1551
    %v2822 = vunpack.c.l.b16 %v1552
    %v2823 = vunpack.c.h.b16 %v1552
    %v2824 = vunpack.c.l.b16 %v1553
    %v2825 = vunpack.c.h.b16 %v1553
    %v2826 = vunpack.c.l.b16 %v1554
    %v2827 = vunpack.c.h.b16 %v1554
    %v2828 = vunpack.c.l.b16 %v1555
    %v2829 = vunpack.c.h.b16 %v1555
    %v2830 = vunpack.c.l.b16 %v1556
    %v2831 = vunpack.c.h.b16 %v1556
    %v2832 = vunpack.c.l.b16 %v1557
    %v2833 = vunpack.c.h.b16 %v1557
    %v2834 = vunpack.c.l.b16 %v1558
    %v2835 = vunpack.c.h.b16 %v1558
    %v2836 = vunpack.c.l.b16 %v1559
    %v2837 = vunpack.c.h.b16 %v1559
    %v2838 = vunpack.c.l.b16 %v1560
    %v2839 = vunpack.c.h.b16 %v1560
    %v2840 = vunpack.c.l.b16 %v1561
    %v2841 = vunpack.c.h.b16 %v1561
    %v2842 = vunpack.c.l.b16 %v1562
    %v2843 = vunpack.c.h.b16 %v1562
    %v2844 = vunpack.c.l.b16 %v1563
    %v2845 = vunpack.c.h.b16 %v1563
    %v2846 = vunpack.c.l.b16 %v1564
    %v2847 = vunpack.c.h.b16 %v1564
    %v2848 = vunpack.c.l.b16 %v1565
    %v2849 = vunpack.c.h.b16 %v1565
    %v2850 = vunpack.c.l.b16 %v1566
    %v2851 = vunpack.c.h.b16 %v1566
    %v2852 = vunpack.c.l.b16 %v1567
    %v2853 = vunpack.c.h.b16 %v1567
    %v2854 = vunpack.c.l.b16 %v1568
    %v2855 = vunpack.c.h.b16 %v1568
    %v2856 = vunpack.c.l.b16 %v1569
    %v2857 = vunpack.c.h.b16 %v1569
    %v2858 = vunpack.c.l.b16 %v1570
    %v2859 = vunpack.c.h.b16 %v1570
    %v2860 = vunpack.c.l.b16 %v1571
    %v2861 = vunpack.c.h.b16 %v1571
    %v2862 = vunpack.c.l.b16 %v1572
    %v2863 = vunpack.c.h.b16 %v1572
    %v2864 = vunpack.c.l.b16 %v1573
    %v2865 = vunpack.c.h.b16 %v1573
    %v2866 = vunpack.c.l.b16 %v1574
    %v2867 = vunpack.c.h.b16 %v1574
    %v2868 = vunpack.c.l.b16 %v1575
    %v2869 = vunpack.c.h.b16 %v1575
    %v2870 = vunpack.c.l.b16 %v1576
    %v2871 = vunpack.c.h.b16 %v1576
    %v2872 = vunpack.c.l.b16 %v1577
    %v2873 = vunpack.c.h.b16 %v1577
    %v2874 = vunpack.c.l.b16 %v1578
    %v2875 = vunpack.c.h.b16 %v1578
    %v2876 = vunpack.c.l.b16 %v1579
    %v2877 = vunpack.c.h.b16 %v1579
    %v2878 = vunpack.c.l.b16 %v1580
    %v2879 = vunpack.c.h.b16 %v1580
    %v2880 = vunpack.c.l.b16 %v1581
    %v2881 = vunpack.c.h.b16 %v1581
    %v2882 = vunpack.c.l.b16 %v1582
    %v2883 = vunpack.c.h.b16 %v1582
    %v2884 = vunpack.c.l.b16 %v1583
    %v2885 = vunpack.c.h.b16 %v1583
    %v2886 = vunpack.c.l.b16 %v1584
    %v2887 = vunpack.c.h.b16 %v1584
    %v2888 = vunpack.c.l.b16 %v1585
    %v2889 = vunpack.c.h.b16 %v1585
    %v2890 = vunpack.c.l.b16 %v1586
    %v2891 = vunpack.c.h.b16 %v1586
    %v2892 = vunpack.c.l.b16 %v1587
    %v2893 = vunpack.c.h.b16 %v1587
    %v2894 = vunpack.c.l.b16 %v1588
    %v2895 = vunpack.c.h.b16 %v1588
    %v2896 = vunpack.c.l.b16 %v1589
    %v2897 = vunpack.c.h.b16 %v1589
    %v2898 = vunpack.c.l.b16 %v1590
    %v2899 = vunpack.c.h.b16 %v1590
    %v2900 = vunpack.c.l.b16 %v1591
    %v2901 = vunpack.c.h.b16 %v1591
    %v2902 = vunpack.c.l.b16 %v1592
    %v2903 = vunpack.c.h.b16 %v1592
    %v2904 = vunpack.c.l.b16 %v1593
    %v2905 = vunpack.c.h.b16 %v1593
    %v2906 = vunpack.c.l.b16 %v1594
    %v2907 = vunpack.c.h.b16 %v1594
    %v2908 = vunpack.c.l.b16 %v1595
    %v2909 = vunpack.c.h.b16 %v1595
    %v2910 = vunpack.c.l.b16 %v1596
    %v2911 = vunpack.c.h.b16 %v1596
    %v2912 = vunpack.c.l.b16 %v1597
    %v2913 = vunpack.c.h.b16 %v1597
    %v2914 = vunpack.c.l.b16 %v1598
    %v2915 = vunpack.c.h.b16 %v1598
    %v2916 = vunpack.c.l.b16 %v1599
    %v2917 = vunpack.c.h.b16 %v1599
    %v2918 = vunpack.c.l.b16 %v1600
    %v2919 = vunpack.c.h.b16 %v1600
    %v2920 = vunpack.c.l.b16 %v1601
    %v2921 = vunpack.c.h.b16 %v1601
    %v2922 = vunpack.c.l.b16 %v1602
    %v2923 = vunpack.c.h.b16 %v1602
    %v2924 = vunpack.c.l.b16 %v1603
    %v2925 = vunpack.c.h.b16 %v1603
    %v2926 = vunpack.c.l.b16 %v1604
    %v2927 = vunpack.c.h.b16 %v1604
    %v2928 = vunpack.c.l.b16 %v1605
    %v2929 = vunpack.c.h.b16 %v1605
    %v2930 = vunpack.c.l.b16 %v1606
    %v2931 = vunpack.c.h.b16 %v1606
    %v2932 = vunpack.c.l.b16 %v1607
    %v2933 = vunpack.c.h.b16 %v1607
    %v2934 = vunpack.c.l.b16 %v1608
    %v2935 = vunpack.c.h.b16 %v1608
    %v2936 = vunpack.c.l.b16 %v1609
    %v2937 = vunpack.c.h.b16 %v1609
    %v2938 = vunpack.c.l.b16 %v1610
    %v2939 = vunpack.c.h.b16 %v1610
    %v2940 = vunpack.c.l.b16 %v1611
    %v2941 = vunpack.c.h.b16 %v1611
    %v2942 = vunpack.c.l.b16 %v1612
    %v2943 = vunpack.c.h.b16 %v1612
    %v2944 = vunpack.c.l.b16 %v1613
    %v2945 = vunpack.c.h.b16 %v1613
    %v2946 = vunpack.c.l.b16 %v1614
    %v2947 = vunpack.c.h.b16 %v1614
    %v2948 = vunpack.c.l.b16 %v1615
    %v2949 = vunpack.c.h.b16 %v1615
    %v2950 = vunpack.c.l.b16 %v1616
    %v2951 = vunpack.c.h.b16 %v1616
    %v2952 = vunpack.c.l.b16 %v1617
    %v2953 = vunpack.c.h.b16 %v1617
    %v2954 = vunpack.c.l.b16 %v1618
    %v2955 = vunpack.c.h.b16 %v1618
    %v2956 = vunpack.c.l.b16 %v1619
    %v2957 = vunpack.c.h.b16 %v1619
    %v2958 = vunpack.c.l.b16 %v1620
    %v2959 = vunpack.c.h.b16 %v1620
    %v2960 = vunpack.c.l.b16 %v1621
    %v2961 = vunpack.c.h.b16 %v1621
    %v2962 = vunpack.c.l.b16 %v1622
    %v2963 = vunpack.c.h.b16 %v1622
    %v2964 = vunpack.c.l.b16 %v1623
    %v2965 = vunpack.c.h.b16 %v1623
    %v2966 = vunpack.c.l.b16 %v1624
    %v2967 = vunpack.c.h.b16 %v1624
    %v2968 = vunpack.c.l.b16 %v1625
    %v2969 = vunpack.c.h.b16 %v1625
    %v2970 = vunpack.c.l.b16 %v1626
    %v2971 = vunpack.c.h.b16 %v1626
    %v2972 = vunpack.c.l.b16 %v1627
    %v2973 = vunpack.c.h.b16 %v1627
    %v2974 = vunpack.c.l.b16 %v1628
    %v2975 = vunpack.c.h.b16 %v1628
    %v2976 = vunpack.c.l.b16 %v1629
    %v2977 = vunpack.c.h.b16 %v1629
    %v2978 = vunpack.c.l.b16 %v1630
    %v2979 = vunpack.c.h.b16 %v1630
    %v2980 = vunpack.c.l.b16 %v1631
    %v2981 = vunpack.c.h.b16 %v1631
    %v2982 = vunpack.c.l.b16 %v1632
    %v2983 = vunpack.c.h.b16 %v1632
    %v2984 = vunpack.c.l.b16 %v1633
    %v2985 = vunpack.c.h.b16 %v1633
    %v2986 = vunpack.c.l.b16 %v1634
    %v2987 = vunpack.c.h.b16 %v1634
    %v2988 = vunpack.c.l.b16 %v1635
    %v2989 = vunpack.c.h.b16 %v1635
    %v2990 = vunpack.c.l.b16 %v1636
    %v2991 = vunpack.c.h.b16 %v1636
    %v2992 = vunpack.c.l.b16 %v1637
    %v2993 = vunpack.c.h.b16 %v1637
    %v2994 = vunpack.c.l.b16 %v1638
    %v2995 = vunpack.c.h.b16 %v1638
    %v2996 = vunpack.c.l.b16 %v1639
    %v2997 = vunpack.c.h.b16 %v1639
    %v2998 = vunpack.c.l.b16 %v1640
    %v2999 = vunpack.c.h.b16 %v1640
    %v3000 = vunpack.c.l.b16 %v1641
    %v3001 = vunpack.c.h.b16 %v1641
    %v3002 = vunpack.c.l.b16 %v1642
    %v3003 = vunpack.c.h.b16 %v1642
    %v3004 = vunpack.c.l.b16 %v1643
    %v3005 = vunpack.c.h.b16 %v1643
    %v3006 = vunpack.c.l.b16 %v1644
    %v3007 = vunpack.c.h.b16 %v1644
    %v3008 = vunpack.c.l.b16 %v1645
    %v3009 = vunpack.c.h.b16 %v1645
    %v3010 = vunpack.c.l.b16 %v1646
    %v3011 = vunpack.c.h.b16 %v1646
    %v3012 = vunpack.c.l.b16 %v1647
    %v3013 = vunpack.c.h.b16 %v1647
    %v3014 = vunpack.c.l.b16 %v1648
    %v3015 = vunpack.c.h.b16 %v1648
    %v3016 = vunpack.c.l.b16 %v1649
    %v3017 = vunpack.c.h.b16 %v1649
    %v3018 = vunpack.c.l.b16 %v1650
    %v3019 = vunpack.c.h.b16 %v1650
    %v3020 = vunpack.c.l.b16 %v1651
    %v3021 = vunpack.c.h.b16 %v1651
    %v3022 = vunpack.c.l.b16 %v1652
    %v3023 = vunpack.c.h.b16 %v1652
    %v3024 = vunpack.c.l.b16 %v1653
    %v3025 = vunpack.c.h.b16 %v1653
    %v3026 = vunpack.c.l.b16 %v1654
    %v3027 = vunpack.c.h.b16 %v1654
    %v3028 = vunpack.c.l.b16 %v1655
    %v3029 = vunpack.c.h.b16 %v1655
    %v3030 = vunpack.c.l.b16 %v1656
    %v3031 = vunpack.c.h.b16 %v1656
    %v3032 = vunpack.c.l.b16 %v1657
    %v3033 = vunpack.c.h.b16 %v1657
    %v3034 = vunpack.c.l.b16 %v1658
    %v3035 = vunpack.c.h.b16 %v1658
    %v3036 = vunpack.c.l.b16 %v1659
    %v3037 = vunpack.c.h.b16 %v1659
    %v3038 = vunpack.c.l.b16 %v1660
    %v3039 = vunpack.c.h.b16 %v1660
    %v3040 = vunpack.c.l.b16 %v1661
    %v3041 = vunpack.c.h.b16 %v1661
    %v3042 = vunpack.c.l.b16 %v1662
    %v3043 = vunpack.c.h.b16 %v1662
    %v3044 = vunpack.c.l.b16 %v1663
    %v3045 = vunpack.c.h.b16 %v1663
    %v3046 = vunpack.c.l.b16 %v1664
    %v3047 = vunpack.c.h.b16 %v1664
    %v3048 = vunpack.c.l.b16 %v1665
    %v3049 = vunpack.c.h.b16 %v1665
    %v3050 = vunpack.c.l.b16 %v1666
    %v3051 = vunpack.c.h.b16 %v1666
    %v3052 = vunpack.c.l.b16 %v1667
    %v3053 = vunpack.c.h.b16 %v1667
    %v3054 = vunpack.c.l.b16 %v1668
    %v3055 = vunpack.c.h.b16 %v1668
    %v3056 = vunpack.c.l.b16 %v1669
    %v3057 = vunpack.c.h.b16 %v1669
    %v3058 = vunpack.c.l.b16 %v1670
    %v3059 = vunpack.c.h.b16 %v1670
    %v3060 = vunpack.c.l.b16 %v1671
    %v3061 = vunpack.c.h.b16 %v1671
    %v3062 = vunpack.c.l.b16 %v1672
    %v3063 = vunpack.c.h.b16 %v1672
    %v3064 = vunpack.c.l.b16 %v1673
    %v3065 = vunpack.c.h.b16 %v1673
    %v3066 = vunpack.c.l.b16 %v1674
    %v3067 = vunpack.c.h.b16 %v1674
    %v3068 = vunpack.c.l.b16 %v1675
    %v3069 = vunpack.c.h.b16 %v1675
    %v3070 = vunpack.c.l.b16 %v1676
    %v3071 = vunpack.c.h.b16 %v1676
    %v3072 = vunpack.c.l.b16 %v1677
    %v3073 = vunpack.c.h.b16 %v1677
    %v3074 = vunpack.c.l.b16 %v1678
    %v3075 = vunpack.c.h.b16 %v1678
    %v3076 = vunpack.c.l.b16 %v1679
    %v3077 = vunpack.c.h.b16 %v1679
    %v3078 = vunpack.c.l.b16 %v1680
    %v3079 = vunpack.c.h.b16 %v1680
    %v3080 = vunpack.c.l.b16 %v1681
    %v3081 = vunpack.c.h.b16 %v1681
    %v3082 = vunpack.c.l.b16 %v1682
    %v3083 = vunpack.c.h.b16 %v1682
    %v3084 = vunpack.c.l.b16 %v1683
    %v3085 = vunpack.c.h.b16 %v1683
    %v3086 = vunpack.c.l.b16 %v1684
    %v3087 = vunpack.c.h.b16 %v1684
    %v3088 = vunpack.c.l.b16 %v1685
    %v3089 = vunpack.c.h.b16 %v1685
    %v3090 = vunpack.c.l.b16 %v1686
    %v3091 = vunpack.c.h.b16 %v1686
    %v3092 = vunpack.c.l.b16 %v1687
    %v3093 = vunpack.c.h.b16 %v1687
    %v3094 = vunpack.c.l.b16 %v1688
    %v3095 = vunpack.c.h.b16 %v1688
    %v3096 = vunpack.c.l.b16 %v1689
    %v3097 = vunpack.c.h.b16 %v1689
    %v3098 = vunpack.c.l.b16 %v1690
    %v3099 = vunpack.c.h.b16 %v1690
    %v3100 = vunpack.c.l.b16 %v1691
    %v3101 = vunpack.c.h.b16 %v1691
    %v3102 = vunpack.c.l.b16 %v1692
    %v3103 = vunpack.c.h.b16 %v1692
    %v3104 = vunpack.c.l.b16 %v1693
    %v3105 = vunpack.c.h.b16 %v1693
    %v3106 = vunpack.c.l.b16 %v1694
    %v3107 = vunpack.c.h.b16 %v1694
    %v3108 = vunpack.c.l.b16 %v1695
    %v3109 = vunpack.c.h.b16 %v1695
    %v3110 = vunpack.c.l.b16 %v1696
    %v3111 = vunpack.c.h.b16 %v1696
    %v3112 = vunpack.c.l.b16 %v1697
    %v3113 = vunpack.c.h.b16 %v1697
    %v3114 = vunpack.c.l.b16 %v1698
    %v3115 = vunpack.c.h.b16 %v1698
    %v3116 = vunpack.c.l.b16 %v1699
    %v3117 = vunpack.c.h.b16 %v1699
    %v3118 = vunpack.c.l.b16 %v1700
    %v3119 = vunpack.c.h.b16 %v1700
    %v3120 = vunpack.c.l.b16 %v1701
    %v3121 = vunpack.c.h.b16 %v1701
    %v3122 = vunpack.c.l.b16 %v1702
    %v3123 = vunpack.c.h.b16 %v1702
    %v3124 = vunpack.c.l.b16 %v1703
    %v3125 = vunpack.c.h.b16 %v1703
    %v3126 = vunpack.c.l.b16 %v1704
    %v3127 = vunpack.c.h.b16 %v1704
    %v3128 = vunpack.c.l.b16 %v1705
    %v3129 = vunpack.c.h.b16 %v1705
    %v3130 = vunpack.c.l.b16 %v1706
    %v3131 = vunpack.c.h.b16 %v1706
    %v3132 = vunpack.c.l.b16 %v1707
    %v3133 = vunpack.c.h.b16 %v1707
    %v3134 = vunpack.c.l.b16 %v1708
    %v3135 = vunpack.c.h.b16 %v1708
    %v3136 = vunpack.c.l.b16 %v1709
    %v3137 = vunpack.c.h.b16 %v1709
    %v3138 = vunpack.c.l.b16 %v1710
    %v3139 = vunpack.c.h.b16 %v1710
    %v3140 = vunpack.c.l.b16 %v1711
    %v3141 = vunpack.c.h.b16 %v1711
    %v3142 = vunpack.c.l.b16 %v1712
    %v3143 = vunpack.c.h.b16 %v1712
    %v3144 = vunpack.c.l.b16 %v1713
    %v3145 = vunpack.c.h.b16 %v1713
    %v3146 = vunpack.c.l.b16 %v1714
    %v3147 = vunpack.c.h.b16 %v1714
    %v3148 = vunpack.c.l.b16 %v1715
    %v3149 = vunpack.c.h.b16 %v1715
    %v3150 = vunpack.c.l.b16 %v1716
    %v3151 = vunpack.c.h.b16 %v1716
    %v3152 = vunpack.c.l.b16 %v1717
    %v3153 = vunpack.c.h.b16 %v1717
    %v3154 = vunpack.c.l.b16 %v1718
    %v3155 = vunpack.c.h.b16 %v1718
    %v3156 = vunpack.c.l.b16 %v1719
    %v3157 = vunpack.c.h.b16 %v1719
    %v3158 = vunpack.c.l.b16 %v1720
    %v3159 = vunpack.c.h.b16 %v1720
    %v3160 = vunpack.c.l.b16 %v1721
    %v3161 = vunpack.c.h.b16 %v1721
    %v3162 = vunpack.c.l.b16 %v1722
    %v3163 = vunpack.c.h.b16 %v1722
    %v3164 = vunpack.c.l.b16 %v1723
    %v3165 = vunpack.c.h.b16 %v1723
    %v3166 = vunpack.c.l.b16 %v1724
    %v3167 = vunpack.c.h.b16 %v1724
    %v3168 = vunpack.c.l.b16 %v1725
    %v3169 = vunpack.c.h.b16 %v1725
    %v3170 = vunpack.c.l.b16 %v1726
    %v3171 = vunpack.c.h.b16 %v1726
    %v3172 = vunpack.c.l.b16 %v1727
    %v3173 = vunpack.c.h.b16 %v1727
    %v3174 = vunpack.c.l.b16 %v1728
    %v3175 = vunpack.c.h.b16 %v1728
    %v3176 = vunpack.c.l.b16 %v1729
    %v3177 = vunpack.c.h.b16 %v1729
    %v3178 = vunpack.c.l.b16 %v1730
    %v3179 = vunpack.c.h.b16 %v1730
    %v3180 = vunpack.c.l.b16 %v1731
    %v3181 = vunpack.c.h.b16 %v1731
    %v3182 = vunpack.c.l.b16 %v1732
    %v3183 = vunpack.c.h.b16 %v1732
    %v3184 = vunpack.c.l.b16 %v1733
    %v3185 = vunpack.c.h.b16 %v1733
    %v3186 = vunpack.c.l.b16 %v1734
    %v3187 = vunpack.c.h.b16 %v1734
    %v3188 = vunpack.c.l.b16 %v1735
    %v3189 = vunpack.c.h.b16 %v1735
    %v3190 = vunpack.c.l.b16 %v1736
    %v3191 = vunpack.c.h.b16 %v1736
    %v3192 = vunpack.c.l.b16 %v1737
    %v3193 = vunpack.c.h.b16 %v1737
    %v3194 = vunpack.c.l.b16 %v1738
    %v3195 = vunpack.c.h.b16 %v1738
    %v3196 = vunpack.c.l.b16 %v1739
    %v3197 = vunpack.c.h.b16 %v1739
    %v3198 = vunpack.c.l.b16 %v1740
    %v3199 = vunpack.c.h.b16 %v1740
    %v3200 = vunpack.c.l.b16 %v1741
    %v3201 = vunpack.c.h.b16 %v1741
    %v3202 = vunpack.c.l.b16 %v1742
    %v3203 = vunpack.c.h.b16 %v1742
    %v3204 = vunpack.c.l.b16 %v1743
    %v3205 = vunpack.c.h.b16 %v1743
    %v3206 = vunpack.c.l.b16 %v1744
    %v3207 = vunpack.c.h.b16 %v1744
    %v3208 = vunpack.c.l.b16 %v1745
    %v3209 = vunpack.c.h.b16 %v1745
    %v3210 = vunpack.c.l.b16 %v1746
    %v3211 = vunpack.c.h.b16 %v1746
    %v3212 = vunpack.c.l.b16 %v1747
    %v3213 = vunpack.c.h.b16 %v1747
    %v3214 = vunpack.c.l.b16 %v1748
    %v3215 = vunpack.c.h.b16 %v1748
    %v3216 = vunpack.c.l.b16 %v1749
    %v3217 = vunpack.c.h.b16 %v1749
    %v3218 = vunpack.c.l.b16 %v1750
    %v3219 = vunpack.c.h.b16 %v1750
    %v3220 = vunpack.c.l.b16 %v1751
    %v3221 = vunpack.c.h.b16 %v1751
    %v3222 = vunpack.c.l.b16 %v1752
    %v3223 = vunpack.c.h.b16 %v1752
    %v3224 = vunpack.c.l.b16 %v1753
    %v3225 = vunpack.c.h.b16 %v1753
    %v3226 = vunpack.c.l.b16 %v1754
    %v3227 = vunpack.c.h.b16 %v1754
    %v3228 = vunpack.c.l.b16 %v1755
    %v3229 = vunpack.c.h.b16 %v1755
    %v3230 = vunpack.c.l.b16 %v1756
    %v3231 = vunpack.c.h.b16 %v1756
    %v3232 = vunpack.c.l.b16 %v1757
    %v3233 = vunpack.c.h.b16 %v1757
    %v3234 = vunpack.c.l.b16 %v1758
    %v3235 = vunpack.c.h.b16 %v1758
    %v3236 = vunpack.c.l.b16 %v1759
    %v3237 = vunpack.c.h.b16 %v1759
    %v3238 = vunpack.c.l.b16 %v1760
    %v3239 = vunpack.c.h.b16 %v1760
    %v3240 = vunpack.c.l.b16 %v1761
    %v3241 = vunpack.c.h.b16 %v1761
    %v3242 = vunpack.c.l.b16 %v1762
    %v3243 = vunpack.c.h.b16 %v1762
    %v3244 = vunpack.c.l.b16 %v1763
    %v3245 = vunpack.c.h.b16 %v1763
    %v3246 = vunpack.c.l.b16 %v1764
    %v3247 = vunpack.c.h.b16 %v1764
    %v3248 = vunpack.c.l.b16 %v1765
    %v3249 = vunpack.c.h.b16 %v1765
    %v3250 = vunpack.c.l.b16 %v1766
    %v3251 = vunpack.c.h.b16 %v1766
    %v3252 = vunpack.c.l.b16 %v1767
    %v3253 = vunpack.c.h.b16 %v1767
    %v3254 = vunpack.c.l.b16 %v1768
    %v3255 = vunpack.c.h.b16 %v1768
    %v3256 = vunpack.c.l.b16 %v1769
    %v3257 = vunpack.c.h.b16 %v1769
    %v3258 = vunpack.c.l.b16 %v1770
    %v3259 = vunpack.c.h.b16 %v1770
    %v3260 = vunpack.c.l.b16 %v1771
    %v3261 = vunpack.c.h.b16 %v1771
    %v3262 = vunpack.c.l.b16 %v1772
    %v3263 = vunpack.c.h.b16 %v1772
    %v3264 = vunpack.c.l.b16 %v1773
    %v3265 = vunpack.c.h.b16 %v1773
    %v3266 = vunpack.c.l.b16 %v1774
    %v3267 = vunpack.c.h.b16 %v1774
    %v3268 = vunpack.c.l.b16 %v1775
    %v3269 = vunpack.c.h.b16 %v1775
    %v3270 = vunpack.c.l.b16 %v1776
    %v3271 = vunpack.c.h.b16 %v1776
    %v3272 = vunpack.c.l.b16 %v1777
    %v3273 = vunpack.c.h.b16 %v1777
    %v3274 = vunpack.c.l.b16 %v1778
    %v3275 = vunpack.c.h.b16 %v1778
    %v3276 = vunpack.c.l.b16 %v1779
    %v3277 = vunpack.c.h.b16 %v1779
    %v3278 = vunpack.c.l.b16 %v1780
    %v3279 = vunpack.c.h.b16 %v1780
    %v3280 = vunpack.c.l.b16 %v1781
    %v3281 = vunpack.c.h.b16 %v1781
    %v3282 = vunpack.c.l.b16 %v1782
    %v3283 = vunpack.c.h.b16 %v1782
    %v3284 = vunpack.c.l.b16 %v1783
    %v3285 = vunpack.c.h.b16 %v1783
    %v3286 = vunpack.c.l.b16 %v1784
    %v3287 = vunpack.c.h.b16 %v1784
    %v3288 = vunpack.c.l.b16 %v1785
    %v3289 = vunpack.c.h.b16 %v1785
    %v3290 = vunpack.c.l.b16 %v1786
    %v3291 = vunpack.c.h.b16 %v1786
    %v3292 = vunpack.c.l.b16 %v1787
    %v3293 = vunpack.c.h.b16 %v1787
    %v3294 = vunpack.c.l.b16 %v1788
    %v3295 = vunpack.c.h.b16 %v1788
    %v3296 = vunpack.c.l.b16 %v1789
    %v3297 = vunpack.c.h.b16 %v1789
    %v3298 = vunpack.c.l.b16 %v1790
    %v3299 = vunpack.c.h.b16 %v1790
    %v3300 = vunpack.c.l.b16 %v1791
    %v3301 = vunpack.c.h.b16 %v1791
    %v3302 = vunpack.c.l.b16 %v1792
    %v3303 = vunpack.c.h.b16 %v1792
    %v3304 = vunpack.c.l.b16 %v1793
    %v3305 = vunpack.c.h.b16 %v1793
    %v3306 = vunpack.c.l.b16 %v1794
    %v3307 = vunpack.c.h.b16 %v1794
    %v3308 = vunpack.c.l.b16 %v1795
    %v3309 = vunpack.c.h.b16 %v1795
    %v3310 = vunpack.c.l.b16 %v1796
    %v3311 = vunpack.c.h.b16 %v1796
    %v3312 = vunpack.c.l.b16 %v1797
    %v3313 = vunpack.c.h.b16 %v1797
    %v3314 = vunpack.c.l.b16 %v1798
    %v3315 = vunpack.c.h.b16 %v1798
    %v3316 = vunpack.c.l.b16 %v1799
    %v3317 = vunpack.c.h.b16 %v1799
    %v3318 = vunpack.c.l.b16 %v1800
    %v3319 = vunpack.c.h.b16 %v1800
    %v3320 = vunpack.c.l.b16 %v1801
    %v3321 = vunpack.c.h.b16 %v1801
    %v3322 = vunpack.c.l.b16 %v1802
    %v3323 = vunpack.c.h.b16 %v1802
    %v3324 = vunpack.c.l.b16 %v1803
    %v3325 = vunpack.c.h.b16 %v1803
    %v3326 = vunpack.c.l.b16 %v1804
    %v3327 = vunpack.c.h.b16 %v1804
    %v3328 = vunpack.c.l.b16 %v1805
    %v3329 = vunpack.c.h.b16 %v1805
    %v3330 = vunpack.c.l.b16 %v1806
    %v3331 = vunpack.c.h.b16 %v1806
    %v3332 = vunpack.c.l.b16 %v1807
    %v3333 = vunpack.c.h.b16 %v1807
    %v3334 = vunpack.c.l.b16 %v1808
    %v3335 = vunpack.c.h.b16 %v1808
    %v3336 = vunpack.c.l.b16 %v1809
    %v3337 = vunpack.c.h.b16 %v1809
    %v3338 = vunpack.c.l.b16 %v1810
    %v3339 = vunpack.c.h.b16 %v1810
    %v3340 = vunpack.c.l.b16 %v1811
    %v3341 = vunpack.c.h.b16 %v1811
    %v3342 = vunpack.c.l.b16 %v1812
    %v3343 = vunpack.c.h.b16 %v1812
    %v3344 = vunpack.c.l.b16 %v1813
    %v3345 = vunpack.c.h.b16 %v1813
    %v3346 = vunpack.c.l.b16 %v1814
    %v3347 = vunpack.c.h.b16 %v1814
    %v3348 = vunpack.c.l.b16 %v1815
    %v3349 = vunpack.c.h.b16 %v1815
    %v3350 = vunpack.c.l.b16 %v1816
    %v3351 = vunpack.c.h.b16 %v1816
    %v3352 = vunpack.c.l.b16 %v1817
    %v3353 = vunpack.c.h.b16 %v1817
    %v3354 = vunpack.c.l.b16 %v1818
    %v3355 = vunpack.c.h.b16 %v1818
    %v3356 = vunpack.c.l.b16 %v1819
    %v3357 = vunpack.c.h.b16 %v1819
    %v3358 = vunpack.c.l.b16 %v1820
    %v3359 = vunpack.c.h.b16 %v1820
    %v3360 = vunpack.c.l.b16 %v1821
    %v3361 = vunpack.c.h.b16 %v1821
    %v3362 = vunpack.c.l.b16 %v1822
    %v3363 = vunpack.c.h.b16 %v1822
    %v3364 = vunpack.c.l.b16 %v1823
    %v3365 = vunpack.c.h.b16 %v1823
    %v3366 = vunpack.c.l.b16 %v1824
    %v3367 = vunpack.c.h.b16 %v1824
    %v3368 = vunpack.c.l.b16 %v1825
    %v3369 = vunpack.c.h.b16 %v1825
    %v3370 = vunpack.c.l.b16 %v1826
    %v3371 = vunpack.c.h.b16 %v1826
    %v3372 = vunpack.c.l.b16 %v1827
    %v3373 = vunpack.c.h.b16 %v1827
    %v3374 = vunpack.c.l.b16 %v1828
    %v3375 = vunpack.c.h.b16 %v1828
    %v3376 = vunpack.c.l.b16 %v1829
    %v3377 = vunpack.c.h.b16 %v1829
    %v3378 = vunpack.c.l.b16 %v1830
    %v3379 = vunpack.c.h.b16 %v1830
    %v3380 = vunpack.c.l.b16 %v1831
    %v3381 = vunpack.c.h.b16 %v1831
    %v3382 = vunpack.c.l.b16 %v1832
    %v3383 = vunpack.c.h.b16 %v1832
    %v3384 = vunpack.c.l.b16 %v1833
    %v3385 = vunpack.c.h.b16 %v1833
    %v3386 = vunpack.c.l.b16 %v1834
    %v3387 = vunpack.c.h.b16 %v1834
    %v3388 = vunpack.c.l.b16 %v1835
    %v3389 = vunpack.c.h.b16 %v1835
    %v3390 = vpack.c.b16 %v2374, %v2366
    %v3391 = vpack.c.b16 %v2375, %v2367
    %v3392 = vpack.c.b16 %v2376, %v2368
    %v3393 = vpack.c.b16 %v2377, %v2369
    %v3394 = vpack.c.b16 %v2378, %v2370
    %v3395 = vpack.c.b16 %v2379, %v2371
    %v3396 = vpack.c.b16 %v2380, %v2372
    %v3397 = vpack.c.b16 %v2381, %v2373
    %v3398 = vpack.c.b16 %v2390, %v2382
    %v3399 = vpack.c.b16 %v2391, %v2383
    %v3400 = vpack.c.b16 %v2392, %v2384
    %v3401 = vpack.c.b16 %v2393, %v2385
    %v3402 = vpack.c.b16 %v2394, %v2386
    %v3403 = vpack.c.b16 %v2395, %v2387
    %v3404 = vpack.c.b16 %v2396, %v2388
    %v3405 = vpack.c.b16 %v2397, %v2389
    %v3406 = vpack.c.b16 %v2406, %v2398
    %v3407 = vpack.c.b16 %v2407, %v2399
    %v3408 = vpack.c.b16 %v2408, %v2400
    %v3409 = vpack.c.b16 %v2409, %v2401
    %v3410 = vpack.c.b16 %v2410, %v2402
    %v3411 = vpack.c.b16 %v2411, %v2403
    %v3412 = vpack.c.b16 %v2412, %v2404
    %v3413 = vpack.c.b16 %v2413, %v2405
    %v3414 = vpack.c.b16 %v2422, %v2414
    %v3415 = vpack.c.b16 %v2423, %v2415
    %v3416 = vpack.c.b16 %v2424, %v2416
    %v3417 = vpack.c.b16 %v2425, %v2417
    %v3418 = vpack.c.b16 %v2426, %v2418
    %v3419 = vpack.c.b16 %v2427, %v2419
    %v3420 = vpack.c.b16 %v2428, %v2420
    %v3421 = vpack.c.b16 %v2429, %v2421
    %v3422 = vpack.c.b16 %v2438, %v2430
    %v3423 = vpack.c.b16 %v2439, %v2431
    %v3424 = vpack.c.b16 %v2440, %v2432
    %v3425 = vpack.c.b16 %v2441, %v2433
    %v3426 = vpack.c.b16 %v2442, %v2434
    %v3427 = vpack.c.b16 %v2443, %v2435
    %v3428 = vpack.c.b16 %v2444, %v2436
    %v3429 = vpack.c.b16 %v2445, %v2437
    %v3430 = vpack.c.b16 %v2454, %v2446
    %v3431 = vpack.c.b16 %v2455, %v2447
    %v3432 = vpack.c.b16 %v2456, %v2448
    %v3433 = vpack.c.b16 %v2457, %v2449
    %v3434 = vpack.c.b16 %v2458, %v2450
    %v3435 = vpack.c.b16 %v2459, %v2451
    %v3436 = vpack.c.b16 %v2460, %v2452
    %v3437 = vpack.c.b16 %v2461, %v2453
    %v3438 = vpack.c.b16 %v2470, %v2462
    %v3439 = vpack.c.b16 %v2471, %v2463
    %v3440 = vpack.c.b16 %v2472, %v2464
    %v3441 = vpack.c.b16 %v2473, %v2465
    %v3442 = vpack.c.b16 %v2474, %v2466
    %v3443 = vpack.c.b16 %v2475, %v2467
    %v3444 = vpack.c.b16 %v2476, %v2468
    %v3445 = vpack.c.b16 %v2477, %v2469
    %v3446 = vpack.c.b16 %v2486, %v2478
    %v3447 = vpack.c.b16 %v2487, %v2479
    %v3448 = vpack.c.b16 %v2488, %v2480
    %v3449 = vpack.c.b16 %v2489, %v2481
    %v3450 = vpack.c.b16 %v2490, %v2482
    %v3451 = vpack.c.b16 %v2491, %v2483
    %v3452 = vpack.c.b16 %v2492, %v2484
    %v3453 = vpack.c.b16 %v2493, %v2485
    %v3454 = vpack.c.b16 %v2502, %v2494
    %v3455 = vpack.c.b16 %v2503, %v2495
    %v3456 = vpack.c.b16 %v2504, %v2496
    %v3457 = vpack.c.b16 %v2505, %v2497
    %v3458 = vpack.c.b16 %v2506, %v2498
    %v3459 = vpack.c.b16 %v2507, %v2499
    %v3460 = vpack.c.b16 %v2508, %v2500
    %v3461 = vpack.c.b16 %v2509, %v2501
    %v3462 = vpack.c.b16 %v2518, %v2510
    %v3463 = vpack.c.b16 %v2519, %v2511
    %v3464 = vpack.c.b16 %v2520, %v2512
    %v3465 = vpack.c.b16 %v2521, %v2513
    %v3466 = vpack.c.b16 %v2522, %v2514
    %v3467 = vpack.c.b16 %v2523, %v2515
    %v3468 = vpack.c.b16 %v2524, %v2516
    %v3469 = vpack.c.b16 %v2525, %v2517
    %v3470 = vpack.c.b16 %v2534, %v2526
    %v3471 = vpack.c.b16 %v2535, %v2527
    %v3472 = vpack.c.b16 %v2536, %v2528
    %v3473 = vpack.c.b16 %v2537, %v2529
    %v3474 = vpack.c.b16 %v2538, %v2530
    %v3475 = vpack.c.b16 %v2539, %v2531
    %v3476 = vpack.c.b16 %v2540, %v2532
    %v3477 = vpack.c.b16 %v2541, %v2533
    %v3478 = vpack.c.b16 %v2550, %v2542
    %v3479 = vpack.c.b16 %v2551, %v2543
    %v3480 = vpack.c.b16 %v2552, %v2544
    %v3481 = vpack.c.b16 %v2553, %v2545
    %v3482 = vpack.c.b16 %v2554, %v2546
    %v3483 = vpack.c.b16 %v2555, %v2547
    %v3484 = vpack.c.b16 %v2556, %v2548
    %v3485 = vpack.c.b16 %v2557, %v2549
    %v3486 = vpack.c.b16 %v2566, %v2558
    %v3487 = vpack.c.b16 %v2567, %v2559
    %v3488 = vpack.c.b16 %v2568, %v2560
    %v3489 = vpack.c.b16 %v2569, %v2561
    %v3490 = vpack.c.b16 %v2570, %v2562
    %v3491 = vpack.c.b16 %v2571, %v2563
    %v3492 = vpack.c.b16 %v2572, %v2564
    %v3493 = vpack.c.b16 %v2573, %v2565
    %v3494 = vpack.c.b16 %v2582, %v2574
    %v3495 = vpack.c.b16 %v2583, %v2575
    %v3496 = vpack.c.b16 %v2584, %v2576
    %v3497 = vpack.c.b16 %v2585, %v2577
    %v3498 = vpack.c.b16 %v2586, %v2578
    %v3499 = vpack.c.b16 %v2587, %v2579
    %v3500 = vpack.c.b16 %v2588, %v2580
    %v3501 = vpack.c.b16 %v2589, %v2581
    %v3502 = vpack.c.b16 %v2598, %v2590
    %v3503 = vpack.c.b16 %v2599, %v2591
    %v3504 = vpack.c.b16 %v2600, %v2592
    %v3505 = vpack.c.b16 %v2601, %v2593
    %v3506 = vpack.c.b16 %v2602, %v2594
    %v3507 = vpack.c.b16 %v2603, %v2595
    %v3508 = vpack.c.b16 %v2604, %v2596
    %v3509 = vpack.c.b16 %v2605, %v2597
    %v3510 = vpack.c.b16 %v2614, %v2606
    %v3511 = vpack.c.b16 %v2615, %v2607
    %v3512 = vpack.c.b16 %v2616, %v2608
    %v3513 = vpack.c.b16 %v2617, %v2609
    %v3514 = vpack.c.b16 %v2618, %v2610
    %v3515 = vpack.c.b16 %v2619, %v2611
    %v3516 = vpack.c.b16 %v2620, %v2612
    %v3517 = vpack.c.b16 %v2621, %v2613
    %v3518 = vpack.c.b16 %v2630, %v2622
    %v3519 = vpack.c.b16 %v2631, %v2623
    %v3520 = vpack.c.b16 %v2632, %v2624
    %v3521 = vpack.c.b16 %v2633, %v2625
    %v3522 = vpack.c.b16 %v2634, %v2626
    %v3523 = vpack.c.b16 %v2635, %v2627
    %v3524 = vpack.c.b16 %v2636, %v2628
    %v3525 = vpack.c.b16 %v2637, %v2629
    %v3526 = vpack.c.b16 %v2646, %v2638
    %v3527 = vpack.c.b16 %v2647, %v2639
    %v3528 = vpack.c.b16 %v2648, %v2640
    %v3529 = vpack.c.b16 %v2649, %v2641
    %v3530 = vpack.c.b16 %v2650, %v2642
    %v3531 = vpack.c.b16 %v2651, %v2643
    %v3532 = vpack.c.b16 %v2652, %v2644
    %v3533 = vpack.c.b16 %v2653, %v2645
    %v3534 = vpack.c.b16 %v2662, %v2654
    %v3535 = vpack.c.b16 %v2663, %v2655
    %v3536 = vpack.c.b16 %v2664, %v2656
    %v3537 = vpack.c.b16 %v2665, %v2657
    %v3538 = vpack.c.b16 %v2666, %v2658
    %v3539 = vpack.c.b16 %v2667, %v2659
    %v3540 = vpack.c.b16 %v2668, %v2660
    %v3541 = vpack.c.b16 %v2669, %v2661
    %v3542 = vpack.c.b16 %v2678, %v2670
    %v3543 = vpack.c.b16 %v2679, %v2671
    %v3544 = vpack.c.b16 %v2680, %v2672
    %v3545 = vpack.c.b16 %v2681, %v2673
    %v3546 = vpack.c.b16 %v2682, %v2674
    %v3547 = vpack.c.b16 %v2683, %v2675
    %v3548 = vpack.c.b16 %v2684, %v2676
    %v3549 = vpack.c.b16 %v2685, %v2677
    %v3550 = vpack.c.b16 %v2694, %v2686
    %v3551 = vpack.c.b16 %v2695, %v2687
    %v3552 = vpack.c.b16 %v2696, %v2688
    %v3553 = vpack.c.b16 %v2697, %v2689
    %v3554 = vpack.c.b16 %v2698, %v2690
    %v3555 = vpack.c.b16 %v2699, %v2691
    %v3556 = vpack.c.b16 %v2700, %v2692
    %v3557 = vpack.c.b16 %v2701, %v2693
    %v3558 = vpack.c.b16 %v2710, %v2702
    %v3559 = vpack.c.b16 %v2711, %v2703
    %v3560 = vpack.c.b16 %v2712, %v2704
    %v3561 = vpack.c.b16 %v2713, %v2705
    %v3562 = vpack.c.b16 %v2714, %v2706
    %v3563 = vpack.c.b16 %v2715, %v2707
    %v3564 = vpack.c.b16 %v2716, %v2708
    %v3565 = vpack.c.b16 %v2717, %v2709
    %v3566 = vpack.c.b16 %v2726, %v2718
    %v3567 = vpack.c.b16 %v2727, %v2719
    %v3568 = vpack.c.b16 %v2728, %v2720
    %v3569 = vpack.c.b16 %v2729, %v2721
    %v3570 = vpack.c.b16 %v2730, %v2722
    %v3571 = vpack.c.b16 %v2731, %v2723
    %v3572 = vpack.c.b16 %v2732, %v2724
    %v3573 = vpack.c.b16 %v2733, %v2725
    %v3574 = vpack.c.b16 %v2742, %v2734
    %v3575 = vpack.c.b16 %v2743, %v2735
    %v3576 = vpack.c.b16 %v2744, %v2736
    %v3577 = vpack.c.b16 %v2745, %v2737
    %v3578 = vpack.c.b16 %v2746, %v2738
    %v3579 = vpack.c.b16 %v2747, %v2739
    %v3580 = vpack.c.b16 %v2748, %v2740
    %v3581 = vpack.c.b16 %v2749, %v2741
    %v3582 = vpack.c.b16 %v2758, %v2750
    %v3583 = vpack.c.b16 %v2759, %v2751
    %v3584 = vpack.c.b16 %v2760, %v2752
    %v3585 = vpack.c.b16 %v2761, %v2753
    %v3586 = vpack.c.b16 %v2762, %v2754
    %v3587 = vpack.c.b16 %v2763, %v2755
    %v3588 = vpack.c.b16 %v2764, %v2756
    %v3589 = vpack.c.b16 %v2765, %v2757
    %v3590 = vpack.c.b16 %v2774, %v2766
    %v3591 = vpack.c.b16 %v2775, %v2767
    %v3592 = vpack.c.b16 %v2776, %v2768
    %v3593 = vpack.c.b16 %v2777, %v2769
    %v3594 = vpack.c.b16 %v2778, %v2770
    %v3595 = vpack.c.b16 %v2779, %v2771
    %v3596 = vpack.c.b16 %v2780, %v2772
    %v3597 = vpack.c.b16 %v2781, %v2773
    %v3598 = vpack.c.b16 %v2790, %v2782
    %v3599 = vpack.c.b16 %v2791, %v2783
    %v3600 = vpack.c.b16 %v2792, %v2784
    %v3601 = vpack.c.b16 %v2793, %v2785
    %v3602 = vpack.c.b16 %v2794, %v2786
    %v3603 = vpack.c.b16 %v2795, %v2787
    %v3604 = vpack.c.b16 %v2796, %v2788
    %v3605 = vpack.c.b16 %v2797, %v2789
    %v3606 = vpack.c.b16 %v2806, %v2798
    %v3607 = vpack.c.b16 %v2807, %v2799
    %v3608 = vpack.c.b16 %v2808, %v2800
    %v3609 = vpack.c.b16 %v2809, %v2801
    %v3610 = vpack.c.b16 %v2810, %v2802
    %v3611 = vpack.c.b16 %v2811, %v2803
    %v3612 = vpack.c.b16 %v2812, %v2804
    %v3613 = vpack.c.b16 %v2813, %v2805
    %v3614 = vpack.c.b16 %v2822, %v2814
    %v3615 = vpack.c.b16 %v2823, %v2815
    %v3616 = vpack.c.b16 %v2824, %v2816
    %v3617 = vpack.c.b16 %v2825, %v2817
    %v3618 = vpack.c.b16 %v2826, %v2818
    %v3619 = vpack.c.b16 %v2827, %v2819
    %v3620 = vpack.c.b16 %v2828, %v2820
    %v3621 = vpack.c.b16 %v2829, %v2821
    %v3622 = vpack.c.b16 %v2838, %v2830
    %v3623 = vpack.c.b16 %v2839, %v2831
    %v3624 = vpack.c.b16 %v2840, %v2832
    %v3625 = vpack.c.b16 %v2841, %v2833
    %v3626 = vpack.c.b16 %v2842, %v2834
    %v3627 = vpack.c.b16 %v2843, %v2835
    %v3628 = vpack.c.b16 %v2844, %v2836
    %v3629 = vpack.c.b16 %v2845, %v2837
    %v3630 = vpack.c.b16 %v2854, %v2846
    %v3631 = vpack.c.b16 %v2855, %v2847
    %v3632 = vpack.c.b16 %v2856, %v2848
    %v3633 = vpack.c.b16 %v2857, %v2849
    %v3634 = vpack.c.b16 %v2858, %v2850
    %v3635 = vpack.c.b16 %v2859, %v2851
    %v3636 = vpack.c.b16 %v2860, %v2852
    %v3637 = vpack.c.b16 %v2861, %v2853
    %v3638 = vpack.c.b16 %v2870, %v2862
    %v3639 = vpack.c.b16 %v2871, %v2863
    %v3640 = vpack.c.b16 %v2872, %v2864
    %v3641 = vpack.c.b16 %v2873, %v2865
    %v3642 = vpack.c.b16 %v2874, %v2866
    %v3643 = vpack.c.b16 %v2875, %v2867
    %v3644 = vpack.c.b16 %v2876, %v2868
    %v3645 = vpack.c.b16 %v2877, %v2869
    %v3646 = vpack.c.b16 %v2886, %v2878
    %v3647 = vpack.c.b16 %v2887, %v2879
    %v3648 = vpack.c.b16 %v2888, %v2880
    %v3649 = vpack.c.b16 %v2889, %v2881
    %v3650 = vpack.c.b16 %v2890, %v2882
    %v3651 = vpack.c.b16 %v2891, %v2883
    %v3652 = vpack.c.b16 %v2892, %v2884
    %v3653 = vpack.c.b16 %v2893, %v2885
    %v3654 = vpack.c.b16 %v2902, %v2894
    %v3655 = vpack.c.b16 %v2903, %v2895
    %v3656 = vpack.c.b16 %v2904, %v2896
    %v3657 = vpack.c.b16 %v2905, %v2897
    %v3658 = vpack.c.b16 %v2906, %v2898
    %v3659 = vpack.c.b16 %v2907, %v2899
    %v3660 = vpack.c.b16 %v2908, %v2900
    %v3661 = vpack.c.b16 %v2909, %v2901
    %v3662 = vpack.c.b16 %v2918, %v2910
    %v3663 = vpack.c.b16 %v2919, %v2911
    %v3664 = vpack.c.b16 %v2920, %v2912
    %v3665 = vpack.c.b16 %v2921, %v2913
    %v3666 = vpack.c.b16 %v2922, %v2914
    %v3667 = vpack.c.b16 %v2923, %v2915
    %v3668 = vpack.c.b16 %v2924, %v2916
    %v3669 = vpack.c.b16 %v2925, %v2917
    %v3670 = vpack.c.b16 %v2934, %v2926
    %v3671 = vpack.c.b16 %v2935, %v2927
    %v3672 = vpack.c.b16 %v2936, %v2928
    %v3673 = vpack.c.b16 %v2937, %v2929
    %v3674 = vpack.c.b16 %v2938, %v2930
    %v3675 = vpack.c.b16 %v2939, %v2931
    %v3676 = vpack.c.b16 %v2940, %v2932
    %v3677 = vpack.c.b16 %v2941, %v2933
    %v3678 = vpack.c.b16 %v2950, %v2942
    %v3679 = vpack.c.b16 %v2951, %v2943
    %v3680 = vpack.c.b16 %v2952, %v2944
    %v3681 = vpack.c.b16 %v2953, %v2945
    %v3682 = vpack.c.b16 %v2954, %v2946
    %v3683 = vpack.c.b16 %v2955, %v2947
    %v3684 = vpack.c.b16 %v2956, %v2948
    %v3685 = vpack.c.b16 %v2957, %v2949
    %v3686 = vpack.c.b16 %v2966, %v2958
    %v3687 = vpack.c.b16 %v2967, %v2959
    %v3688 = vpack.c.b16 %v2968, %v2960
    %v3689 = vpack.c.b16 %v2969, %v2961
    %v3690 = vpack.c.b16 %v2970, %v2962
    %v3691 = vpack.c.b16 %v2971, %v2963
    %v3692 = vpack.c.b16 %v2972, %v2964
    %v3693 = vpack.c.b16 %v2973, %v2965
    %v3694 = vpack.c.b16 %v2982, %v2974
    %v3695 = vpack.c.b16 %v2983, %v2975
    %v3696 = vpack.c.b16 %v2984, %v2976
    %v3697 = vpack.c.b16 %v2985, %v2977
    %v3698 = vpack.c.b16 %v2986, %v2978
    %v3699 = vpack.c.b16 %v2987, %v2979
    %v3700 = vpack.c.b16 %v2988, %v2980
    %v3701 = vpack.c.b16 %v2989, %v2981
    %v3702 = vpack.c.b16 %v2998, %v2990
    %v3703 = vpack.c.b16 %v2999, %v2991
    %v3704 = vpack.c.b16 %v3000, %v2992
    %v3705 = vpack.c.b16 %v3001, %v2993
    %v3706 = vpack.c.b16 %v3002, %v2994
    %v3707 = vpack.c.b16 %v3003, %v2995
    %v3708 = vpack.c.b16 %v3004, %v2996
    %v3709 = vpack.c.b16 %v3005, %v2997
    %v3710 = vpack.c.b16 %v3014, %v3006
    %v3711 = vpack.c.b16 %v3015, %v3007
    %v3712 = vpack.c.b16 %v3016, %v3008
    %v3713 = vpack.c.b16 %v3017, %v3009
    %v3714 = vpack.c.b16 %v3018, %v3010
    %v3715 = vpack.c.b16 %v3019, %v3011
    %v3716 = vpack.c.b16 %v3020, %v3012
    %v3717 = vpack.c.b16 %v3021, %v3013
    %v3718 = vpack.c.b16 %v3030, %v3022
    %v3719 = vpack.c.b16 %v3031, %v3023
    %v3720 = vpack.c.b16 %v3032, %v3024
    %v3721 = vpack.c.b16 %v3033, %v3025
    %v3722 = vpack.c.b16 %v3034, %v3026
    %v3723 = vpack.c.b16 %v3035, %v3027
    %v3724 = vpack.c.b16 %v3036, %v3028
    %v3725 = vpack.c.b16 %v3037, %v3029
    %v3726 = vpack.c.b16 %v3046, %v3038
    %v3727 = vpack.c.b16 %v3047, %v3039
    %v3728 = vpack.c.b16 %v3048, %v3040
    %v3729 = vpack.c.b16 %v3049, %v3041
    %v3730 = vpack.c.b16 %v3050, %v3042
    %v3731 = vpack.c.b16 %v3051, %v3043
    %v3732 = vpack.c.b16 %v3052, %v3044
    %v3733 = vpack.c.b16 %v3053, %v3045
    %v3734 = vpack.c.b16 %v3062, %v3054
    %v3735 = vpack.c.b16 %v3063, %v3055
    %v3736 = vpack.c.b16 %v3064, %v3056
    %v3737 = vpack.c.b16 %v3065, %v3057
    %v3738 = vpack.c.b16 %v3066, %v3058
    %v3739 = vpack.c.b16 %v3067, %v3059
    %v3740 = vpack.c.b16 %v3068, %v3060
    %v3741 = vpack.c.b16 %v3069, %v3061
    %v3742 = vpack.c.b16 %v3078, %v3070
    %v3743 = vpack.c.b16 %v3079, %v3071
    %v3744 = vpack.c.b16 %v3080, %v3072
    %v3745 = vpack.c.b16 %v3081, %v3073
    %v3746 = vpack.c.b16 %v3082, %v3074
    %v3747 = vpack.c.b16 %v3083, %v3075
    %v3748 = vpack.c.b16 %v3084, %v3076
    %v3749 = vpack.c.b16 %v3085, %v3077
    %v3750 = vpack.c.b16 %v3094, %v3086
    %v3751 = vpack.c.b16 %v3095, %v3087
    %v3752 = vpack.c.b16 %v3096, %v3088
    %v3753 = vpack.c.b16 %v3097, %v3089
    %v3754 = vpack.c.b16 %v3098, %v3090
    %v3755 = vpack.c.b16 %v3099, %v3091
    %v3756 = vpack.c.b16 %v3100, %v3092
    %v3757 = vpack.c.b16 %v3101, %v3093
    %v3758 = vpack.c.b16 %v3110, %v3102
    %v3759 = vpack.c.b16 %v3111, %v3103
    %v3760 = vpack.c.b16 %v3112, %v3104
    %v3761 = vpack.c.b16 %v3113, %v3105
    %v3762 = vpack.c.b16 %v3114, %v3106
    %v3763 = vpack.c.b16 %v3115, %v3107
    %v3764 = vpack.c.b16 %v3116, %v3108
    %v3765 = vpack.c.b16 %v3117, %v3109
    %v3766 = vpack.c.b16 %v3126, %v3118
    %v3767 = vpack.c.b16 %v3127, %v3119
    %v3768 = vpack.c.b16 %v3128, %v3120
    %v3769 = vpack.c.b16 %v3129, %v3121
    %v3770 = vpack.c.b16 %v3130, %v3122
    %v3771 = vpack.c.b16 %v3131, %v3123
    %v3772 = vpack.c.b16 %v3132, %v3124
    %v3773 = vpack.c.b16 %v3133, %v3125
    %v3774 = vpack.c.b16 %v3142, %v3134
    %v3775 = vpack.c.b16 %v3143, %v3135
    %v3776 = vpack.c.b16 %v3144, %v3136
    %v3777 = vpack.c.b16 %v3145, %v3137
    %v3778 = vpack.c.b16 %v3146, %v3138
    %v3779 = vpack.c.b16 %v3147, %v3139
    %v3780 = vpack.c.b16 %v3148, %v3140
    %v3781 = vpack.c.b16 %v3149, %v3141
    %v3782 = vpack.c.b16 %v3158, %v3150
    %v3783 = vpack.c.b16 %v3159, %v3151
    %v3784 = vpack.c.b16 %v3160, %v3152
    %v3785 = vpack.c.b16 %v3161, %v3153
    %v3786 = vpack.c.b16 %v3162, %v3154
    %v3787 = vpack.c.b16 %v3163, %v3155
    %v3788 = vpack.c.b16 %v3164, %v3156
    %v3789 = vpack.c.b16 %v3165, %v3157
    %v3790 = vpack.c.b16 %v3174, %v3166
    %v3791 = vpack.c.b16 %v3175, %v3167
    %v3792 = vpack.c.b16 %v3176, %v3168
    %v3793 = vpack.c.b16 %v3177, %v3169
    %v3794 = vpack.c.b16 %v3178, %v3170
    %v3795 = vpack.c.b16 %v3179, %v3171
    %v3796 = vpack.c.b16 %v3180, %v3172
    %v3797 = vpack.c.b16 %v3181, %v3173
    %v3798 = vpack.c.b16 %v3190, %v3182
    %v3799 = vpack.c.b16 %v3191, %v3183
    %v3800 = vpack.c.b16 %v3192, %v3184
    %v3801 = vpack.c.b16 %v3193, %v3185
    %v3802 = vpack.c.b16 %v3194, %v3186
    %v3803 = vpack.c.b16 %v3195, %v3187
    %v3804 = vpack.c.b16 %v3196, %v3188
    %v3805 = vpack.c.b16 %v3197, %v3189
    %v3806 = vpack.c.b16 %v3206, %v3198
    %v3807 = vpack.c.b16 %v3207, %v3199
    %v3808 = vpack.c.b16 %v3208, %v3200
    %v3809 = vpack.c.b16 %v3209, %v3201
    %v3810 = vpack.c.b16 %v3210, %v3202
    %v3811 = vpack.c.b16 %v3211, %v3203
    %v3812 = vpack.c.b16 %v3212, %v3204
    %v3813 = vpack.c.b16 %v3213, %v3205
    %v3814 = vpack.c.b16 %v3222, %v3214
    %v3815 = vpack.c.b16 %v3223, %v3215
    %v3816 = vpack.c.b16 %v3224, %v3216
    %v3817 = vpack.c.b16 %v3225, %v3217
    %v3818 = vpack.c.b16 %v3226, %v3218
    %v3819 = vpack.c.b16 %v3227, %v3219
    %v3820 = vpack.c.b16 %v3228, %v3220
    %v3821 = vpack.c.b16 %v3229, %v3221
    %v3822 = vpack.c.b16 %v3238, %v3230
    %v3823 = vpack.c.b16 %v3239, %v3231
    %v3824 = vpack.c.b16 %v3240, %v3232
    %v3825 = vpack.c.b16 %v3241, %v3233
    %v3826 = vpack.c.b16 %v3242, %v3234
    %v3827 = vpack.c.b16 %v3243, %v3235
    %v3828 = vpack.c.b16 %v3244, %v3236
    %v3829 = vpack.c.b16 %v3245, %v3237
    %v3830 = vpack.c.b16 %v3254, %v3246
    %v3831 = vpack.c.b16 %v3255, %v3247
    %v3832 = vpack.c.b16 %v3256, %v3248
    %v3833 = vpack.c.b16 %v3257, %v3249
    %v3834 = vpack.c.b16 %v3258, %v3250
    %v3835 = vpack.c.b16 %v3259, %v3251
    %v3836 = vpack.c.b16 %v3260, %v3252
    %v3837 = vpack.c.b16 %v3261, %v3253
    %v3838 = vpack.c.b16 %v3270, %v3262
    %v3839 = vpack.c.b16 %v3271, %v3263
    %v3840 = vpack.c.b16 %v3272, %v3264
    %v3841 = vpack.c.b16 %v3273, %v3265
    %v3842 = vpack.c.b16 %v3274, %v3266
    %v3843 = vpack.c.b16 %v3275, %v3267
    %v3844 = vpack.c.b16 %v3276, %v3268
    %v3845 = vpack.c.b16 %v3277, %v3269
    %v3846 = vpack.c.b16 %v3286, %v3278
    %v3847 = vpack.c.b16 %v3287, %v3279
    %v3848 = vpack.c.b16 %v3288, %v3280
    %v3849 = vpack.c.b16 %v3289, %v3281
    %v3850 = vpack.c.b16 %v3290, %v3282
    %v3851 = vpack.c.b16 %v3291, %v3283
    %v3852 = vpack.c.b16 %v3292, %v3284
    %v3853 = vpack.c.b16 %v3293, %v3285
    %v3854 = vpack.c.b16 %v3302, %v3294
    %v3855 = vpack.c.b16 %v3303, %v3295
    %v3856 = vpack.c.b16 %v3304, %v3296
    %v3857 = vpack.c.b16 %v3305, %v3297
    %v3858 = vpack.c.b16 %v3306, %v3298
    %v3859 = vpack.c.b16 %v3307, %v3299
    %v3860 = vpack.c.b16 %v3308, %v3300
    %v3861 = vpack.c.b16 %v3309, %v3301
    %v3862 = vpack.c.b16 %v3318, %v3310
    %v3863 = vpack.c.b16 %v3319, %v3311
    %v3864 = vpack.c.b16 %v3320, %v3312
    %v3865 = vpack.c.b16 %v3321, %v3313
    %v3866 = vpack.c.b16 %v3322, %v3314
    %v3867 = vpack.c.b16 %v3323, %v3315
    %v3868 = vpack.c.b16 %v3324, %v3316
    %v3869 = vpack.c.b16 %v3325, %v3317
    %v3870 = vpack.c.b16 %v3334, %v3326
    %v3871 = vpack.c.b16 %v3335, %v3327
    %v3872 = vpack.c.b16 %v3336, %v3328
    %v3873 = vpack.c.b16 %v3337, %v3329
    %v3874 = vpack.c.b16 %v3338, %v3330
    %v3875 = vpack.c.b16 %v3339, %v3331
    %v3876 = vpack.c.b16 %v3340, %v3332
    %v3877 = vpack.c.b16 %v3341, %v3333
    %v3878 = vpack.c.b16 %v3350, %v3342
    %v3879 = vpack.c.b16 %v3351, %v3343
    %v3880 = vpack.c.b16 %v3352, %v3344
    %v3881 = vpack.c.b16 %v3353, %v3345
    %v3882 = vpack.c.b16 %v3354, %v3346
    %v3883 = vpack.c.b16 %v3355, %v3347
    %v3884 = vpack.c.b16 %v3356, %v3348
    %v3885 = vpack.c.b16 %v3357, %v3349
    %v3886 = vpack.c.b16 %v3366, %v3358
    %v3887 = vpack.c.b16 %v3367, %v3359
    %v3888 = vpack.c.b16 %v3368, %v3360
    %v3889 = vpack.c.b16 %v3369, %v3361
    %v3890 = vpack.c.b16 %v3370, %v3362
    %v3891 = vpack.c.b16 %v3371, %v3363
    %v3892 = vpack.c.b16 %v3372, %v3364
    %v3893 = vpack.c.b16 %v3373, %v3365
    %v3894 = vpack.c.b16 %v3382, %v3374
    %v3895 = vpack.c.b16 %v3383, %v3375
    %v3896 = vpack.c.b16 %v3384, %v3376
    %v3897 = vpack.c.b16 %v3385, %v3377
    %v3898 = vpack.c.b16 %v3386, %v3378
    %v3899 = vpack.c.b16 %v3387, %v3379
    %v3900 = vpack.c.b16 %v3388, %v3380
    %v3901 = vpack.c.b16 %v3389, %v3381
    %4414 = vmatpush.bf16.msra.mxu0 %v3446
    %4415 = vmatpush.bf16.msra.mxu0 %v3438
    %4416 = vmatpush.bf16.msra.mxu0 %v3430
    %4417 = vmatpush.bf16.msra.mxu0 %v3422
    %4418 = vmatpush.bf16.msra.mxu0 %v3414
    %4419 = vmatpush.bf16.msra.mxu0 %v3406
    %4420 = vmatpush.bf16.msra.mxu0 %v3398
    %4421 = vmatpush.bf16.msra.mxu0 %v3390
    %4422 = vmatmul.bf16.gmra.mxu0 %v1316
    %v4423 = vpop.f32.mrf.mxu0
    %v4424 = vadd.f32 %v1838, %v4423
    %v4425 = vpop.f32.mrf.mxu0
    %4426 = vdwg.mxu0
    %4427 = vmatpush.bf16.msra.mxu0 %v3510
    %4428 = vmatpush.bf16.msra.mxu0 %v3502
    %4429 = vmatpush.bf16.msra.mxu0 %v3494
    %4430 = vmatpush.bf16.msra.mxu0 %v3486
    %4431 = vmatpush.bf16.msra.mxu0 %v3478
    %4432 = vmatpush.bf16.msra.mxu0 %v3470
    %4433 = vmatpush.bf16.msra.mxu0 %v3462
    %4434 = vmatpush.bf16.msra.mxu0 %v3454
    %4435 = vmatmul.bf16.gmra.mxu0 %v1317
    %v4436 = vpop.f32.mrf.mxu0
    %v4437 = vadd.f32 %v4424, %v4436
    %v4438 = vpop.f32.mrf.mxu0
    %4439 = vdwg.mxu0
    %4440 = vmatpush.bf16.msra.mxu0 %v3574
    %4441 = vmatpush.bf16.msra.mxu0 %v3566
    %4442 = vmatpush.bf16.msra.mxu0 %v3558
    %4443 = vmatpush.bf16.msra.mxu0 %v3550
    %4444 = vmatpush.bf16.msra.mxu0 %v3542
    %4445 = vmatpush.bf16.msra.mxu0 %v3534
    %4446 = vmatpush.bf16.msra.mxu0 %v3526
    %4447 = vmatpush.bf16.msra.mxu0 %v3518
    %4448 = vmatmul.bf16.gmra.mxu0 %v1318
    %v4449 = vpop.f32.mrf.mxu0
    %v4450 = vadd.f32 %v4437, %v4449
    %v4451 = vpop.f32.mrf.mxu0
    %4452 = vdwg.mxu0
    %4453 = vmatpush.bf16.msra.mxu0 %v3638
    %4454 = vmatpush.bf16.msra.mxu0 %v3630
    %4455 = vmatpush.bf16.msra.mxu0 %v3622
    %4456 = vmatpush.bf16.msra.mxu0 %v3614
    %4457 = vmatpush.bf16.msra.mxu0 %v3606
    %4458 = vmatpush.bf16.msra.mxu0 %v3598
    %4459 = vmatpush.bf16.msra.mxu0 %v3590
    %4460 = vmatpush.bf16.msra.mxu0 %v3582
    %4461 = vmatmul.bf16.gmra.mxu0 %v1319
    %v4462 = vpop.f32.mrf.mxu0
    %v4463 = vadd.f32 %v4450, %v4462
    %v4464 = vpop.f32.mrf.mxu0
    %4465 = vdwg.mxu0
    %4466 = vmatpush.bf16.msra.mxu0 %v3702
    %4467 = vmatpush.bf16.msra.mxu0 %v3694
    %4468 = vmatpush.bf16.msra.mxu0 %v3686
    %4469 = vmatpush.bf16.msra.mxu0 %v3678
    %4470 = vmatpush.bf16.msra.mxu0 %v3670
    %4471 = vmatpush.bf16.msra.mxu0 %v3662
    %4472 = vmatpush.bf16.msra.mxu0 %v3654
    %4473 = vmatpush.bf16.msra.mxu0 %v3646
    %4474 = vmatmul.bf16.gmra.mxu0 %v1320
    %v4475 = vpop.f32.mrf.mxu0
    %v4476 = vadd.f32 %v4463, %v4475
    %v4477 = vpop.f32.mrf.mxu0
    %4478 = vdwg.mxu0
    %4479 = vmatpush.bf16.msra.mxu0 %v3766
    %4480 = vmatpush.bf16.msra.mxu0 %v3758
    %4481 = vmatpush.bf16.msra.mxu0 %v3750
    %4482 = vmatpush.bf16.msra.mxu0 %v3742
    %4483 = vmatpush.bf16.msra.mxu0 %v3734
    %4484 = vmatpush.bf16.msra.mxu0 %v3726
    %4485 = vmatpush.bf16.msra.mxu0 %v3718
    %4486 = vmatpush.bf16.msra.mxu0 %v3710
    %4487 = vmatmul.bf16.gmra.mxu0 %v1321
    %v4488 = vpop.f32.mrf.mxu0
    %v4489 = vadd.f32 %v4476, %v4488
    %v4490 = vpop.f32.mrf.mxu0
    %4491 = vdwg.mxu0
    %4492 = vmatpush.bf16.msra.mxu0 %v3830
    %4493 = vmatpush.bf16.msra.mxu0 %v3822
    %4494 = vmatpush.bf16.msra.mxu0 %v3814
    %4495 = vmatpush.bf16.msra.mxu0 %v3806
    %4496 = vmatpush.bf16.msra.mxu0 %v3798
    %4497 = vmatpush.bf16.msra.mxu0 %v3790
    %4498 = vmatpush.bf16.msra.mxu0 %v3782
    %4499 = vmatpush.bf16.msra.mxu0 %v3774
    %4500 = vmatmul.bf16.gmra.mxu0 %v1322
    %v4501 = vpop.f32.mrf.mxu0
    %v4502 = vadd.f32 %v4489, %v4501
    %v4503 = vpop.f32.mrf.mxu0
    %4504 = vdwg.mxu0
    %4505 = vmatpush.bf16.msra.mxu0 %v3894
    %4506 = vmatpush.bf16.msra.mxu0 %v3886
    %4507 = vmatpush.bf16.msra.mxu0 %v3878
    %4508 = vmatpush.bf16.msra.mxu0 %v3870
    %4509 = vmatpush.bf16.msra.mxu0 %v3862
    %4510 = vmatpush.bf16.msra.mxu0 %v3854
    %4511 = vmatpush.bf16.msra.mxu0 %v3846
    %4512 = vmatpush.bf16.msra.mxu0 %v3838
    %4513 = vmatmul.bf16.gmra.mxu0 %v1323
    %v4514 = vpop.f32.mrf.mxu0
    %v4515 = vadd.f32 %v4502, %v4514
    %v4516 = vpop.f32.mrf.mxu0
    %4517 = vdwg.mxu0
    %4518 = vmatpush.bf16.msra.mxu0 %v3447
    %4519 = vmatpush.bf16.msra.mxu0 %v3439
    %4520 = vmatpush.bf16.msra.mxu0 %v3431
    %4521 = vmatpush.bf16.msra.mxu0 %v3423
    %4522 = vmatpush.bf16.msra.mxu0 %v3415
    %4523 = vmatpush.bf16.msra.mxu0 %v3407
    %4524 = vmatpush.bf16.msra.mxu0 %v3399
    %4525 = vmatpush.bf16.msra.mxu0 %v3391
    %4526 = vmatmul.bf16.gmra.mxu0 %v1316
    %v4527 = vpop.f32.mrf.mxu0
    %v4528 = vadd.f32 %v1839, %v4527
    %v4529 = vpop.f32.mrf.mxu0
    %4530 = vdwg.mxu0
    %4531 = vmatpush.bf16.msra.mxu0 %v3511
    %4532 = vmatpush.bf16.msra.mxu0 %v3503
    %4533 = vmatpush.bf16.msra.mxu0 %v3495
    %4534 = vmatpush.bf16.msra.mxu0 %v3487
    %4535 = vmatpush.bf16.msra.mxu0 %v3479
    %4536 = vmatpush.bf16.msra.mxu0 %v3471
    %4537 = vmatpush.bf16.msra.mxu0 %v3463
    %4538 = vmatpush.bf16.msra.mxu0 %v3455
    %4539 = vmatmul.bf16.gmra.mxu0 %v1317
    %v4540 = vpop.f32.mrf.mxu0
    %v4541 = vadd.f32 %v4528, %v4540
    %v4542 = vpop.f32.mrf.mxu0
    %4543 = vdwg.mxu0
    %4544 = vmatpush.bf16.msra.mxu0 %v3575
    %4545 = vmatpush.bf16.msra.mxu0 %v3567
    %4546 = vmatpush.bf16.msra.mxu0 %v3559
    %4547 = vmatpush.bf16.msra.mxu0 %v3551
    %4548 = vmatpush.bf16.msra.mxu0 %v3543
    %4549 = vmatpush.bf16.msra.mxu0 %v3535
    %4550 = vmatpush.bf16.msra.mxu0 %v3527
    %4551 = vmatpush.bf16.msra.mxu0 %v3519
    %4552 = vmatmul.bf16.gmra.mxu0 %v1318
    %v4553 = vpop.f32.mrf.mxu0
    %v4554 = vadd.f32 %v4541, %v4553
    %v4555 = vpop.f32.mrf.mxu0
    %4556 = vdwg.mxu0
    %4557 = vmatpush.bf16.msra.mxu0 %v3639
    %4558 = vmatpush.bf16.msra.mxu0 %v3631
    %4559 = vmatpush.bf16.msra.mxu0 %v3623
    %4560 = vmatpush.bf16.msra.mxu0 %v3615
    %4561 = vmatpush.bf16.msra.mxu0 %v3607
    %4562 = vmatpush.bf16.msra.mxu0 %v3599
    %4563 = vmatpush.bf16.msra.mxu0 %v3591
    %4564 = vmatpush.bf16.msra.mxu0 %v3583
    %4565 = vmatmul.bf16.gmra.mxu0 %v1319
    %v4566 = vpop.f32.mrf.mxu0
    %v4567 = vadd.f32 %v4554, %v4566
    %v4568 = vpop.f32.mrf.mxu0
    %4569 = vdwg.mxu0
    %4570 = vmatpush.bf16.msra.mxu0 %v3703
    %4571 = vmatpush.bf16.msra.mxu0 %v3695
    %4572 = vmatpush.bf16.msra.mxu0 %v3687
    %4573 = vmatpush.bf16.msra.mxu0 %v3679
    %4574 = vmatpush.bf16.msra.mxu0 %v3671
    %4575 = vmatpush.bf16.msra.mxu0 %v3663
    %4576 = vmatpush.bf16.msra.mxu0 %v3655
    %4577 = vmatpush.bf16.msra.mxu0 %v3647
    %4578 = vmatmul.bf16.gmra.mxu0 %v1320
    %v4579 = vpop.f32.mrf.mxu0
    %v4580 = vadd.f32 %v4567, %v4579
    %v4581 = vpop.f32.mrf.mxu0
    %4582 = vdwg.mxu0
    %4583 = vmatpush.bf16.msra.mxu0 %v3767
    %4584 = vmatpush.bf16.msra.mxu0 %v3759
    %4585 = vmatpush.bf16.msra.mxu0 %v3751
    %4586 = vmatpush.bf16.msra.mxu0 %v3743
    %4587 = vmatpush.bf16.msra.mxu0 %v3735
    %4588 = vmatpush.bf16.msra.mxu0 %v3727
    %4589 = vmatpush.bf16.msra.mxu0 %v3719
    %4590 = vmatpush.bf16.msra.mxu0 %v3711
    %4591 = vmatmul.bf16.gmra.mxu0 %v1321
    %v4592 = vpop.f32.mrf.mxu0
    %v4593 = vadd.f32 %v4580, %v4592
    %v4594 = vpop.f32.mrf.mxu0
    %4595 = vdwg.mxu0
    %4596 = vmatpush.bf16.msra.mxu0 %v3831
    %4597 = vmatpush.bf16.msra.mxu0 %v3823
    %4598 = vmatpush.bf16.msra.mxu0 %v3815
    %4599 = vmatpush.bf16.msra.mxu0 %v3807
    %4600 = vmatpush.bf16.msra.mxu0 %v3799
    %4601 = vmatpush.bf16.msra.mxu0 %v3791
    %4602 = vmatpush.bf16.msra.mxu0 %v3783
    %4603 = vmatpush.bf16.msra.mxu0 %v3775
    %4604 = vmatmul.bf16.gmra.mxu0 %v1322
    %v4605 = vpop.f32.mrf.mxu0
    %v4606 = vadd.f32 %v4593, %v4605
    %v4607 = vpop.f32.mrf.mxu0
    %4608 = vdwg.mxu0
    %4609 = vmatpush.bf16.msra.mxu0 %v3895
    %4610 = vmatpush.bf16.msra.mxu0 %v3887
    %4611 = vmatpush.bf16.msra.mxu0 %v3879
    %4612 = vmatpush.bf16.msra.mxu0 %v3871
    %4613 = vmatpush.bf16.msra.mxu0 %v3863
    %4614 = vmatpush.bf16.msra.mxu0 %v3855
    %4615 = vmatpush.bf16.msra.mxu0 %v3847
    %4616 = vmatpush.bf16.msra.mxu0 %v3839
    %4617 = vmatmul.bf16.gmra.mxu0 %v1323
    %v4618 = vpop.f32.mrf.mxu0
    %v4619 = vadd.f32 %v4606, %v4618
    %v4620 = vpop.f32.mrf.mxu0
    %4621 = vdwg.mxu0
    %4622 = vmatpush.bf16.msra.mxu0 %v3448
    %4623 = vmatpush.bf16.msra.mxu0 %v3440
    %4624 = vmatpush.bf16.msra.mxu0 %v3432
    %4625 = vmatpush.bf16.msra.mxu0 %v3424
    %4626 = vmatpush.bf16.msra.mxu0 %v3416
    %4627 = vmatpush.bf16.msra.mxu0 %v3408
    %4628 = vmatpush.bf16.msra.mxu0 %v3400
    %4629 = vmatpush.bf16.msra.mxu0 %v3392
    %4630 = vmatmul.bf16.gmra.mxu0 %v1316
    %v4631 = vpop.f32.mrf.mxu0
    %v4632 = vadd.f32 %v1840, %v4631
    %v4633 = vpop.f32.mrf.mxu0
    %4634 = vdwg.mxu0
    %4635 = vmatpush.bf16.msra.mxu0 %v3512
    %4636 = vmatpush.bf16.msra.mxu0 %v3504
    %4637 = vmatpush.bf16.msra.mxu0 %v3496
    %4638 = vmatpush.bf16.msra.mxu0 %v3488
    %4639 = vmatpush.bf16.msra.mxu0 %v3480
    %4640 = vmatpush.bf16.msra.mxu0 %v3472
    %4641 = vmatpush.bf16.msra.mxu0 %v3464
    %4642 = vmatpush.bf16.msra.mxu0 %v3456
    %4643 = vmatmul.bf16.gmra.mxu0 %v1317
    %v4644 = vpop.f32.mrf.mxu0
    %v4645 = vadd.f32 %v4632, %v4644
    %v4646 = vpop.f32.mrf.mxu0
    %4647 = vdwg.mxu0
    %4648 = vmatpush.bf16.msra.mxu0 %v3576
    %4649 = vmatpush.bf16.msra.mxu0 %v3568
    %4650 = vmatpush.bf16.msra.mxu0 %v3560
    %4651 = vmatpush.bf16.msra.mxu0 %v3552
    %4652 = vmatpush.bf16.msra.mxu0 %v3544
    %4653 = vmatpush.bf16.msra.mxu0 %v3536
    %4654 = vmatpush.bf16.msra.mxu0 %v3528
    %4655 = vmatpush.bf16.msra.mxu0 %v3520
    %4656 = vmatmul.bf16.gmra.mxu0 %v1318
    %v4657 = vpop.f32.mrf.mxu0
    %v4658 = vadd.f32 %v4645, %v4657
    %v4659 = vpop.f32.mrf.mxu0
    %4660 = vdwg.mxu0
    %4661 = vmatpush.bf16.msra.mxu0 %v3640
    %4662 = vmatpush.bf16.msra.mxu0 %v3632
    %4663 = vmatpush.bf16.msra.mxu0 %v3624
    %4664 = vmatpush.bf16.msra.mxu0 %v3616
    %4665 = vmatpush.bf16.msra.mxu0 %v3608
    %4666 = vmatpush.bf16.msra.mxu0 %v3600
    %4667 = vmatpush.bf16.msra.mxu0 %v3592
    %4668 = vmatpush.bf16.msra.mxu0 %v3584
    %4669 = vmatmul.bf16.gmra.mxu0 %v1319
    %v4670 = vpop.f32.mrf.mxu0
    %v4671 = vadd.f32 %v4658, %v4670
    %v4672 = vpop.f32.mrf.mxu0
    %4673 = vdwg.mxu0
    %4674 = vmatpush.bf16.msra.mxu0 %v3704
    %4675 = vmatpush.bf16.msra.mxu0 %v3696
    %4676 = vmatpush.bf16.msra.mxu0 %v3688
    %4677 = vmatpush.bf16.msra.mxu0 %v3680
    %4678 = vmatpush.bf16.msra.mxu0 %v3672
    %4679 = vmatpush.bf16.msra.mxu0 %v3664
    %4680 = vmatpush.bf16.msra.mxu0 %v3656
    %4681 = vmatpush.bf16.msra.mxu0 %v3648
    %4682 = vmatmul.bf16.gmra.mxu0 %v1320
    %v4683 = vpop.f32.mrf.mxu0
    %v4684 = vadd.f32 %v4671, %v4683
    %v4685 = vpop.f32.mrf.mxu0
    %4686 = vdwg.mxu0
    %4687 = vmatpush.bf16.msra.mxu0 %v3768
    %4688 = vmatpush.bf16.msra.mxu0 %v3760
    %4689 = vmatpush.bf16.msra.mxu0 %v3752
    %4690 = vmatpush.bf16.msra.mxu0 %v3744
    %4691 = vmatpush.bf16.msra.mxu0 %v3736
    %4692 = vmatpush.bf16.msra.mxu0 %v3728
    %4693 = vmatpush.bf16.msra.mxu0 %v3720
    %4694 = vmatpush.bf16.msra.mxu0 %v3712
    %4695 = vmatmul.bf16.gmra.mxu0 %v1321
    %v4696 = vpop.f32.mrf.mxu0
    %v4697 = vadd.f32 %v4684, %v4696
    %v4698 = vpop.f32.mrf.mxu0
    %4699 = vdwg.mxu0
    %4700 = vmatpush.bf16.msra.mxu0 %v3832
    %4701 = vmatpush.bf16.msra.mxu0 %v3824
    %4702 = vmatpush.bf16.msra.mxu0 %v3816
    %4703 = vmatpush.bf16.msra.mxu0 %v3808
    %4704 = vmatpush.bf16.msra.mxu0 %v3800
    %4705 = vmatpush.bf16.msra.mxu0 %v3792
    %4706 = vmatpush.bf16.msra.mxu0 %v3784
    %4707 = vmatpush.bf16.msra.mxu0 %v3776
    %4708 = vmatmul.bf16.gmra.mxu0 %v1322
    %v4709 = vpop.f32.mrf.mxu0
    %v4710 = vadd.f32 %v4697, %v4709
    %v4711 = vpop.f32.mrf.mxu0
    %4712 = vdwg.mxu0
    %4713 = vmatpush.bf16.msra.mxu0 %v3896
    %4714 = vmatpush.bf16.msra.mxu0 %v3888
    %4715 = vmatpush.bf16.msra.mxu0 %v3880
    %4716 = vmatpush.bf16.msra.mxu0 %v3872
    %4717 = vmatpush.bf16.msra.mxu0 %v3864
    %4718 = vmatpush.bf16.msra.mxu0 %v3856
    %4719 = vmatpush.bf16.msra.mxu0 %v3848
    %4720 = vmatpush.bf16.msra.mxu0 %v3840
    %4721 = vmatmul.bf16.gmra.mxu0 %v1323
    %v4722 = vpop.f32.mrf.mxu0
    %v4723 = vadd.f32 %v4710, %v4722
    %v4724 = vpop.f32.mrf.mxu0
    %4725 = vdwg.mxu0
    %4726 = vmatpush.bf16.msra.mxu0 %v3449
    %4727 = vmatpush.bf16.msra.mxu0 %v3441
    %4728 = vmatpush.bf16.msra.mxu0 %v3433
    %4729 = vmatpush.bf16.msra.mxu0 %v3425
    %4730 = vmatpush.bf16.msra.mxu0 %v3417
    %4731 = vmatpush.bf16.msra.mxu0 %v3409
    %4732 = vmatpush.bf16.msra.mxu0 %v3401
    %4733 = vmatpush.bf16.msra.mxu0 %v3393
    %4734 = vmatmul.bf16.gmra.mxu0 %v1316
    %v4735 = vpop.f32.mrf.mxu0
    %v4736 = vadd.f32 %v1841, %v4735
    %v4737 = vpop.f32.mrf.mxu0
    %4738 = vdwg.mxu0
    %4739 = vmatpush.bf16.msra.mxu0 %v3513
    %4740 = vmatpush.bf16.msra.mxu0 %v3505
    %4741 = vmatpush.bf16.msra.mxu0 %v3497
    %4742 = vmatpush.bf16.msra.mxu0 %v3489
    %4743 = vmatpush.bf16.msra.mxu0 %v3481
    %4744 = vmatpush.bf16.msra.mxu0 %v3473
    %4745 = vmatpush.bf16.msra.mxu0 %v3465
    %4746 = vmatpush.bf16.msra.mxu0 %v3457
    %4747 = vmatmul.bf16.gmra.mxu0 %v1317
    %v4748 = vpop.f32.mrf.mxu0
    %v4749 = vadd.f32 %v4736, %v4748
    %v4750 = vpop.f32.mrf.mxu0
    %4751 = vdwg.mxu0
    %4752 = vmatpush.bf16.msra.mxu0 %v3577
    %4753 = vmatpush.bf16.msra.mxu0 %v3569
    %4754 = vmatpush.bf16.msra.mxu0 %v3561
    %4755 = vmatpush.bf16.msra.mxu0 %v3553
    %4756 = vmatpush.bf16.msra.mxu0 %v3545
    %4757 = vmatpush.bf16.msra.mxu0 %v3537
    %4758 = vmatpush.bf16.msra.mxu0 %v3529
    %4759 = vmatpush.bf16.msra.mxu0 %v3521
    %4760 = vmatmul.bf16.gmra.mxu0 %v1318
    %v4761 = vpop.f32.mrf.mxu0
    %v4762 = vadd.f32 %v4749, %v4761
    %v4763 = vpop.f32.mrf.mxu0
    %4764 = vdwg.mxu0
    %4765 = vmatpush.bf16.msra.mxu0 %v3641
    %4766 = vmatpush.bf16.msra.mxu0 %v3633
    %4767 = vmatpush.bf16.msra.mxu0 %v3625
    %4768 = vmatpush.bf16.msra.mxu0 %v3617
    %4769 = vmatpush.bf16.msra.mxu0 %v3609
    %4770 = vmatpush.bf16.msra.mxu0 %v3601
    %4771 = vmatpush.bf16.msra.mxu0 %v3593
    %4772 = vmatpush.bf16.msra.mxu0 %v3585
    %4773 = vmatmul.bf16.gmra.mxu0 %v1319
    %v4774 = vpop.f32.mrf.mxu0
    %v4775 = vadd.f32 %v4762, %v4774
    %v4776 = vpop.f32.mrf.mxu0
    %4777 = vdwg.mxu0
    %4778 = vmatpush.bf16.msra.mxu0 %v3705
    %4779 = vmatpush.bf16.msra.mxu0 %v3697
    %4780 = vmatpush.bf16.msra.mxu0 %v3689
    %4781 = vmatpush.bf16.msra.mxu0 %v3681
    %4782 = vmatpush.bf16.msra.mxu0 %v3673
    %4783 = vmatpush.bf16.msra.mxu0 %v3665
    %4784 = vmatpush.bf16.msra.mxu0 %v3657
    %4785 = vmatpush.bf16.msra.mxu0 %v3649
    %4786 = vmatmul.bf16.gmra.mxu0 %v1320
    %v4787 = vpop.f32.mrf.mxu0
    %v4788 = vadd.f32 %v4775, %v4787
    %v4789 = vpop.f32.mrf.mxu0
    %4790 = vdwg.mxu0
    %4791 = vmatpush.bf16.msra.mxu0 %v3769
    %4792 = vmatpush.bf16.msra.mxu0 %v3761
    %4793 = vmatpush.bf16.msra.mxu0 %v3753
    %4794 = vmatpush.bf16.msra.mxu0 %v3745
    %4795 = vmatpush.bf16.msra.mxu0 %v3737
    %4796 = vmatpush.bf16.msra.mxu0 %v3729
    %4797 = vmatpush.bf16.msra.mxu0 %v3721
    %4798 = vmatpush.bf16.msra.mxu0 %v3713
    %4799 = vmatmul.bf16.gmra.mxu0 %v1321
    %v4800 = vpop.f32.mrf.mxu0
    %v4801 = vadd.f32 %v4788, %v4800
    %v4802 = vpop.f32.mrf.mxu0
    %4803 = vdwg.mxu0
    %4804 = vmatpush.bf16.msra.mxu0 %v3833
    %4805 = vmatpush.bf16.msra.mxu0 %v3825
    %4806 = vmatpush.bf16.msra.mxu0 %v3817
    %4807 = vmatpush.bf16.msra.mxu0 %v3809
    %4808 = vmatpush.bf16.msra.mxu0 %v3801
    %4809 = vmatpush.bf16.msra.mxu0 %v3793
    %4810 = vmatpush.bf16.msra.mxu0 %v3785
    %4811 = vmatpush.bf16.msra.mxu0 %v3777
    %4812 = vmatmul.bf16.gmra.mxu0 %v1322
    %v4813 = vpop.f32.mrf.mxu0
    %v4814 = vadd.f32 %v4801, %v4813
    %v4815 = vpop.f32.mrf.mxu0
    %4816 = vdwg.mxu0
    %4817 = vmatpush.bf16.msra.mxu0 %v3897
    %4818 = vmatpush.bf16.msra.mxu0 %v3889
    %4819 = vmatpush.bf16.msra.mxu0 %v3881
    %4820 = vmatpush.bf16.msra.mxu0 %v3873
    %4821 = vmatpush.bf16.msra.mxu0 %v3865
    %4822 = vmatpush.bf16.msra.mxu0 %v3857
    %4823 = vmatpush.bf16.msra.mxu0 %v3849
    %4824 = vmatpush.bf16.msra.mxu0 %v3841
    %4825 = vmatmul.bf16.gmra.mxu0 %v1323
    %v4826 = vpop.f32.mrf.mxu0
    %v4827 = vadd.f32 %v4814, %v4826
    %v4828 = vpop.f32.mrf.mxu0
    %4829 = vdwg.mxu0
    %4830 = vmatpush.bf16.msra.mxu0 %v3450
    %4831 = vmatpush.bf16.msra.mxu0 %v3442
    %4832 = vmatpush.bf16.msra.mxu0 %v3434
    %4833 = vmatpush.bf16.msra.mxu0 %v3426
    %4834 = vmatpush.bf16.msra.mxu0 %v3418
    %4835 = vmatpush.bf16.msra.mxu0 %v3410
    %4836 = vmatpush.bf16.msra.mxu0 %v3402
    %4837 = vmatpush.bf16.msra.mxu0 %v3394
    %4838 = vmatmul.bf16.gmra.mxu0 %v1316
    %v4839 = vpop.f32.mrf.mxu0
    %v4840 = vadd.f32 %v1842, %v4839
    %v4841 = vpop.f32.mrf.mxu0
    %4842 = vdwg.mxu0
    %4843 = vmatpush.bf16.msra.mxu0 %v3514
    %4844 = vmatpush.bf16.msra.mxu0 %v3506
    %4845 = vmatpush.bf16.msra.mxu0 %v3498
    %4846 = vmatpush.bf16.msra.mxu0 %v3490
    %4847 = vmatpush.bf16.msra.mxu0 %v3482
    %4848 = vmatpush.bf16.msra.mxu0 %v3474
    %4849 = vmatpush.bf16.msra.mxu0 %v3466
    %4850 = vmatpush.bf16.msra.mxu0 %v3458
    %4851 = vmatmul.bf16.gmra.mxu0 %v1317
    %v4852 = vpop.f32.mrf.mxu0
    %v4853 = vadd.f32 %v4840, %v4852
    %v4854 = vpop.f32.mrf.mxu0
    %4855 = vdwg.mxu0
    %4856 = vmatpush.bf16.msra.mxu0 %v3578
    %4857 = vmatpush.bf16.msra.mxu0 %v3570
    %4858 = vmatpush.bf16.msra.mxu0 %v3562
    %4859 = vmatpush.bf16.msra.mxu0 %v3554
    %4860 = vmatpush.bf16.msra.mxu0 %v3546
    %4861 = vmatpush.bf16.msra.mxu0 %v3538
    %4862 = vmatpush.bf16.msra.mxu0 %v3530
    %4863 = vmatpush.bf16.msra.mxu0 %v3522
    %4864 = vmatmul.bf16.gmra.mxu0 %v1318
    %v4865 = vpop.f32.mrf.mxu0
    %v4866 = vadd.f32 %v4853, %v4865
    %v4867 = vpop.f32.mrf.mxu0
    %4868 = vdwg.mxu0
    %4869 = vmatpush.bf16.msra.mxu0 %v3642
    %4870 = vmatpush.bf16.msra.mxu0 %v3634
    %4871 = vmatpush.bf16.msra.mxu0 %v3626
    %4872 = vmatpush.bf16.msra.mxu0 %v3618
    %4873 = vmatpush.bf16.msra.mxu0 %v3610
    %4874 = vmatpush.bf16.msra.mxu0 %v3602
    %4875 = vmatpush.bf16.msra.mxu0 %v3594
    %4876 = vmatpush.bf16.msra.mxu0 %v3586
    %4877 = vmatmul.bf16.gmra.mxu0 %v1319
    %v4878 = vpop.f32.mrf.mxu0
    %v4879 = vadd.f32 %v4866, %v4878
    %v4880 = vpop.f32.mrf.mxu0
    %4881 = vdwg.mxu0
    %4882 = vmatpush.bf16.msra.mxu0 %v3706
    %4883 = vmatpush.bf16.msra.mxu0 %v3698
    %4884 = vmatpush.bf16.msra.mxu0 %v3690
    %4885 = vmatpush.bf16.msra.mxu0 %v3682
    %4886 = vmatpush.bf16.msra.mxu0 %v3674
    %4887 = vmatpush.bf16.msra.mxu0 %v3666
    %4888 = vmatpush.bf16.msra.mxu0 %v3658
    %4889 = vmatpush.bf16.msra.mxu0 %v3650
    %4890 = vmatmul.bf16.gmra.mxu0 %v1320
    %v4891 = vpop.f32.mrf.mxu0
    %v4892 = vadd.f32 %v4879, %v4891
    %v4893 = vpop.f32.mrf.mxu0
    %4894 = vdwg.mxu0
    %4895 = vmatpush.bf16.msra.mxu0 %v3770
    %4896 = vmatpush.bf16.msra.mxu0 %v3762
    %4897 = vmatpush.bf16.msra.mxu0 %v3754
    %4898 = vmatpush.bf16.msra.mxu0 %v3746
    %4899 = vmatpush.bf16.msra.mxu0 %v3738
    %4900 = vmatpush.bf16.msra.mxu0 %v3730
    %4901 = vmatpush.bf16.msra.mxu0 %v3722
    %4902 = vmatpush.bf16.msra.mxu0 %v3714
    %4903 = vmatmul.bf16.gmra.mxu0 %v1321
    %v4904 = vpop.f32.mrf.mxu0
    %v4905 = vadd.f32 %v4892, %v4904
    %v4906 = vpop.f32.mrf.mxu0
    %4907 = vdwg.mxu0
    %4908 = vmatpush.bf16.msra.mxu0 %v3834
    %4909 = vmatpush.bf16.msra.mxu0 %v3826
    %4910 = vmatpush.bf16.msra.mxu0 %v3818
    %4911 = vmatpush.bf16.msra.mxu0 %v3810
    %4912 = vmatpush.bf16.msra.mxu0 %v3802
    %4913 = vmatpush.bf16.msra.mxu0 %v3794
    %4914 = vmatpush.bf16.msra.mxu0 %v3786
    %4915 = vmatpush.bf16.msra.mxu0 %v3778
    %4916 = vmatmul.bf16.gmra.mxu0 %v1322
    %v4917 = vpop.f32.mrf.mxu0
    %v4918 = vadd.f32 %v4905, %v4917
    %v4919 = vpop.f32.mrf.mxu0
    %4920 = vdwg.mxu0
    %4921 = vmatpush.bf16.msra.mxu0 %v3898
    %4922 = vmatpush.bf16.msra.mxu0 %v3890
    %4923 = vmatpush.bf16.msra.mxu0 %v3882
    %4924 = vmatpush.bf16.msra.mxu0 %v3874
    %4925 = vmatpush.bf16.msra.mxu0 %v3866
    %4926 = vmatpush.bf16.msra.mxu0 %v3858
    %4927 = vmatpush.bf16.msra.mxu0 %v3850
    %4928 = vmatpush.bf16.msra.mxu0 %v3842
    %4929 = vmatmul.bf16.gmra.mxu0 %v1323
    %v4930 = vpop.f32.mrf.mxu0
    %v4931 = vadd.f32 %v4918, %v4930
    %v4932 = vpop.f32.mrf.mxu0
    %4933 = vdwg.mxu0
    %4934 = vmatpush.bf16.msra.mxu0 %v3451
    %4935 = vmatpush.bf16.msra.mxu0 %v3443
    %4936 = vmatpush.bf16.msra.mxu0 %v3435
    %4937 = vmatpush.bf16.msra.mxu0 %v3427
    %4938 = vmatpush.bf16.msra.mxu0 %v3419
    %4939 = vmatpush.bf16.msra.mxu0 %v3411
    %4940 = vmatpush.bf16.msra.mxu0 %v3403
    %4941 = vmatpush.bf16.msra.mxu0 %v3395
    %4942 = vmatmul.bf16.gmra.mxu0 %v1316
    %v4943 = vpop.f32.mrf.mxu0
    %v4944 = vadd.f32 %v1843, %v4943
    %v4945 = vpop.f32.mrf.mxu0
    %4946 = vdwg.mxu0
    %4947 = vmatpush.bf16.msra.mxu0 %v3515
    %4948 = vmatpush.bf16.msra.mxu0 %v3507
    %4949 = vmatpush.bf16.msra.mxu0 %v3499
    %4950 = vmatpush.bf16.msra.mxu0 %v3491
    %4951 = vmatpush.bf16.msra.mxu0 %v3483
    %4952 = vmatpush.bf16.msra.mxu0 %v3475
    %4953 = vmatpush.bf16.msra.mxu0 %v3467
    %4954 = vmatpush.bf16.msra.mxu0 %v3459
    %4955 = vmatmul.bf16.gmra.mxu0 %v1317
    %v4956 = vpop.f32.mrf.mxu0
    %v4957 = vadd.f32 %v4944, %v4956
    %v4958 = vpop.f32.mrf.mxu0
    %4959 = vdwg.mxu0
    %4960 = vmatpush.bf16.msra.mxu0 %v3579
    %4961 = vmatpush.bf16.msra.mxu0 %v3571
    %4962 = vmatpush.bf16.msra.mxu0 %v3563
    %4963 = vmatpush.bf16.msra.mxu0 %v3555
    %4964 = vmatpush.bf16.msra.mxu0 %v3547
    %4965 = vmatpush.bf16.msra.mxu0 %v3539
    %4966 = vmatpush.bf16.msra.mxu0 %v3531
    %4967 = vmatpush.bf16.msra.mxu0 %v3523
    %4968 = vmatmul.bf16.gmra.mxu0 %v1318
    %v4969 = vpop.f32.mrf.mxu0
    %v4970 = vadd.f32 %v4957, %v4969
    %v4971 = vpop.f32.mrf.mxu0
    %4972 = vdwg.mxu0
    %4973 = vmatpush.bf16.msra.mxu0 %v3643
    %4974 = vmatpush.bf16.msra.mxu0 %v3635
    %4975 = vmatpush.bf16.msra.mxu0 %v3627
    %4976 = vmatpush.bf16.msra.mxu0 %v3619
    %4977 = vmatpush.bf16.msra.mxu0 %v3611
    %4978 = vmatpush.bf16.msra.mxu0 %v3603
    %4979 = vmatpush.bf16.msra.mxu0 %v3595
    %4980 = vmatpush.bf16.msra.mxu0 %v3587
    %4981 = vmatmul.bf16.gmra.mxu0 %v1319
    %v4982 = vpop.f32.mrf.mxu0
    %v4983 = vadd.f32 %v4970, %v4982
    %v4984 = vpop.f32.mrf.mxu0
    %4985 = vdwg.mxu0
    %4986 = vmatpush.bf16.msra.mxu0 %v3707
    %4987 = vmatpush.bf16.msra.mxu0 %v3699
    %4988 = vmatpush.bf16.msra.mxu0 %v3691
    %4989 = vmatpush.bf16.msra.mxu0 %v3683
    %4990 = vmatpush.bf16.msra.mxu0 %v3675
    %4991 = vmatpush.bf16.msra.mxu0 %v3667
    %4992 = vmatpush.bf16.msra.mxu0 %v3659
    %4993 = vmatpush.bf16.msra.mxu0 %v3651
    %4994 = vmatmul.bf16.gmra.mxu0 %v1320
    %v4995 = vpop.f32.mrf.mxu0
    %v4996 = vadd.f32 %v4983, %v4995
    %v4997 = vpop.f32.mrf.mxu0
    %4998 = vdwg.mxu0
    %4999 = vmatpush.bf16.msra.mxu0 %v3771
    %5000 = vmatpush.bf16.msra.mxu0 %v3763
    %5001 = vmatpush.bf16.msra.mxu0 %v3755
    %5002 = vmatpush.bf16.msra.mxu0 %v3747
    %5003 = vmatpush.bf16.msra.mxu0 %v3739
    %5004 = vmatpush.bf16.msra.mxu0 %v3731
    %5005 = vmatpush.bf16.msra.mxu0 %v3723
    %5006 = vmatpush.bf16.msra.mxu0 %v3715
    %5007 = vmatmul.bf16.gmra.mxu0 %v1321
    %v5008 = vpop.f32.mrf.mxu0
    %v5009 = vadd.f32 %v4996, %v5008
    %v5010 = vpop.f32.mrf.mxu0
    %5011 = vdwg.mxu0
    %5012 = vmatpush.bf16.msra.mxu0 %v3835
    %5013 = vmatpush.bf16.msra.mxu0 %v3827
    %5014 = vmatpush.bf16.msra.mxu0 %v3819
    %5015 = vmatpush.bf16.msra.mxu0 %v3811
    %5016 = vmatpush.bf16.msra.mxu0 %v3803
    %5017 = vmatpush.bf16.msra.mxu0 %v3795
    %5018 = vmatpush.bf16.msra.mxu0 %v3787
    %5019 = vmatpush.bf16.msra.mxu0 %v3779
    %5020 = vmatmul.bf16.gmra.mxu0 %v1322
    %v5021 = vpop.f32.mrf.mxu0
    %v5022 = vadd.f32 %v5009, %v5021
    %v5023 = vpop.f32.mrf.mxu0
    %5024 = vdwg.mxu0
    %5025 = vmatpush.bf16.msra.mxu0 %v3899
    %5026 = vmatpush.bf16.msra.mxu0 %v3891
    %5027 = vmatpush.bf16.msra.mxu0 %v3883
    %5028 = vmatpush.bf16.msra.mxu0 %v3875
    %5029 = vmatpush.bf16.msra.mxu0 %v3867
    %5030 = vmatpush.bf16.msra.mxu0 %v3859
    %5031 = vmatpush.bf16.msra.mxu0 %v3851
    %5032 = vmatpush.bf16.msra.mxu0 %v3843
    %5033 = vmatmul.bf16.gmra.mxu0 %v1323
    %v5034 = vpop.f32.mrf.mxu0
    %v5035 = vadd.f32 %v5022, %v5034
    %v5036 = vpop.f32.mrf.mxu0
    %5037 = vdwg.mxu0
    %5038 = vmatpush.bf16.msra.mxu0 %v3452
    %5039 = vmatpush.bf16.msra.mxu0 %v3444
    %5040 = vmatpush.bf16.msra.mxu0 %v3436
    %5041 = vmatpush.bf16.msra.mxu0 %v3428
    %5042 = vmatpush.bf16.msra.mxu0 %v3420
    %5043 = vmatpush.bf16.msra.mxu0 %v3412
    %5044 = vmatpush.bf16.msra.mxu0 %v3404
    %5045 = vmatpush.bf16.msra.mxu0 %v3396
    %5046 = vmatmul.bf16.gmra.mxu0 %v1316
    %v5047 = vpop.f32.mrf.mxu0
    %v5048 = vadd.f32 %v1844, %v5047
    %v5049 = vpop.f32.mrf.mxu0
    %5050 = vdwg.mxu0
    %5051 = vmatpush.bf16.msra.mxu0 %v3516
    %5052 = vmatpush.bf16.msra.mxu0 %v3508
    %5053 = vmatpush.bf16.msra.mxu0 %v3500
    %5054 = vmatpush.bf16.msra.mxu0 %v3492
    %5055 = vmatpush.bf16.msra.mxu0 %v3484
    %5056 = vmatpush.bf16.msra.mxu0 %v3476
    %5057 = vmatpush.bf16.msra.mxu0 %v3468
    %5058 = vmatpush.bf16.msra.mxu0 %v3460
    %5059 = vmatmul.bf16.gmra.mxu0 %v1317
    %v5060 = vpop.f32.mrf.mxu0
    %v5061 = vadd.f32 %v5048, %v5060
    %v5062 = vpop.f32.mrf.mxu0
    %5063 = vdwg.mxu0
    %5064 = vmatpush.bf16.msra.mxu0 %v3580
    %5065 = vmatpush.bf16.msra.mxu0 %v3572
    %5066 = vmatpush.bf16.msra.mxu0 %v3564
    %5067 = vmatpush.bf16.msra.mxu0 %v3556
    %5068 = vmatpush.bf16.msra.mxu0 %v3548
    %5069 = vmatpush.bf16.msra.mxu0 %v3540
    %5070 = vmatpush.bf16.msra.mxu0 %v3532
    %5071 = vmatpush.bf16.msra.mxu0 %v3524
    %5072 = vmatmul.bf16.gmra.mxu0 %v1318
    %v5073 = vpop.f32.mrf.mxu0
    %v5074 = vadd.f32 %v5061, %v5073
    %v5075 = vpop.f32.mrf.mxu0
    %5076 = vdwg.mxu0
    %5077 = vmatpush.bf16.msra.mxu0 %v3644
    %5078 = vmatpush.bf16.msra.mxu0 %v3636
    %5079 = vmatpush.bf16.msra.mxu0 %v3628
    %5080 = vmatpush.bf16.msra.mxu0 %v3620
    %5081 = vmatpush.bf16.msra.mxu0 %v3612
    %5082 = vmatpush.bf16.msra.mxu0 %v3604
    %5083 = vmatpush.bf16.msra.mxu0 %v3596
    %5084 = vmatpush.bf16.msra.mxu0 %v3588
    %5085 = vmatmul.bf16.gmra.mxu0 %v1319
    %v5086 = vpop.f32.mrf.mxu0
    %v5087 = vadd.f32 %v5074, %v5086
    %v5088 = vpop.f32.mrf.mxu0
    %5089 = vdwg.mxu0
    %5090 = vmatpush.bf16.msra.mxu0 %v3708
    %5091 = vmatpush.bf16.msra.mxu0 %v3700
    %5092 = vmatpush.bf16.msra.mxu0 %v3692
    %5093 = vmatpush.bf16.msra.mxu0 %v3684
    %5094 = vmatpush.bf16.msra.mxu0 %v3676
    %5095 = vmatpush.bf16.msra.mxu0 %v3668
    %5096 = vmatpush.bf16.msra.mxu0 %v3660
    %5097 = vmatpush.bf16.msra.mxu0 %v3652
    %5098 = vmatmul.bf16.gmra.mxu0 %v1320
    %v5099 = vpop.f32.mrf.mxu0
    %v5100 = vadd.f32 %v5087, %v5099
    %v5101 = vpop.f32.mrf.mxu0
    %5102 = vdwg.mxu0
    %5103 = vmatpush.bf16.msra.mxu0 %v3772
    %5104 = vmatpush.bf16.msra.mxu0 %v3764
    %5105 = vmatpush.bf16.msra.mxu0 %v3756
    %5106 = vmatpush.bf16.msra.mxu0 %v3748
    %5107 = vmatpush.bf16.msra.mxu0 %v3740
    %5108 = vmatpush.bf16.msra.mxu0 %v3732
    %5109 = vmatpush.bf16.msra.mxu0 %v3724
    %5110 = vmatpush.bf16.msra.mxu0 %v3716
    %5111 = vmatmul.bf16.gmra.mxu0 %v1321
    %v5112 = vpop.f32.mrf.mxu0
    %v5113 = vadd.f32 %v5100, %v5112
    %v5114 = vpop.f32.mrf.mxu0
    %5115 = vdwg.mxu0
    %5116 = vmatpush.bf16.msra.mxu0 %v3836
    %5117 = vmatpush.bf16.msra.mxu0 %v3828
    %5118 = vmatpush.bf16.msra.mxu0 %v3820
    %5119 = vmatpush.bf16.msra.mxu0 %v3812
    %5120 = vmatpush.bf16.msra.mxu0 %v3804
    %5121 = vmatpush.bf16.msra.mxu0 %v3796
    %5122 = vmatpush.bf16.msra.mxu0 %v3788
    %5123 = vmatpush.bf16.msra.mxu0 %v3780
    %5124 = vmatmul.bf16.gmra.mxu0 %v1322
    %v5125 = vpop.f32.mrf.mxu0
    %v5126 = vadd.f32 %v5113, %v5125
    %v5127 = vpop.f32.mrf.mxu0
    %5128 = vdwg.mxu0
    %5129 = vmatpush.bf16.msra.mxu0 %v3900
    %5130 = vmatpush.bf16.msra.mxu0 %v3892
    %5131 = vmatpush.bf16.msra.mxu0 %v3884
    %5132 = vmatpush.bf16.msra.mxu0 %v3876
    %5133 = vmatpush.bf16.msra.mxu0 %v3868
    %5134 = vmatpush.bf16.msra.mxu0 %v3860
    %5135 = vmatpush.bf16.msra.mxu0 %v3852
    %5136 = vmatpush.bf16.msra.mxu0 %v3844
    %5137 = vmatmul.bf16.gmra.mxu0 %v1323
    %v5138 = vpop.f32.mrf.mxu0
    %v5139 = vadd.f32 %v5126, %v5138
    %v5140 = vpop.f32.mrf.mxu0
    %5141 = vdwg.mxu0
    %5142 = vmatpush.bf16.msra.mxu0 %v3453
    %5143 = vmatpush.bf16.msra.mxu0 %v3445
    %5144 = vmatpush.bf16.msra.mxu0 %v3437
    %5145 = vmatpush.bf16.msra.mxu0 %v3429
    %5146 = vmatpush.bf16.msra.mxu0 %v3421
    %5147 = vmatpush.bf16.msra.mxu0 %v3413
    %5148 = vmatpush.bf16.msra.mxu0 %v3405
    %5149 = vmatpush.bf16.msra.mxu0 %v3397
    %5150 = vmatmul.bf16.gmra.mxu0 %v1316
    %v5151 = vpop.f32.mrf.mxu0
    %v5152 = vadd.f32 %v1845, %v5151
    %v5153 = vpop.f32.mrf.mxu0
    %5154 = vdwg.mxu0
    %5155 = vmatpush.bf16.msra.mxu0 %v3517
    %5156 = vmatpush.bf16.msra.mxu0 %v3509
    %5157 = vmatpush.bf16.msra.mxu0 %v3501
    %5158 = vmatpush.bf16.msra.mxu0 %v3493
    %5159 = vmatpush.bf16.msra.mxu0 %v3485
    %5160 = vmatpush.bf16.msra.mxu0 %v3477
    %5161 = vmatpush.bf16.msra.mxu0 %v3469
    %5162 = vmatpush.bf16.msra.mxu0 %v3461
    %5163 = vmatmul.bf16.gmra.mxu0 %v1317
    %v5164 = vpop.f32.mrf.mxu0
    %v5165 = vadd.f32 %v5152, %v5164
    %v5166 = vpop.f32.mrf.mxu0
    %5167 = vdwg.mxu0
    %5168 = vmatpush.bf16.msra.mxu0 %v3581
    %5169 = vmatpush.bf16.msra.mxu0 %v3573
    %5170 = vmatpush.bf16.msra.mxu0 %v3565
    %5171 = vmatpush.bf16.msra.mxu0 %v3557
    %5172 = vmatpush.bf16.msra.mxu0 %v3549
    %5173 = vmatpush.bf16.msra.mxu0 %v3541
    %5174 = vmatpush.bf16.msra.mxu0 %v3533
    %5175 = vmatpush.bf16.msra.mxu0 %v3525
    %5176 = vmatmul.bf16.gmra.mxu0 %v1318
    %v5177 = vpop.f32.mrf.mxu0
    %v5178 = vadd.f32 %v5165, %v5177
    %v5179 = vpop.f32.mrf.mxu0
    %5180 = vdwg.mxu0
    %5181 = vmatpush.bf16.msra.mxu0 %v3645
    %5182 = vmatpush.bf16.msra.mxu0 %v3637
    %5183 = vmatpush.bf16.msra.mxu0 %v3629
    %5184 = vmatpush.bf16.msra.mxu0 %v3621
    %5185 = vmatpush.bf16.msra.mxu0 %v3613
    %5186 = vmatpush.bf16.msra.mxu0 %v3605
    %5187 = vmatpush.bf16.msra.mxu0 %v3597
    %5188 = vmatpush.bf16.msra.mxu0 %v3589
    %5189 = vmatmul.bf16.gmra.mxu0 %v1319
    %v5190 = vpop.f32.mrf.mxu0
    %v5191 = vadd.f32 %v5178, %v5190
    %v5192 = vpop.f32.mrf.mxu0
    %5193 = vdwg.mxu0
    %5194 = vmatpush.bf16.msra.mxu0 %v3709
    %5195 = vmatpush.bf16.msra.mxu0 %v3701
    %5196 = vmatpush.bf16.msra.mxu0 %v3693
    %5197 = vmatpush.bf16.msra.mxu0 %v3685
    %5198 = vmatpush.bf16.msra.mxu0 %v3677
    %5199 = vmatpush.bf16.msra.mxu0 %v3669
    %5200 = vmatpush.bf16.msra.mxu0 %v3661
    %5201 = vmatpush.bf16.msra.mxu0 %v3653
    %5202 = vmatmul.bf16.gmra.mxu0 %v1320
    %v5203 = vpop.f32.mrf.mxu0
    %v5204 = vadd.f32 %v5191, %v5203
    %v5205 = vpop.f32.mrf.mxu0
    %5206 = vdwg.mxu0
    %5207 = vmatpush.bf16.msra.mxu0 %v3773
    %5208 = vmatpush.bf16.msra.mxu0 %v3765
    %5209 = vmatpush.bf16.msra.mxu0 %v3757
    %5210 = vmatpush.bf16.msra.mxu0 %v3749
    %5211 = vmatpush.bf16.msra.mxu0 %v3741
    %5212 = vmatpush.bf16.msra.mxu0 %v3733
    %5213 = vmatpush.bf16.msra.mxu0 %v3725
    %5214 = vmatpush.bf16.msra.mxu0 %v3717
    %5215 = vmatmul.bf16.gmra.mxu0 %v1321
    %v5216 = vpop.f32.mrf.mxu0
    %v5217 = vadd.f32 %v5204, %v5216
    %v5218 = vpop.f32.mrf.mxu0
    %5219 = vdwg.mxu0
    %5220 = vmatpush.bf16.msra.mxu0 %v3837
    %5221 = vmatpush.bf16.msra.mxu0 %v3829
    %5222 = vmatpush.bf16.msra.mxu0 %v3821
    %5223 = vmatpush.bf16.msra.mxu0 %v3813
    %5224 = vmatpush.bf16.msra.mxu0 %v3805
    %5225 = vmatpush.bf16.msra.mxu0 %v3797
    %5226 = vmatpush.bf16.msra.mxu0 %v3789
    %5227 = vmatpush.bf16.msra.mxu0 %v3781
    %5228 = vmatmul.bf16.gmra.mxu0 %v1322
    %v5229 = vpop.f32.mrf.mxu0
    %v5230 = vadd.f32 %v5217, %v5229
    %v5231 = vpop.f32.mrf.mxu0
    %5232 = vdwg.mxu0
    %5233 = vmatpush.bf16.msra.mxu0 %v3901
    %5234 = vmatpush.bf16.msra.mxu0 %v3893
    %5235 = vmatpush.bf16.msra.mxu0 %v3885
    %5236 = vmatpush.bf16.msra.mxu0 %v3877
    %5237 = vmatpush.bf16.msra.mxu0 %v3869
    %5238 = vmatpush.bf16.msra.mxu0 %v3861
    %5239 = vmatpush.bf16.msra.mxu0 %v3853
    %5240 = vmatpush.bf16.msra.mxu0 %v3845
    %5241 = vmatmul.bf16.gmra.mxu0 %v1323
    %v5242 = vpop.f32.mrf.mxu0
    %v5243 = vadd.f32 %v5230, %v5242
    %v5244 = vpop.f32.mrf.mxu0
    %5245 = vdwg.mxu0
    %v5246 = vmax.f32 %v4515, 0.0
    %v5247 = vmax.f32 %v4619, 0.0
    %v5248 = vmax.f32 %v4723, 0.0
    %v5249 = vmax.f32 %v4827, 0.0
    %v5250 = vmax.f32 %v4931, 0.0
    %v5251 = vmax.f32 %v5035, 0.0
    %v5252 = vmax.f32 %v5139, 0.0
    %v5253 = vmax.f32 %v5243, 0.0
    %v5254 = vpack.c.bf16 %v5246, %v5246
    %v5255 = vpack.c.bf16 %v5247, %v5247
    %v5256 = vpack.c.bf16 %v5248, %v5248
    %v5257 = vpack.c.bf16 %v5249, %v5249
    %v5258 = vpack.c.bf16 %v5250, %v5250
    %v5259 = vpack.c.bf16 %v5251, %v5251
    %v5260 = vpack.c.bf16 %v5252, %v5252
    %v5261 = vpack.c.bf16 %v5253, %v5253
    %v5262 = vld [vmem:[#allocation13] sm:$0xf]
    %v5263 = vld [vmem:[#allocation13 + $0x4] sm:$0xf]
    %v5264 = vld [vmem:[#allocation13 + $0x8] sm:$0xf]
    %v5265 = vld [vmem:[#allocation13 + $0xc] sm:$0xf]
    %v5266 = vld [vmem:[#allocation13 + $0x10] sm:$0xf]
    %v5267 = vld [vmem:[#allocation13 + $0x14] sm:$0xf]
    %v5268 = vld [vmem:[#allocation13 + $0x18] sm:$0xf]
    %v5269 = vld [vmem:[#allocation13 + $0x1c] sm:$0xf]
    %v5270 = vld [vmem:[#allocation13 + $0x20] sm:$0xf]
    %v5271 = vld [vmem:[#allocation13 + $0x24] sm:$0xf]
    %v5272 = vld [vmem:[#allocation13 + $0x28] sm:$0xf]
    %v5273 = vld [vmem:[#allocation13 + $0x2c] sm:$0xf]
    %v5274 = vld [vmem:[#allocation13 + $0x30] sm:$0xf]
    %v5275 = vld [vmem:[#allocation13 + $0x34] sm:$0xf]
    %v5276 = vld [vmem:[#allocation13 + $0x38] sm:$0xf]
    %v5277 = vld [vmem:[#allocation13 + $0x3c] sm:$0xf]
    %v5278 = vld [vmem:[#allocation13 + $0x40] sm:$0xf]
    %v5279 = vld [vmem:[#allocation13 + $0x44] sm:$0xf]
    %v5280 = vld [vmem:[#allocation13 + $0x48] sm:$0xf]
    %v5281 = vld [vmem:[#allocation13 + $0x4c] sm:$0xf]
    %v5282 = vld [vmem:[#allocation13 + $0x50] sm:$0xf]
    %v5283 = vld [vmem:[#allocation13 + $0x54] sm:$0xf]
    %v5284 = vld [vmem:[#allocation13 + $0x58] sm:$0xf]
    %v5285 = vld [vmem:[#allocation13 + $0x5c] sm:$0xf]
    %v5286 = vld [vmem:[#allocation13 + $0x60] sm:$0xf]
    %v5287 = vld [vmem:[#allocation13 + $0x64] sm:$0xf]
    %v5288 = vld [vmem:[#allocation13 + $0x68] sm:$0xf]
    %v5289 = vld [vmem:[#allocation13 + $0x6c] sm:$0xf]
    %v5290 = vld [vmem:[#allocation13 + $0x70] sm:$0xf]
    %v5291 = vld [vmem:[#allocation13 + $0x74] sm:$0xf]
    %v5292 = vld [vmem:[#allocation13 + $0x78] sm:$0xf]
    %v5293 = vld [vmem:[#allocation13 + $0x7c] sm:$0xf]
    %v5294 = vld [vmem:[#allocation13 + $0x80] sm:$0xf]
    %v5295 = vld [vmem:[#allocation13 + $0x84] sm:$0xf]
    %v5296 = vld [vmem:[#allocation13 + $0x88] sm:$0xf]
    %v5297 = vld [vmem:[#allocation13 + $0x8c] sm:$0xf]
    %v5298 = vld [vmem:[#allocation13 + $0x90] sm:$0xf]
    %v5299 = vld [vmem:[#allocation13 + $0x94] sm:$0xf]
    %v5300 = vld [vmem:[#allocation13 + $0x98] sm:$0xf]
    %v5301 = vld [vmem:[#allocation13 + $0x9c] sm:$0xf]
    %v5302 = vld [vmem:[#allocation13 + $0xa0] sm:$0xf]
    %v5303 = vld [vmem:[#allocation13 + $0xa4] sm:$0xf]
    %v5304 = vld [vmem:[#allocation13 + $0xa8] sm:$0xf]
    %v5305 = vld [vmem:[#allocation13 + $0xac] sm:$0xf]
    %v5306 = vld [vmem:[#allocation13 + $0xb0] sm:$0xf]
    %v5307 = vld [vmem:[#allocation13 + $0xb4] sm:$0xf]
    %v5308 = vld [vmem:[#allocation13 + $0xb8] sm:$0xf]
    %v5309 = vld [vmem:[#allocation13 + $0xbc] sm:$0xf]
    %v5310 = vld [vmem:[#allocation13 + $0xc0] sm:$0xf]
    %v5311 = vld [vmem:[#allocation13 + $0xc4] sm:$0xf]
    %v5312 = vld [vmem:[#allocation13 + $0xc8] sm:$0xf]
    %v5313 = vld [vmem:[#allocation13 + $0xcc] sm:$0xf]
    %v5314 = vld [vmem:[#allocation13 + $0xd0] sm:$0xf]
    %v5315 = vld [vmem:[#allocation13 + $0xd4] sm:$0xf]
    %v5316 = vld [vmem:[#allocation13 + $0xd8] sm:$0xf]
    %v5317 = vld [vmem:[#allocation13 + $0xdc] sm:$0xf]
    %v5318 = vld [vmem:[#allocation13 + $0xe0] sm:$0xf]
    %v5319 = vld [vmem:[#allocation13 + $0xe4] sm:$0xf]
    %v5320 = vld [vmem:[#allocation13 + $0xe8] sm:$0xf]
    %v5321 = vld [vmem:[#allocation13 + $0xec] sm:$0xf]
    %v5322 = vld [vmem:[#allocation13 + $0xf0] sm:$0xf]
    %v5323 = vld [vmem:[#allocation13 + $0xf4] sm:$0xf]
    %v5324 = vld [vmem:[#allocation13 + $0xf8] sm:$0xf]
    %v5325 = vld [vmem:[#allocation13 + $0xfc] sm:$0xf]
    %v5326 = vld [vmem:[#allocation13 + $0x100] sm:$0xf]
    %v5327 = vld [vmem:[#allocation13 + $0x104] sm:$0xf]
    %v5328 = vld [vmem:[#allocation13 + $0x108] sm:$0xf]
    %v5329 = vld [vmem:[#allocation13 + $0x10c] sm:$0xf]
    %v5330 = vld [vmem:[#allocation13 + $0x110] sm:$0xf]
    %v5331 = vld [vmem:[#allocation13 + $0x114] sm:$0xf]
    %v5332 = vld [vmem:[#allocation13 + $0x118] sm:$0xf]
    %v5333 = vld [vmem:[#allocation13 + $0x11c] sm:$0xf]
    %v5334 = vld [vmem:[#allocation13 + $0x120] sm:$0xf]
    %v5335 = vld [vmem:[#allocation13 + $0x124] sm:$0xf]
    %v5336 = vld [vmem:[#allocation13 + $0x128] sm:$0xf]
    %v5337 = vld [vmem:[#allocation13 + $0x12c] sm:$0xf]
    %v5338 = vld [vmem:[#allocation13 + $0x130] sm:$0xf]
    %v5339 = vld [vmem:[#allocation13 + $0x134] sm:$0xf]
    %v5340 = vld [vmem:[#allocation13 + $0x138] sm:$0xf]
    %v5341 = vld [vmem:[#allocation13 + $0x13c] sm:$0xf]
    %v5342 = vld [vmem:[#allocation13 + $0x140] sm:$0xf]
    %v5343 = vld [vmem:[#allocation13 + $0x144] sm:$0xf]
    %v5344 = vld [vmem:[#allocation13 + $0x148] sm:$0xf]
    %v5345 = vld [vmem:[#allocation13 + $0x14c] sm:$0xf]
    %v5346 = vld [vmem:[#allocation13 + $0x150] sm:$0xf]
    %v5347 = vld [vmem:[#allocation13 + $0x154] sm:$0xf]
    %v5348 = vld [vmem:[#allocation13 + $0x158] sm:$0xf]
    %v5349 = vld [vmem:[#allocation13 + $0x15c] sm:$0xf]
    %v5350 = vld [vmem:[#allocation13 + $0x160] sm:$0xf]
    %v5351 = vld [vmem:[#allocation13 + $0x164] sm:$0xf]
    %v5352 = vld [vmem:[#allocation13 + $0x168] sm:$0xf]
    %v5353 = vld [vmem:[#allocation13 + $0x16c] sm:$0xf]
    %v5354 = vld [vmem:[#allocation13 + $0x170] sm:$0xf]
    %v5355 = vld [vmem:[#allocation13 + $0x174] sm:$0xf]
    %v5356 = vld [vmem:[#allocation13 + $0x178] sm:$0xf]
    %v5357 = vld [vmem:[#allocation13 + $0x17c] sm:$0xf]
    %v5358 = vld [vmem:[#allocation13 + $0x180] sm:$0xf]
    %v5359 = vld [vmem:[#allocation13 + $0x184] sm:$0xf]
    %v5360 = vld [vmem:[#allocation13 + $0x188] sm:$0xf]
    %v5361 = vld [vmem:[#allocation13 + $0x18c] sm:$0xf]
    %v5362 = vld [vmem:[#allocation13 + $0x190] sm:$0xf]
    %v5363 = vld [vmem:[#allocation13 + $0x194] sm:$0xf]
    %v5364 = vld [vmem:[#allocation13 + $0x198] sm:$0xf]
    %v5365 = vld [vmem:[#allocation13 + $0x19c] sm:$0xf]
    %v5366 = vld [vmem:[#allocation13 + $0x1a0] sm:$0xf]
    %v5367 = vld [vmem:[#allocation13 + $0x1a4] sm:$0xf]
    %v5368 = vld [vmem:[#allocation13 + $0x1a8] sm:$0xf]
    %v5369 = vld [vmem:[#allocation13 + $0x1ac] sm:$0xf]
    %v5370 = vld [vmem:[#allocation13 + $0x1b0] sm:$0xf]
    %v5371 = vld [vmem:[#allocation13 + $0x1b4] sm:$0xf]
    %v5372 = vld [vmem:[#allocation13 + $0x1b8] sm:$0xf]
    %v5373 = vld [vmem:[#allocation13 + $0x1bc] sm:$0xf]
    %v5374 = vld [vmem:[#allocation13 + $0x1c0] sm:$0xf]
    %v5375 = vld [vmem:[#allocation13 + $0x1c4] sm:$0xf]
    %v5376 = vld [vmem:[#allocation13 + $0x1c8] sm:$0xf]
    %v5377 = vld [vmem:[#allocation13 + $0x1cc] sm:$0xf]
    %v5378 = vld [vmem:[#allocation13 + $0x1d0] sm:$0xf]
    %v5379 = vld [vmem:[#allocation13 + $0x1d4] sm:$0xf]
    %v5380 = vld [vmem:[#allocation13 + $0x1d8] sm:$0xf]
    %v5381 = vld [vmem:[#allocation13 + $0x1dc] sm:$0xf]
    %v5382 = vld [vmem:[#allocation13 + $0x1e0] sm:$0xf]
    %v5383 = vld [vmem:[#allocation13 + $0x1e4] sm:$0xf]
    %v5384 = vld [vmem:[#allocation13 + $0x1e8] sm:$0xf]
    %v5385 = vld [vmem:[#allocation13 + $0x1ec] sm:$0xf]
    %v5386 = vld [vmem:[#allocation13 + $0x1f0] sm:$0xf]
    %v5387 = vld [vmem:[#allocation13 + $0x1f4] sm:$0xf]
    %v5388 = vld [vmem:[#allocation13 + $0x1f8] sm:$0xf]
    %v5389 = vld [vmem:[#allocation13 + $0x1fc] sm:$0xf]
    %v5390 = vld [vmem:[#allocation14] sm:$0x1]
    %v5392 = vperm.slane %v5390, 0
    %v5522 = vunpack.c.l.b16 %v5262
    %v5523 = vunpack.c.l.b16 %v5263
    %v5524 = vunpack.c.l.b16 %v5264
    %v5525 = vunpack.c.l.b16 %v5265
    %v5526 = vunpack.c.l.b16 %v5266
    %v5527 = vunpack.c.l.b16 %v5267
    %v5528 = vunpack.c.l.b16 %v5268
    %v5529 = vunpack.c.l.b16 %v5269
    %v5530 = vunpack.c.l.b16 %v5270
    %v5531 = vunpack.c.l.b16 %v5271
    %v5532 = vunpack.c.l.b16 %v5272
    %v5533 = vunpack.c.l.b16 %v5273
    %v5534 = vunpack.c.l.b16 %v5274
    %v5535 = vunpack.c.l.b16 %v5275
    %v5536 = vunpack.c.l.b16 %v5276
    %v5537 = vunpack.c.l.b16 %v5277
    %v5538 = vunpack.c.l.b16 %v5278
    %v5539 = vunpack.c.l.b16 %v5279
    %v5540 = vunpack.c.l.b16 %v5280
    %v5541 = vunpack.c.l.b16 %v5281
    %v5542 = vunpack.c.l.b16 %v5282
    %v5543 = vunpack.c.l.b16 %v5283
    %v5544 = vunpack.c.l.b16 %v5284
    %v5545 = vunpack.c.l.b16 %v5285
    %v5546 = vunpack.c.l.b16 %v5286
    %v5547 = vunpack.c.l.b16 %v5287
    %v5548 = vunpack.c.l.b16 %v5288
    %v5549 = vunpack.c.l.b16 %v5289
    %v5550 = vunpack.c.l.b16 %v5290
    %v5551 = vunpack.c.l.b16 %v5291
    %v5552 = vunpack.c.l.b16 %v5292
    %v5553 = vunpack.c.l.b16 %v5293
    %v5554 = vunpack.c.l.b16 %v5294
    %v5555 = vunpack.c.l.b16 %v5295
    %v5556 = vunpack.c.l.b16 %v5296
    %v5557 = vunpack.c.l.b16 %v5297
    %v5558 = vunpack.c.l.b16 %v5298
    %v5559 = vunpack.c.l.b16 %v5299
    %v5560 = vunpack.c.l.b16 %v5300
    %v5561 = vunpack.c.l.b16 %v5301
    %v5562 = vunpack.c.l.b16 %v5302
    %v5563 = vunpack.c.l.b16 %v5303
    %v5564 = vunpack.c.l.b16 %v5304
    %v5565 = vunpack.c.l.b16 %v5305
    %v5566 = vunpack.c.l.b16 %v5306
    %v5567 = vunpack.c.l.b16 %v5307
    %v5568 = vunpack.c.l.b16 %v5308
    %v5569 = vunpack.c.l.b16 %v5309
    %v5570 = vunpack.c.l.b16 %v5310
    %v5571 = vunpack.c.l.b16 %v5311
    %v5572 = vunpack.c.l.b16 %v5312
    %v5573 = vunpack.c.l.b16 %v5313
    %v5574 = vunpack.c.l.b16 %v5314
    %v5575 = vunpack.c.l.b16 %v5315
    %v5576 = vunpack.c.l.b16 %v5316
    %v5577 = vunpack.c.l.b16 %v5317
    %v5578 = vunpack.c.l.b16 %v5318
    %v5579 = vunpack.c.l.b16 %v5319
    %v5580 = vunpack.c.l.b16 %v5320
    %v5581 = vunpack.c.l.b16 %v5321
    %v5582 = vunpack.c.l.b16 %v5322
    %v5583 = vunpack.c.l.b16 %v5323
    %v5584 = vunpack.c.l.b16 %v5324
    %v5585 = vunpack.c.l.b16 %v5325
    %v5586 = vunpack.c.l.b16 %v5326
    %v5587 = vunpack.c.l.b16 %v5327
    %v5588 = vunpack.c.l.b16 %v5328
    %v5589 = vunpack.c.l.b16 %v5329
    %v5590 = vunpack.c.l.b16 %v5330
    %v5591 = vunpack.c.l.b16 %v5331
    %v5592 = vunpack.c.l.b16 %v5332
    %v5593 = vunpack.c.l.b16 %v5333
    %v5594 = vunpack.c.l.b16 %v5334
    %v5595 = vunpack.c.l.b16 %v5335
    %v5596 = vunpack.c.l.b16 %v5336
    %v5597 = vunpack.c.l.b16 %v5337
    %v5598 = vunpack.c.l.b16 %v5338
    %v5599 = vunpack.c.l.b16 %v5339
    %v5600 = vunpack.c.l.b16 %v5340
    %v5601 = vunpack.c.l.b16 %v5341
    %v5602 = vunpack.c.l.b16 %v5342
    %v5603 = vunpack.c.l.b16 %v5343
    %v5604 = vunpack.c.l.b16 %v5344
    %v5605 = vunpack.c.l.b16 %v5345
    %v5606 = vunpack.c.l.b16 %v5346
    %v5607 = vunpack.c.l.b16 %v5347
    %v5608 = vunpack.c.l.b16 %v5348
    %v5609 = vunpack.c.l.b16 %v5349
    %v5610 = vunpack.c.l.b16 %v5350
    %v5611 = vunpack.c.l.b16 %v5351
    %v5612 = vunpack.c.l.b16 %v5352
    %v5613 = vunpack.c.l.b16 %v5353
    %v5614 = vunpack.c.l.b16 %v5354
    %v5615 = vunpack.c.l.b16 %v5355
    %v5616 = vunpack.c.l.b16 %v5356
    %v5617 = vunpack.c.l.b16 %v5357
    %v5618 = vunpack.c.l.b16 %v5358
    %v5619 = vunpack.c.l.b16 %v5359
    %v5620 = vunpack.c.l.b16 %v5360
    %v5621 = vunpack.c.l.b16 %v5361
    %v5622 = vunpack.c.l.b16 %v5362
    %v5623 = vunpack.c.l.b16 %v5363
    %v5624 = vunpack.c.l.b16 %v5364
    %v5625 = vunpack.c.l.b16 %v5365
    %v5626 = vunpack.c.l.b16 %v5366
    %v5627 = vunpack.c.l.b16 %v5367
    %v5628 = vunpack.c.l.b16 %v5368
    %v5629 = vunpack.c.l.b16 %v5369
    %v5630 = vunpack.c.l.b16 %v5370
    %v5631 = vunpack.c.l.b16 %v5371
    %v5632 = vunpack.c.l.b16 %v5372
    %v5633 = vunpack.c.l.b16 %v5373
    %v5634 = vunpack.c.l.b16 %v5374
    %v5635 = vunpack.c.l.b16 %v5375
    %v5636 = vunpack.c.l.b16 %v5376
    %v5637 = vunpack.c.l.b16 %v5377
    %v5638 = vunpack.c.l.b16 %v5378
    %v5639 = vunpack.c.l.b16 %v5379
    %v5640 = vunpack.c.l.b16 %v5380
    %v5641 = vunpack.c.l.b16 %v5381
    %v5642 = vunpack.c.l.b16 %v5382
    %v5643 = vunpack.c.l.b16 %v5383
    %v5644 = vunpack.c.l.b16 %v5384
    %v5645 = vunpack.c.l.b16 %v5385
    %v5646 = vunpack.c.l.b16 %v5386
    %v5647 = vunpack.c.l.b16 %v5387
    %v5648 = vunpack.c.l.b16 %v5388
    %v5649 = vunpack.c.l.b16 %v5389
    %v5650 = vpack.c.b16 %v5523, %v5522
    %v5651 = vpack.c.b16 %v5525, %v5524
    %v5652 = vpack.c.b16 %v5527, %v5526
    %v5653 = vpack.c.b16 %v5529, %v5528
    %v5654 = vpack.c.b16 %v5531, %v5530
    %v5655 = vpack.c.b16 %v5533, %v5532
    %v5656 = vpack.c.b16 %v5535, %v5534
    %v5657 = vpack.c.b16 %v5537, %v5536
    %v5658 = vpack.c.b16 %v5539, %v5538
    %v5659 = vpack.c.b16 %v5541, %v5540
    %v5660 = vpack.c.b16 %v5543, %v5542
    %v5661 = vpack.c.b16 %v5545, %v5544
    %v5662 = vpack.c.b16 %v5547, %v5546
    %v5663 = vpack.c.b16 %v5549, %v5548
    %v5664 = vpack.c.b16 %v5551, %v5550
    %v5665 = vpack.c.b16 %v5553, %v5552
    %v5666 = vpack.c.b16 %v5555, %v5554
    %v5667 = vpack.c.b16 %v5557, %v5556
    %v5668 = vpack.c.b16 %v5559, %v5558
    %v5669 = vpack.c.b16 %v5561, %v5560
    %v5670 = vpack.c.b16 %v5563, %v5562
    %v5671 = vpack.c.b16 %v5565, %v5564
    %v5672 = vpack.c.b16 %v5567, %v5566
    %v5673 = vpack.c.b16 %v5569, %v5568
    %v5674 = vpack.c.b16 %v5571, %v5570
    %v5675 = vpack.c.b16 %v5573, %v5572
    %v5676 = vpack.c.b16 %v5575, %v5574
    %v5677 = vpack.c.b16 %v5577, %v5576
    %v5678 = vpack.c.b16 %v5579, %v5578
    %v5679 = vpack.c.b16 %v5581, %v5580
    %v5680 = vpack.c.b16 %v5583, %v5582
    %v5681 = vpack.c.b16 %v5585, %v5584
    %v5682 = vpack.c.b16 %v5587, %v5586
    %v5683 = vpack.c.b16 %v5589, %v5588
    %v5684 = vpack.c.b16 %v5591, %v5590
    %v5685 = vpack.c.b16 %v5593, %v5592
    %v5686 = vpack.c.b16 %v5595, %v5594
    %v5687 = vpack.c.b16 %v5597, %v5596
    %v5688 = vpack.c.b16 %v5599, %v5598
    %v5689 = vpack.c.b16 %v5601, %v5600
    %v5690 = vpack.c.b16 %v5603, %v5602
    %v5691 = vpack.c.b16 %v5605, %v5604
    %v5692 = vpack.c.b16 %v5607, %v5606
    %v5693 = vpack.c.b16 %v5609, %v5608
    %v5694 = vpack.c.b16 %v5611, %v5610
    %v5695 = vpack.c.b16 %v5613, %v5612
    %v5696 = vpack.c.b16 %v5615, %v5614
    %v5697 = vpack.c.b16 %v5617, %v5616
    %v5698 = vpack.c.b16 %v5619, %v5618
    %v5699 = vpack.c.b16 %v5621, %v5620
    %v5700 = vpack.c.b16 %v5623, %v5622
    %v5701 = vpack.c.b16 %v5625, %v5624
    %v5702 = vpack.c.b16 %v5627, %v5626
    %v5703 = vpack.c.b16 %v5629, %v5628
    %v5704 = vpack.c.b16 %v5631, %v5630
    %v5705 = vpack.c.b16 %v5633, %v5632
    %v5706 = vpack.c.b16 %v5635, %v5634
    %v5707 = vpack.c.b16 %v5637, %v5636
    %v5708 = vpack.c.b16 %v5639, %v5638
    %v5709 = vpack.c.b16 %v5641, %v5640
    %v5710 = vpack.c.b16 %v5643, %v5642
    %v5711 = vpack.c.b16 %v5645, %v5644
    %v5712 = vpack.c.b16 %v5647, %v5646
    %v5713 = vpack.c.b16 %v5649, %v5648
    %5778 = vmatpush.bf16.msra.mxu0 %v5657
    %5779 = vmatpush.bf16.msra.mxu0 %v5656
    %5780 = vmatpush.bf16.msra.mxu0 %v5655
    %5781 = vmatpush.bf16.msra.mxu0 %v5654
    %5782 = vmatpush.bf16.msra.mxu0 %v5653
    %5783 = vmatpush.bf16.msra.mxu0 %v5652
    %5784 = vmatpush.bf16.msra.mxu0 %v5651
    %5785 = vmatpush.bf16.msra.mxu0 %v5650
    %5786 = vmatmul.bf16.gmra.mxu0 %v5254
    %v5787 = vpop.f32.mrf.mxu0
    %v5788 = vadd.f32 %v5392, %v5787
    %v5789 = vpop.f32.mrf.mxu0
    %5790 = vdwg.mxu0
    %5791 = vmatpush.bf16.msra.mxu0 %v5665
    %5792 = vmatpush.bf16.msra.mxu0 %v5664
    %5793 = vmatpush.bf16.msra.mxu0 %v5663
    %5794 = vmatpush.bf16.msra.mxu0 %v5662
    %5795 = vmatpush.bf16.msra.mxu0 %v5661
    %5796 = vmatpush.bf16.msra.mxu0 %v5660
    %5797 = vmatpush.bf16.msra.mxu0 %v5659
    %5798 = vmatpush.bf16.msra.mxu0 %v5658
    %5799 = vmatmul.bf16.gmra.mxu0 %v5255
    %v5800 = vpop.f32.mrf.mxu0
    %v5801 = vadd.f32 %v5788, %v5800
    %v5802 = vpop.f32.mrf.mxu0
    %5803 = vdwg.mxu0
    %5804 = vmatpush.bf16.msra.mxu0 %v5673
    %5805 = vmatpush.bf16.msra.mxu0 %v5672
    %5806 = vmatpush.bf16.msra.mxu0 %v5671
    %5807 = vmatpush.bf16.msra.mxu0 %v5670
    %5808 = vmatpush.bf16.msra.mxu0 %v5669
    %5809 = vmatpush.bf16.msra.mxu0 %v5668
    %5810 = vmatpush.bf16.msra.mxu0 %v5667
    %5811 = vmatpush.bf16.msra.mxu0 %v5666
    %5812 = vmatmul.bf16.gmra.mxu0 %v5256
    %v5813 = vpop.f32.mrf.mxu0
    %v5814 = vadd.f32 %v5801, %v5813
    %v5815 = vpop.f32.mrf.mxu0
    %5816 = vdwg.mxu0
    %5817 = vmatpush.bf16.msra.mxu0 %v5681
    %5818 = vmatpush.bf16.msra.mxu0 %v5680
    %5819 = vmatpush.bf16.msra.mxu0 %v5679
    %5820 = vmatpush.bf16.msra.mxu0 %v5678
    %5821 = vmatpush.bf16.msra.mxu0 %v5677
    %5822 = vmatpush.bf16.msra.mxu0 %v5676
    %5823 = vmatpush.bf16.msra.mxu0 %v5675
    %5824 = vmatpush.bf16.msra.mxu0 %v5674
    %5825 = vmatmul.bf16.gmra.mxu0 %v5257
    %v5826 = vpop.f32.mrf.mxu0
    %v5827 = vadd.f32 %v5814, %v5826
    %v5828 = vpop.f32.mrf.mxu0
    %5829 = vdwg.mxu0
    %5830 = vmatpush.bf16.msra.mxu0 %v5689
    %5831 = vmatpush.bf16.msra.mxu0 %v5688
    %5832 = vmatpush.bf16.msra.mxu0 %v5687
    %5833 = vmatpush.bf16.msra.mxu0 %v5686
    %5834 = vmatpush.bf16.msra.mxu0 %v5685
    %5835 = vmatpush.bf16.msra.mxu0 %v5684
    %5836 = vmatpush.bf16.msra.mxu0 %v5683
    %5837 = vmatpush.bf16.msra.mxu0 %v5682
    %5838 = vmatmul.bf16.gmra.mxu0 %v5258
    %v5839 = vpop.f32.mrf.mxu0
    %v5840 = vadd.f32 %v5827, %v5839
    %v5841 = vpop.f32.mrf.mxu0
    %5842 = vdwg.mxu0
    %5843 = vmatpush.bf16.msra.mxu0 %v5697
    %5844 = vmatpush.bf16.msra.mxu0 %v5696
    %5845 = vmatpush.bf16.msra.mxu0 %v5695
    %5846 = vmatpush.bf16.msra.mxu0 %v5694
    %5847 = vmatpush.bf16.msra.mxu0 %v5693
    %5848 = vmatpush.bf16.msra.mxu0 %v5692
    %5849 = vmatpush.bf16.msra.mxu0 %v5691
    %5850 = vmatpush.bf16.msra.mxu0 %v5690
    %5851 = vmatmul.bf16.gmra.mxu0 %v5259
    %v5852 = vpop.f32.mrf.mxu0
    %v5853 = vadd.f32 %v5840, %v5852
    %v5854 = vpop.f32.mrf.mxu0
    %5855 = vdwg.mxu0
    %5856 = vmatpush.bf16.msra.mxu0 %v5705
    %5857 = vmatpush.bf16.msra.mxu0 %v5704
    %5858 = vmatpush.bf16.msra.mxu0 %v5703
    %5859 = vmatpush.bf16.msra.mxu0 %v5702
    %5860 = vmatpush.bf16.msra.mxu0 %v5701
    %5861 = vmatpush.bf16.msra.mxu0 %v5700
    %5862 = vmatpush.bf16.msra.mxu0 %v5699
    %5863 = vmatpush.bf16.msra.mxu0 %v5698
    %5864 = vmatmul.bf16.gmra.mxu0 %v5260
    %v5865 = vpop.f32.mrf.mxu0
    %v5866 = vadd.f32 %v5853, %v5865
    %v5867 = vpop.f32.mrf.mxu0
    %5868 = vdwg.mxu0
    %5869 = vmatpush.bf16.msra.mxu0 %v5713
    %5870 = vmatpush.bf16.msra.mxu0 %v5712
    %5871 = vmatpush.bf16.msra.mxu0 %v5711
    %5872 = vmatpush.bf16.msra.mxu0 %v5710
    %5873 = vmatpush.bf16.msra.mxu0 %v5709
    %5874 = vmatpush.bf16.msra.mxu0 %v5708
    %5875 = vmatpush.bf16.msra.mxu0 %v5707
    %5876 = vmatpush.bf16.msra.mxu0 %v5706
    %5877 = vmatmul.bf16.gmra.mxu0 %v5261
    %v5878 = vpop.f32.mrf.mxu0
    %v5879 = vadd.f32 %v5866, %v5878
    %v5880 = vpop.f32.mrf.mxu0
    %5881 = vdwg.mxu0
    %v5882 = vtanh.pop %v5879
    %5883 = vst [vmem:[#allocation16] sm:$0x3] %v5882
    // Predicated region
    $region70: #{actor_forward.1} parent=1 // pred_check
      _
    $region71: #{actor_forward.1} parent=1 // pred_check_branch
      %5885 = sbr.rel (0) target = $region73
    $region72: #{actor_forward.1} parent=1 // pred_region
      %5887 = vsyncadd [#allocation4], 0
      %s5889 = sshll.u32 [#allocation16], 4
      %s5890 = int_to_ptr.vmem [resolvable:$true] %s5889
      %s5891 = sshll.u32 %s9, 4
      %s5892 = int_to_ptr.hbm [resolvable:$true] %s5891
      %5894 = dma.vmem_to_hbm [thread:$0]  %s5890, 32, %s5892, [#allocation4]
    $region73: #{actor_forward.1} parent=1 // pred_fallthru
      _
    // Predicated region
    $region74: #{actor_forward.1} parent=1 // pred_check
      _
    $region75: #{actor_forward.1} parent=1 // pred_check_branch
      %5896 = sbr.rel (0) target = $region77
    $region76: #{actor_forward.1} parent=1 // pred_region
      %5898 = dma.done [#allocation4], 32
    $region77: #{actor_forward.1} parent=1 // pred_fallthru
      _
    %5899 = vsyncpa [#allocation3], 1
    %5900 = vsyncpa [#allocation6], 1
    %5901 = vsyncpa [#allocation9], 1
    %5902 = vsyncpa [#allocation12], 1
    %5903 = vsyncpa [#allocation15], 1
    %5904 = vsyncpa [#allocation4], 1

</llo_original>
